<compile_context>
chip_gen: v7x
topology: tpu7x:2x2x1
jax: 0.10.0
libtpu: 0.0.40
codegen_flags: <defaults>
</compile_context>

<pallas_src>
import functools
import math

import jax
import jax.numpy as jnp
from jax.experimental import pallas as pl
from jax.experimental.pallas import tpu as pltpu


_VMEM_LIMIT = 48 * 1024 * 1024  # > default scoped (16/32 MiB), headroom on v7x.


# ---------------------------------------------------------------------------
# Kernel 1: M-tiled linear (bf16 matmul, fp32 accumulate, + bias)
# ---------------------------------------------------------------------------
def _linear_kernel(x_ref, w_ref, b_ref, o_ref):
    y = jnp.dot(x_ref[...], w_ref[...], preferred_element_type=jnp.float32)
    o_ref[...] = (y + b_ref[...]).astype(o_ref.dtype)


def pallas_linear(x, w, b, *, out_dtype=jnp.float32, tile_m=512):
    """x: (M, K) @ w: (K, N) + b: (1, N) -> (M, N), tiled over M."""
    M, K = x.shape
    N = w.shape[1]
    tm = min(tile_m, M)
    return pl.pallas_call(
        _linear_kernel,
        out_shape=jax.ShapeDtypeStruct((M, N), out_dtype),
        grid_spec=pltpu.PrefetchScalarGridSpec(
            num_scalar_prefetch=0,
            grid=(pl.cdiv(M, tm),),
            in_specs=[
                pl.BlockSpec((tm, K), lambda i: (i, 0)),
                pl.BlockSpec((K, N), lambda i: (0, 0)),
                pl.BlockSpec((1, N), lambda i: (0, 0)),
            ],
            out_specs=pl.BlockSpec((tm, N), lambda i: (i, 0)),
        ),
        compiler_params=pltpu.CompilerParams(
            dimension_semantics=("parallel",),
            vmem_limit_bytes=_VMEM_LIMIT),
    )(x, w, b)


# ---------------------------------------------------------------------------
# Kernel 2: fused IPA attention core, flash-style j-tiling, all heads per step
# ---------------------------------------------------------------------------
def _ipa_attn_kernel(q_ref, k_ref, v_ref, bias_ref, pw_ref,
                     osv_ref, opair_ref,
                     m_scr, l_scr, acc_sv, acc_pair, attn_scr):
    jt = pl.program_id(1)
    heads = q_ref.shape[1]

    @pl.when(jt == 0)
    def _():
        m_scr[...] = jnp.full_like(m_scr, -jnp.inf)
        l_scr[...] = jnp.zeros_like(l_scr)
        acc_sv[...] = jnp.zeros_like(acc_sv)
        acc_pair[...] = jnp.zeros_like(acc_pair)

    q = q_ref[0]                       # (H, n,  dq)   bf16  (resident across j)
    k = k_ref[0]                       # (H, tj, dq)   bf16
    v = v_ref[0]                       # (H, tj, dvp)  bf16
    pw = pw_ref[0]                     # (n, tj, pdim) bf16

    # scalar + point logits for ALL heads in one leading-batch MXU matmul
    # (scales / softplus point coefficient folded into q_cat/k_cat by wrapper).
    s = jax.lax.dot_general(q, k, (((2,), (2,)), ((0,), (0,))),
                            preferred_element_type=jnp.float32)     # (H, n, tj)
    s = s + bias_ref[0].astype(jnp.float32)                         # pairwise bias

    # --- online (flash) softmax over j tiles, fp32 ---------------------------
    m_prev = m_scr[...]                                             # (H, n)
    m_new = jnp.maximum(m_prev, jnp.max(s, axis=-1))
    alpha = jnp.exp(m_prev - m_new)                                 # (H, n)
    p = jnp.exp(s - m_new[:, :, None])                              # (H, n, tj)
    l_scr[...] = alpha * l_scr[...] + jnp.sum(p, axis=-1)
    m_scr[...] = m_new

    p_bf = p.astype(jnp.bfloat16)
    acc_sv[...] = alpha[:, :, None] * acc_sv[...] + jax.lax.dot_general(
        p_bf, v, (((2,), (1,)), ((0,), (0,))),
        preferred_element_type=jnp.float32)                         # (H, n, dvp)

    # o_pair needs the attention weights with i as the leading batch dim.
    # TODO(synk): per-head slice stores are 1/8-sublane-density masked stores;
    # Mosaic dot_general wants leading batch dims, so the h-major -> i-major
    # relayout has to happen somewhere (pltpu.einshape is the future candidate).
    for h in range(heads):
        attn_scr[:, h, :] = p[h]
    alpha_t = jnp.transpose(alpha)                                  # (n, H)
    acc_pair[...] = alpha_t[:, :, None] * acc_pair[...] + jax.lax.dot_general(
        attn_scr[...].astype(jnp.bfloat16), pw,
        (((2,), (1,)), ((0,), (0,))),
        preferred_element_type=jnp.float32)                         # (n, H, pdim)

    @pl.when(jt == pl.num_programs(1) - 1)
    def _():
        inv = pl.reciprocal(l_scr[...], approx=True)                # (H, n)
        osv_ref[0] = acc_sv[...] * inv[:, :, None]
        opair_ref[0] = acc_pair[...] * jnp.transpose(inv)[:, :, None]


def ipa_attention_core(q_cat, k_cat, v_cat, bias, pairwise, *, tile_j=256):
    B, H, n, dq = q_cat.shape
    dvp = v_cat.shape[-1]
    pdim = pairwise.shape[-1]
    # j-tile must be a multiple of 128 (lane tiling of the bias block); fall back
    # to a single tile for toy / ragged sizes.
    if n % tile_j == 0 and tile_j % 128 == 0:
        tj = tile_j
    else:
        tj = n
    nj = n // tj

    return pl.pallas_call(
        _ipa_attn_kernel,
        out_shape=(jax.ShapeDtypeStruct((B, H, n, dvp), jnp.float32),
                   jax.ShapeDtypeStruct((B, n, H, pdim), jnp.float32)),
        grid_spec=pltpu.PrefetchScalarGridSpec(
            num_scalar_prefetch=0,
            grid=(B, nj),
            in_specs=[
                pl.BlockSpec((1, H, n, dq), lambda b, j: (b, 0, 0, 0)),
                pl.BlockSpec((1, H, tj, dq), lambda b, j: (b, 0, j, 0)),
                pl.BlockSpec((1, H, tj, dvp), lambda b, j: (b, 0, j, 0)),
                pl.BlockSpec((1, H, n, tj), lambda b, j: (b, 0, 0, j)),
                pl.BlockSpec((1, n, tj, pdim), lambda b, j: (b, 0, j, 0)),
            ],
            out_specs=[
                pl.BlockSpec((1, H, n, dvp), lambda b, j: (b, 0, 0, 0)),
                pl.BlockSpec((1, n, H, pdim), lambda b, j: (b, 0, 0, 0)),
            ],
            scratch_shapes=[
                pltpu.VMEM((H, n), jnp.float32),           # running max
                pltpu.VMEM((H, n), jnp.float32),           # running sum
                pltpu.VMEM((H, n, dvp), jnp.float32),      # scalar+point acc
                pltpu.VMEM((n, H, pdim), jnp.float32),     # pairwise acc
                pltpu.VMEM((n, H, tj), jnp.float32),       # attn (i-major)
            ],
        ),
        compiler_params=pltpu.CompilerParams(
            dimension_semantics=("parallel", "arbitrary"),
            vmem_limit_bytes=_VMEM_LIMIT),
    )(q_cat, k_cat, v_cat, bias, pairwise)


# ---------------------------------------------------------------------------
# Kernel 3: fused out-proj + residual + LN + FF(3) + residual + LN
# ---------------------------------------------------------------------------
def _post_kernel(res_ref, x_ref, w_out_ref, b_out_ref, g1_ref, e1_ref,
                 w1_ref, c1_ref, w2_ref, c2_ref, w3_ref, c3_ref,
                 g2_ref, e2_ref, o_ref, *, eps):
    def ln(v, g, bb):
        mu = jnp.mean(v, axis=-1, keepdims=True)
        d = v - mu
        var = jnp.mean(d * d, axis=-1, keepdims=True)
        return d * jax.lax.rsqrt(var + eps) * g + bb

    bf = jnp.bfloat16
    attn_out = jnp.dot(res_ref[...], w_out_ref[...],
                       preferred_element_type=jnp.float32) + b_out_ref[...]
    x1 = ln(attn_out + x_ref[...], g1_ref[...], e1_ref[...])
    y = jnp.maximum(
        jnp.dot(x1.astype(bf), w1_ref[...],
                preferred_element_type=jnp.float32) + c1_ref[...], 0.0)
    y = jnp.maximum(
        jnp.dot(y.astype(bf), w2_ref[...],
                preferred_element_type=jnp.float32) + c2_ref[...], 0.0)
    y = jnp.dot(y.astype(bf), w3_ref[...],
                preferred_element_type=jnp.float32) + c3_ref[...]
    o_ref[...] = ln(y + x1, g2_ref[...], e2_ref[...])


def pallas_post_attn_ff(results, x2d, p, *, eps=1e-5, tile_m=512):
    M, Kr = results.shape
    dim = x2d.shape[1]
    tm = min(tile_m, M)

    def full(shape):
        zeros = (0,) * len(shape)
        return pl.BlockSpec(shape, lambda i: zeros)

    in_specs = [
        pl.BlockSpec((tm, Kr), lambda i: (i, 0)),
        pl.BlockSpec((tm, dim), lambda i: (i, 0)),
        full(p["w_out"].shape), full(p["b_out"].shape),
        full(p["attn_ln_g"].shape), full(p["attn_ln_b"].shape),
        full(p["w_ff1"].shape), full(p["b_ff1"].shape),
        full(p["w_ff2"].shape), full(p["b_ff2"].shape),
        full(p["w_ff3"].shape), full(p["b_ff3"].shape),
        full(p["ff_ln_g"].shape), full(p["ff_ln_b"].shape),
    ]
    return pl.pallas_call(
        functools.partial(_post_kernel, eps=eps),
        out_shape=jax.ShapeDtypeStruct((M, dim), jnp.float32),
        grid_spec=pltpu.PrefetchScalarGridSpec(
            num_scalar_prefetch=0,
            grid=(pl.cdiv(M, tm),),
            in_specs=in_specs,
            out_specs=pl.BlockSpec((tm, dim), lambda i: (i, 0)),
        ),
        compiler_params=pltpu.CompilerParams(
            dimension_semantics=("parallel",),
            vmem_limit_bytes=_VMEM_LIMIT),
    )(results, x2d, p["w_out"], p["b_out"], p["attn_ln_g"], p["attn_ln_b"],
      p["w_ff1"], p["b_ff1"], p["w_ff2"], p["b_ff2"], p["w_ff3"], p["b_ff3"],
      p["ff_ln_g"], p["ff_ln_b"])


# ---------------------------------------------------------------------------
# Parameters (deterministic, synthetic) + one-time kernel-ready preparation
# ---------------------------------------------------------------------------
def init_params(key, dim, heads, dsk, dsv, dpk, dpv, pdim):
    keys = jax.random.split(key, 16)

    def w(k, shape, scale=0.05):
        return jax.random.normal(k, shape, dtype=jnp.float32) * scale

    out_in = heads * (dsv + pdim + dpv * 4)
    return {
        "w_qs": w(keys[0], (dim, heads * dsk)),
        "w_ks": w(keys[1], (dim, heads * dsk)),
        "w_vs": w(keys[2], (dim, heads * dsv)),
        "w_qp": w(keys[3], (dim, heads * dpk * 3)),
        "w_kp": w(keys[4], (dim, heads * dpk * 3)),
        "w_vp": w(keys[5], (dim, heads * dpv * 3)),
        "w_pb": w(keys[6], (pdim, heads)),
        "b_pb": w(keys[7], (1, heads)),
        "point_weights": jnp.full((heads,), math.log(math.e - 1.0), jnp.float32),
        "w_out": w(keys[8], (out_in, dim)),
        "b_out": w(keys[9], (1, dim)),
        "attn_ln_g": jnp.ones((1, dim), jnp.float32),
        "attn_ln_b": jnp.zeros((1, dim), jnp.float32),
        "w_ff1": w(keys[10], (dim, dim)),
        "b_ff1": jnp.zeros((1, dim), jnp.float32),
        "w_ff2": w(keys[11], (dim, dim)),
        "b_ff2": jnp.zeros((1, dim), jnp.float32),
        "w_ff3": w(keys[12], (dim, dim)),
        "b_ff3": jnp.zeros((1, dim), jnp.float32),
        "ff_ln_g": jnp.ones((1, dim), jnp.float32),
        "ff_ln_b": jnp.zeros((1, dim), jnp.float32),
    }


def prepare_params(p, *, heads, dsk, dpk):
    """One-time derivation of kernel-ready (fused / pre-scaled / bf16) weights."""
    num_logits = 3
    scalar_scale = (num_logits * dsk) ** -0.5
    point_scale = (num_logits * dpk * (9.0 / 2.0)) ** -0.5
    pair_scale = num_logits ** -0.5
    bf = jnp.bfloat16
    w_fused = jnp.concatenate(
        [p["w_qs"] * scalar_scale, p["w_ks"], p["w_vs"],
         p["w_qp"], p["w_kp"], p["w_vp"]], axis=1).astype(bf)
    coef = (-0.5 * jax.nn.softplus(p["point_weights"]) * point_scale
            ).reshape(1, heads, 1, 1).astype(jnp.float32)
    return {
        "w_fused": w_fused,
        "coef": coef,
        "w_pb": (p["w_pb"] * pair_scale).astype(bf),
        "b_pb": (p["b_pb"] * pair_scale).astype(jnp.float32),
        "w_out": p["w_out"].astype(bf), "b_out": p["b_out"],
        "attn_ln_g": p["attn_ln_g"], "attn_ln_b": p["attn_ln_b"],
        "w_ff1": p["w_ff1"].astype(bf), "b_ff1": p["b_ff1"],
        "w_ff2": p["w_ff2"].astype(bf), "b_ff2": p["b_ff2"],
        "w_ff3": p["w_ff3"].astype(bf), "b_ff3": p["b_ff3"],
        "ff_ln_g": p["ff_ln_g"], "ff_ln_b": p["ff_ln_b"],
    }


# ---------------------------------------------------------------------------
# IPABlock forward (post_norm=True, ff_mult=1, ff_num_layers=3, mask=None)
# ---------------------------------------------------------------------------
def ipa_block_forward(dp, x, pairwise, rotations, translations, *,
                      heads=8, dsk=16, dsv=16, dpk=4, dpv=4, eps=1e-8):
    b, n, dim = x.shape
    pdim = pairwise.shape[-1]
    h = heads
    bf = jnp.bfloat16

    x2d = x.reshape(b * n, dim)

    # --- one fused bf16 projection for all six scalar / point q, k, v --------
    w_fused = dp["w_fused"]
    proj = pallas_linear(x2d.astype(bf), w_fused,
                         jnp.zeros((1, w_fused.shape[1]), jnp.float32))

    sizes = [h * dsk, h * dsk, h * dsv, h * dpk * 3, h * dpk * 3, h * dpv * 3]
    offs = [0]
    for sz in sizes:
        offs.append(offs[-1] + sz)

    def chunk(i):
        return proj[:, offs[i]:offs[i + 1]]

    # TODO(synk): these (b,n,h,d)->(b,h,n,d) relayouts are XLA-glue HBM passes;
    # fold the frame transform + q_cat/k_cat packing into a Pallas prologue.
    qs = chunk(0).reshape(b, n, h, dsk).transpose(0, 2, 1, 3)       # pre-scaled
    ks = chunk(1).reshape(b, n, h, dsk).transpose(0, 2, 1, 3)
    vs = chunk(2).reshape(b, n, h, dsv).transpose(0, 2, 1, 3)
    qp = chunk(3).reshape(b, n, h, dpk, 3).transpose(0, 2, 1, 3, 4)
    kp = chunk(4).reshape(b, n, h, dpk, 3).transpose(0, 2, 1, 3, 4)
    vp = chunk(5).reshape(b, n, h, dpv, 3).transpose(0, 2, 1, 3, 4)

    # --- move points to the global frame (tiny 3x3 math, XLA glue) -----------
    t_b = translations[:, None, :, None, :]                          # (b,1,n,1,3)

    def to_global(pts):
        return jnp.einsum("bhndc,bncr->bhndr", pts, rotations) + t_b

    qp_g = to_global(qp).reshape(b, h, n, dpk * 3)
    kp_g = to_global(kp).reshape(b, h, n, dpk * 3)
    vp_g = to_global(vp).reshape(b, h, n, dpv * 3)

    # --- pack scalar + point logits into one q_cat @ k_cat^T per head --------
    #   logits = qs.ks + coef * (|qp|^2 + |kp|^2 - 2 qp.kp)
    coef = dp["coef"]                                                # (1,h,1,1)
    q2 = jnp.sum(qp_g * qp_g, axis=-1, keepdims=True)
    k2 = jnp.sum(kp_g * kp_g, axis=-1, keepdims=True)
    ones = jnp.ones((b, h, n, 1), jnp.float32)
    parts_q = [qs, -2.0 * coef * qp_g, coef * q2, coef * ones]
    parts_k = [ks, kp_g, ones, k2]
    pad = (-(dsk + dpk * 3 + 2)) % 8
    if pad:
        zpad = jnp.zeros((b, h, n, pad), jnp.float32)
        parts_q.append(zpad)
        parts_k.append(zpad)
    q_cat = jnp.concatenate(parts_q, axis=-1).astype(bf)             # (b,h,n,·)
    k_cat = jnp.concatenate(parts_k, axis=-1).astype(bf)
    v_cat = jnp.concatenate([vs, vp_g], axis=-1).astype(bf)          # (b,h,n,dsv+3dpv)

    # --- pairwise attention bias (tiled bf16 Pallas linear) -------------------
    # TODO(synk): fold into the attention kernel once the H-minor -> H-major
    # in-kernel relayout is expressible; this costs one extra pairwise HBM read
    # plus a (b,n,n,h) transpose.
    pb = pallas_linear(pairwise.reshape(b * n * n, pdim).astype(bf),
                       dp["w_pb"], dp["b_pb"], out_dtype=bf)
    bias = pb.reshape(b, n, n, h).transpose(0, 3, 1, 2)              # (b,h,n,n)

    # --- fused attention core (flash-style j-tiled, all heads per step) -------
    o_sv, o_pair = ipa_attention_core(q_cat, k_cat, v_cat, bias,
                                      pairwise.astype(bf))

    o_s = o_sv[..., :dsv]                                            # (b,h,n,dsv)
    o_p = o_sv[..., dsv:].reshape(b, h, n, dpv, 3)

    # back to local frame + point norms (tiny, XLA glue)
    rp = jnp.einsum("bhndc,bnrc->bhndr", o_p - t_b, rotations)
    rp_norm = jnp.sqrt(jnp.sum(rp * rp, axis=-1) + eps)              # (b,h,n,dpv)

    res_s = o_s.transpose(0, 2, 1, 3).reshape(b, n, h * dsv)
    res_p = rp.transpose(0, 2, 1, 3, 4).reshape(b, n, h * dpv * 3)
    res_pn = rp_norm.transpose(0, 2, 1, 3).reshape(b, n, h * dpv)
    res_pw = o_pair.reshape(b, n, h * pdim)
    results = jnp.concatenate([res_s, res_p, res_pn, res_pw],
                              axis=-1).reshape(b * n, -1)

    # --- fused out-proj + residual + LN + FF(3 layers) + residual + LN --------
    out = pallas_post_attn_ff(results.astype(bf), x2d, dp)
    return out.reshape(b, n, dim)


# ---------------------------------------------------------------------------
if __name__ == "__main__":
    B, N, DIM, HEADS = 2, 8, 32, 8
    DSK = DSV = 16
    DPK = DPV = 4

    key = jax.random.PRNGKey(0)
    kx, kpair, krot, ktr, kparam = jax.random.split(key, 5)

    x = jax.random.normal(kx, (B, N, DIM), dtype=jnp.float32)
    pairwise = jax.random.normal(kpair, (B, N, N, DIM), dtype=jnp.float32) * 0.1
    raw = jax.random.normal(krot, (B, N, 3, 3), dtype=jnp.float32)
    rotations, _ = jnp.linalg.qr(raw)                                # frames
    translations = jax.random.normal(ktr, (B, N, 3), dtype=jnp.float32)

    params = init_params(kparam, DIM, HEADS, DSK, DSV, DPK, DPV, DIM)
    dparams = prepare_params(params, heads=HEADS, dsk=DSK, dpk=DPK)  # once, outside jit

    fwd = jax.jit(functools.partial(ipa_block_forward, heads=HEADS, dsk=DSK,
                                    dsv=DSV, dpk=DPK, dpv=DPV))
    out = fwd(dparams, x, pairwise, rotations, translations)
    out = jax.block_until_ready(out)

    assert out.shape == (B, N, DIM)
    assert bool(jnp.all(jnp.isfinite(out)))
    print("KERNEL_OK")
</pallas_src>

<mosaic_0001>
module attributes {stable_mosaic.version = 11 : i64} {
  func.func @_linear_kernel(%arg0: i32, %arg1: memref<16x32xbf16, #tpu.memory_space<vmem>>, %arg2: memref<32x672xbf16, #tpu.memory_space<vmem>>, %arg3: memref<1x672xf32, #tpu.memory_space<vmem>>, %arg4: memref<16x672xf32, #tpu.memory_space<vmem>>) attributes {dimension_semantics = [#tpu.dimension_semantics<parallel>], iteration_bounds = array<i64: 1>, scalar_prefetch = 0 : i64, scratch_operands = 0 : i64, tpu.core_type = #tpu.core_type<tc>, window_params = [{transform_indices = @transform_0, window_bounds = array<i64: 16, 32>}, {pipeline_mode = #tpu.pipeline_mode<synchronous>, transform_indices = @transform_1, window_bounds = array<i64: 32, 672>}, {pipeline_mode = #tpu.pipeline_mode<synchronous>, transform_indices = @transform_2, window_bounds = array<i64: 1, 672>}, {transform_indices = @transform_3, window_bounds = array<i64: 16, 672>}]} {
    %c0 = arith.constant 0 : index
    %c0_0 = arith.constant 0 : index
    %0 = vector.load %arg1[%c0, %c0_0] : memref<16x32xbf16, #tpu.memory_space<vmem>>, vector<16x32xbf16>
    %c0_1 = arith.constant 0 : index
    %c0_2 = arith.constant 0 : index
    %1 = vector.load %arg2[%c0_1, %c0_2] : memref<32x672xbf16, #tpu.memory_space<vmem>>, vector<32x672xbf16>
    %cst = arith.constant dense<0.000000e+00> : vector<16x672xf32>
    %2 = tpu.matmul %0, %1, %cst {dimension_numbers = #tpu.dot_dimension_numbers<[1], [0], [0], [1], [0, 0, 1, 1], [], []>} : vector<16x32xbf16>, vector<32x672xbf16>, vector<16x672xf32> -> vector<16x672xf32>
    %c0_3 = arith.constant 0 : index
    %c0_4 = arith.constant 0 : index
    %3 = vector.load %arg3[%c0_3, %c0_4] : memref<1x672xf32, #tpu.memory_space<vmem>>, vector<1x672xf32>
    %4 = vector.broadcast %3 : vector<1x672xf32> to vector<16x672xf32>
    %5 = arith.addf %2, %4 : vector<16x672xf32>
    %c0_5 = arith.constant 0 : index
    %c0_6 = arith.constant 0 : index
    %6 = vector.load %arg4[%c0_5, %c0_6] : memref<16x672xf32, #tpu.memory_space<vmem>>, vector<16x672xf32>
    tpu.vector_store %arg4[%c0_5, %c0_6], %5 {strides = array<i32>} : memref<16x672xf32, #tpu.memory_space<vmem>>, vector<16x672xf32>,
    return
  }
  func.func @transform_0(%arg0: i32) -> (i32, i32) {
    %c0_i32 = arith.constant 0 : i32
    %c0_i32_0 = arith.constant 0 : i32
    return %arg0, %c0_i32 : i32, i32
  }
  func.func @transform_1(%arg0: i32) -> (i32, i32) {
    %c0_i32 = arith.constant 0 : i32
    %c0_i32_0 = arith.constant 0 : i32
    %c0_i32_1 = arith.constant 0 : i32
    return %c0_i32, %c0_i32_0 : i32, i32
  }
  func.func @transform_2(%arg0: i32) -> (i32, i32) {
    %c0_i32 = arith.constant 0 : i32
    %c0_i32_0 = arith.constant 0 : i32
    %c0_i32_1 = arith.constant 0 : i32
    return %c0_i32, %c0_i32_0 : i32, i32
  }
  func.func @transform_3(%arg0: i32) -> (i32, i32) {
    %c0_i32 = arith.constant 0 : i32
    %c0_i32_0 = arith.constant 0 : i32
    return %arg0, %c0_i32 : i32, i32
  }
}

module attributes {stable_mosaic.version = 11 : i64} {
  func.func @_linear_kernel(%arg0: i32, %arg1: memref<128x32xbf16, #tpu.memory_space<vmem>>, %arg2: memref<32x8xbf16, #tpu.memory_space<vmem>>, %arg3: memref<1x8xf32, #tpu.memory_space<vmem>>, %arg4: memref<128x8xbf16, #tpu.memory_space<vmem>>) attributes {dimension_semantics = [#tpu.dimension_semantics<parallel>], iteration_bounds = array<i64: 1>, scalar_prefetch = 0 : i64, scratch_operands = 0 : i64, tpu.core_type = #tpu.core_type<tc>, window_params = [{transform_indices = @transform_0, window_bounds = array<i64: 128, 32>}, {pipeline_mode = #tpu.pipeline_mode<synchronous>, transform_indices = @transform_1, window_bounds = array<i64: 32, 8>}, {pipeline_mode = #tpu.pipeline_mode<synchronous>, transform_indices = @transform_2, window_bounds = array<i64: 1, 8>}, {transform_indices = @transform_3, window_bounds = array<i64: 128, 8>}]} {
    %c0 = arith.constant 0 : index
    %c0_0 = arith.constant 0 : index
    %0 = vector.load %arg1[%c0, %c0_0] : memref<128x32xbf16, #tpu.memory_space<vmem>>, vector<128x32xbf16>
    %c0_1 = arith.constant 0 : index
    %c0_2 = arith.constant 0 : index
    %1 = vector.load %arg2[%c0_1, %c0_2] : memref<32x8xbf16, #tpu.memory_space<vmem>>, vector<32x8xbf16>
    %cst = arith.constant dense<0.000000e+00> : vector<128x8xf32>
    %2 = tpu.matmul %0, %1, %cst {dimension_numbers = #tpu.dot_dimension_numbers<[1], [0], [0], [1], [0, 0, 1, 1], [], []>} : vector<128x32xbf16>, vector<32x8xbf16>, vector<128x8xf32> -> vector<128x8xf32>
    %c0_3 = arith.constant 0 : index
    %c0_4 = arith.constant 0 : index
    %3 = vector.load %arg3[%c0_3, %c0_4] : memref<1x8xf32, #tpu.memory_space<vmem>>, vector<1x8xf32>
    %4 = vector.broadcast %3 : vector<1x8xf32> to vector<128x8xf32>
    %5 = arith.addf %2, %4 : vector<128x8xf32>
    %6 = arith.truncf %5 : vector<128x8xf32> to vector<128x8xbf16>
    %c0_5 = arith.constant 0 : index
    %c0_6 = arith.constant 0 : index
    %7 = vector.load %arg4[%c0_5, %c0_6] : memref<128x8xbf16, #tpu.memory_space<vmem>>, vector<128x8xbf16>
    tpu.vector_store %arg4[%c0_5, %c0_6], %6 {strides = array<i32>} : memref<128x8xbf16, #tpu.memory_space<vmem>>, vector<128x8xbf16>,
    return
  }
  func.func @transform_0(%arg0: i32) -> (i32, i32) {
    %c0_i32 = arith.constant 0 : i32
    %c0_i32_0 = arith.constant 0 : i32
    return %arg0, %c0_i32 : i32, i32
  }
  func.func @transform_1(%arg0: i32) -> (i32, i32) {
    %c0_i32 = arith.constant 0 : i32
    %c0_i32_0 = arith.constant 0 : i32
    %c0_i32_1 = arith.constant 0 : i32
    return %c0_i32, %c0_i32_0 : i32, i32
  }
  func.func @transform_2(%arg0: i32) -> (i32, i32) {
    %c0_i32 = arith.constant 0 : i32
    %c0_i32_0 = arith.constant 0 : i32
    %c0_i32_1 = arith.constant 0 : i32
    return %c0_i32, %c0_i32_0 : i32, i32
  }
  func.func @transform_3(%arg0: i32) -> (i32, i32) {
    %c0_i32 = arith.constant 0 : i32
    %c0_i32_0 = arith.constant 0 : i32
    return %arg0, %c0_i32 : i32, i32
  }
}

module attributes {stable_mosaic.version = 11 : i64} {
  func.func @_ipa_attn_kernel(%arg0: i32, %arg1: i32, %arg2: memref<1x8x8x32xbf16, #tpu.memory_space<vmem>>, %arg3: memref<1x8x8x32xbf16, #tpu.memory_space<vmem>>, %arg4: memref<1x8x8x28xbf16, #tpu.memory_space<vmem>>, %arg5: memref<1x8x8x8xbf16, #tpu.memory_space<vmem>>, %arg6: memref<1x8x8x32xbf16, #tpu.memory_space<vmem>>, %arg7: memref<1x8x8x28xf32, #tpu.memory_space<vmem>>, %arg8: memref<1x8x8x32xf32, #tpu.memory_space<vmem>>, %arg9: memref<8x8xf32, #tpu.memory_space<vmem>>, %arg10: memref<8x8xf32, #tpu.memory_space<vmem>>, %arg11: memref<8x8x28xf32, #tpu.memory_space<vmem>>, %arg12: memref<8x8x32xf32, #tpu.memory_space<vmem>>, %arg13: memref<8x8x8xf32, #tpu.memory_space<vmem>>) attributes {dimension_semantics = [#tpu.dimension_semantics<parallel>, #tpu.dimension_semantics<arbitrary>], iteration_bounds = array<i64: 2, 1>, scalar_prefetch = 0 : i64, scratch_operands = 5 : i64, tpu.core_type = #tpu.core_type<tc>, window_params = [{transform_indices = @transform_0, window_bounds = array<i64: 1, 8, 8, 32>}, {transform_indices = @transform_1, window_bounds = array<i64: 1, 8, 8, 32>}, {transform_indices = @transform_2, window_bounds = array<i64: 1, 8, 8, 28>}, {transform_indices = @transform_3, window_bounds = array<i64: 1, 8, 8, 8>}, {transform_indices = @transform_4, window_bounds = array<i64: 1, 8, 8, 32>}, {transform_indices = @transform_5, window_bounds = array<i64: 1, 8, 8, 28>}, {transform_indices = @transform_6, window_bounds = array<i64: 1, 8, 8, 32>}]} {
    %c0_i32 = arith.constant 0 : i32
    %0 = arith.cmpi eq, %arg1, %c0_i32 : i32
    %1 = arith.extui %0 : i1 to i32
    %c0_i32_0 = arith.constant 0 : i32
    %2 = arith.cmpi ne, %1, %c0_i32_0 : i32
    scf.if %2 {
      %cst_66 = arith.constant 0xFF800000 : f32
      %92 = vector.broadcast %cst_66 : f32 to vector<8x8xf32>
      %c0_67 = arith.constant 0 : index
      %c0_68 = arith.constant 0 : index
      %93 = vector.load %arg9[%c0_67, %c0_68] : memref<8x8xf32, #tpu.memory_space<vmem>>, vector<8x8xf32>
      tpu.vector_store %arg9[%c0_67, %c0_68], %92 {strides = array<i32>} : memref<8x8xf32, #tpu.memory_space<vmem>>, vector<8x8xf32>,
      %cst_69 = arith.constant 0.000000e+00 : f32
      %94 = vector.broadcast %cst_69 : f32 to vector<8x8xf32>
      %c0_70 = arith.constant 0 : index
      %c0_71 = arith.constant 0 : index
      %95 = vector.load %arg10[%c0_70, %c0_71] : memref<8x8xf32, #tpu.memory_space<vmem>>, vector<8x8xf32>
      tpu.vector_store %arg10[%c0_70, %c0_71], %94 {strides = array<i32>} : memref<8x8xf32, #tpu.memory_space<vmem>>, vector<8x8xf32>,
      %cst_72 = arith.constant 0.000000e+00 : f32
      %96 = vector.broadcast %cst_72 : f32 to vector<8x8x28xf32>
      %c0_73 = arith.constant 0 : index
      %c0_74 = arith.constant 0 : index
      %c0_75 = arith.constant 0 : index
      %97 = vector.load %arg11[%c0_73, %c0_74, %c0_75] : memref<8x8x28xf32, #tpu.memory_space<vmem>>, vector<8x8x28xf32>
      tpu.vector_store %arg11[%c0_73, %c0_74, %c0_75], %96 {strides = array<i32>} : memref<8x8x28xf32, #tpu.memory_space<vmem>>, vector<8x8x28xf32>,
      %cst_76 = arith.constant 0.000000e+00 : f32
      %98 = vector.broadcast %cst_76 : f32 to vector<8x8x32xf32>
      %c0_77 = arith.constant 0 : index
      %c0_78 = arith.constant 0 : index
      %c0_79 = arith.constant 0 : index
      %99 = vector.load %arg12[%c0_77, %c0_78, %c0_79] : memref<8x8x32xf32, #tpu.memory_space<vmem>>, vector<8x8x32xf32>
      tpu.vector_store %arg12[%c0_77, %c0_78, %c0_79], %98 {strides = array<i32>} : memref<8x8x32xf32, #tpu.memory_space<vmem>>, vector<8x8x32xf32>,
    } else {
    }
    %c0 = arith.constant 0 : index
    %c0_1 = arith.constant 0 : index
    %c0_2 = arith.constant 0 : index
    %c0_3 = arith.constant 0 : index
    %3 = vector.load %arg2[%c0, %c0_1, %c0_2, %c0_3] : memref<1x8x8x32xbf16, #tpu.memory_space<vmem>>, vector<1x8x8x32xbf16>
    %4 = vector.shape_cast %3 : vector<1x8x8x32xbf16> to vector<8x8x32xbf16>
    %c0_4 = arith.constant 0 : index
    %c0_5 = arith.constant 0 : index
    %c0_6 = arith.constant 0 : index
    %c0_7 = arith.constant 0 : index
    %5 = vector.load %arg3[%c0_4, %c0_5, %c0_6, %c0_7] : memref<1x8x8x32xbf16, #tpu.memory_space<vmem>>, vector<1x8x8x32xbf16>
    %6 = vector.shape_cast %5 : vector<1x8x8x32xbf16> to vector<8x8x32xbf16>
    %c0_8 = arith.constant 0 : index
    %c0_9 = arith.constant 0 : index
    %c0_10 = arith.constant 0 : index
    %c0_11 = arith.constant 0 : index
    %7 = vector.load %arg4[%c0_8, %c0_9, %c0_10, %c0_11] : memref<1x8x8x28xbf16, #tpu.memory_space<vmem>>, vector<1x8x8x28xbf16>
    %8 = vector.shape_cast %7 : vector<1x8x8x28xbf16> to vector<8x8x28xbf16>
    %c0_12 = arith.constant 0 : index
    %c0_13 = arith.constant 0 : index
    %c0_14 = arith.constant 0 : index
    %c0_15 = arith.constant 0 : index
    %9 = vector.load %arg6[%c0_12, %c0_13, %c0_14, %c0_15] : memref<1x8x8x32xbf16, #tpu.memory_space<vmem>>, vector<1x8x8x32xbf16>
    %10 = vector.shape_cast %9 : vector<1x8x8x32xbf16> to vector<8x8x32xbf16>
    %cst = arith.constant dense<0.000000e+00> : vector<8x8x8xf32>
    %11 = tpu.matmul %4, %6, %cst {dimension_numbers = #tpu.dot_dimension_numbers<[2], [2], [1], [1], [0, 0, 0, 1, 1, 1], [0], [0]>} : vector<8x8x32xbf16>, vector<8x8x32xbf16>, vector<8x8x8xf32> -> vector<8x8x8xf32>
    %c0_16 = arith.constant 0 : index
    %c0_17 = arith.constant 0 : index
    %c0_18 = arith.constant 0 : index
    %c0_19 = arith.constant 0 : index
    %12 = vector.load %arg5[%c0_16, %c0_17, %c0_18, %c0_19] : memref<1x8x8x8xbf16, #tpu.memory_space<vmem>>, vector<1x8x8x8xbf16>
    %13 = vector.shape_cast %12 : vector<1x8x8x8xbf16> to vector<8x8x8xbf16>
    %14 = arith.extf %13 : vector<8x8x8xbf16> to vector<8x8x8xf32>
    %15 = arith.addf %11, %14 : vector<8x8x8xf32>
    %c0_20 = arith.constant 0 : index
    %c0_21 = arith.constant 0 : index
    %16 = vector.load %arg9[%c0_20, %c0_21] : memref<8x8xf32, #tpu.memory_space<vmem>>, vector<8x8xf32>
    %cst_22 = arith.constant dense<0xFF800000> : vector<8x8xf32>
    %17 = vector.multi_reduction <maximumf>, %15, %cst_22 [2] : vector<8x8x8xf32> to vector<8x8xf32>
    %18 = arith.maximumf %16, %17 : vector<8x8xf32>
    %19 = arith.subf %16, %18 : vector<8x8xf32>
    %20 = math.exp %19 : vector<8x8xf32>
    %21 = vector.shape_cast %18 : vector<8x8xf32> to vector<8x8x1xf32>
    %22 = vector.broadcast %21 : vector<8x8x1xf32> to vector<8x8x8xf32>
    %23 = arith.subf %15, %22 : vector<8x8x8xf32>
    %24 = math.exp %23 : vector<8x8x8xf32>
    %c0_23 = arith.constant 0 : index
    %c0_24 = arith.constant 0 : index
    %25 = vector.load %arg10[%c0_23, %c0_24] : memref<8x8xf32, #tpu.memory_space<vmem>>, vector<8x8xf32>
    %26 = arith.mulf %20, %25 : vector<8x8xf32>
    %cst_25 = arith.constant dense<0.000000e+00> : vector<8x8xf32>
    %27 = vector.multi_reduction <add>, %24, %cst_25 [2] : vector<8x8x8xf32> to vector<8x8xf32>
    %28 = arith.addf %26, %27 : vector<8x8xf32>
    %c0_26 = arith.constant 0 : index
    %c0_27 = arith.constant 0 : index
    %29 = vector.load %arg10[%c0_26, %c0_27] : memref<8x8xf32, #tpu.memory_space<vmem>>, vector<8x8xf32>
    tpu.vector_store %arg10[%c0_26, %c0_27], %28 {strides = array<i32>} : memref<8x8xf32, #tpu.memory_space<vmem>>, vector<8x8xf32>,
    %c0_28 = arith.constant 0 : index
    %c0_29 = arith.constant 0 : index
    %30 = vector.load %arg9[%c0_28, %c0_29] : memref<8x8xf32, #tpu.memory_space<vmem>>, vector<8x8xf32>
    tpu.vector_store %arg9[%c0_28, %c0_29], %18 {strides = array<i32>} : memref<8x8xf32, #tpu.memory_space<vmem>>, vector<8x8xf32>,
    %31 = arith.truncf %24 : vector<8x8x8xf32> to vector<8x8x8xbf16>
    %32 = vector.shape_cast %20 : vector<8x8xf32> to vector<8x8x1xf32>
    %c0_30 = arith.constant 0 : index
    %c0_31 = arith.constant 0 : index
    %c0_32 = arith.constant 0 : index
    %33 = vector.load %arg11[%c0_30, %c0_31, %c0_32] : memref<8x8x28xf32, #tpu.memory_space<vmem>>, vector<8x8x28xf32>
    %34 = vector.broadcast %32 : vector<8x8x1xf32> to vector<8x8x28xf32>
    %35 = arith.mulf %34, %33 : vector<8x8x28xf32>
    %cst_33 = arith.constant dense<0.000000e+00> : vector<8x8x28xf32>
    %36 = tpu.matmul %31, %8, %cst_33 {dimension_numbers = #tpu.dot_dimension_numbers<[2], [1], [1], [2], [0, 0, 0, 1, 1, 2], [0], [0]>} : vector<8x8x8xbf16>, vector<8x8x28xbf16>, vector<8x8x28xf32> -> vector<8x8x28xf32>
    %37 = arith.addf %35, %36 : vector<8x8x28xf32>
    %c0_34 = arith.constant 0 : index
    %c0_35 = arith.constant 0 : index
    %c0_36 = arith.constant 0 : index
    %38 = vector.load %arg11[%c0_34, %c0_35, %c0_36] : memref<8x8x28xf32, #tpu.memory_space<vmem>>, vector<8x8x28xf32>
    tpu.vector_store %arg11[%c0_34, %c0_35, %c0_36], %37 {strides = array<i32>} : memref<8x8x28xf32, #tpu.memory_space<vmem>>, vector<8x8x28xf32>,
    %39 = vector.extract_strided_slice %24 {offsets = [0, 0, 0], sizes = [1, 8, 8], strides = [1, 1, 1]} : vector<8x8x8xf32> to vector<1x8x8xf32>
    %40 = vector.shape_cast %39 : vector<1x8x8xf32> to vector<8x8xf32>
    %c0_37 = arith.constant 0 : index
    %c0_38 = arith.constant 0 : index
    %c0_39 = arith.constant 0 : index
    %41 = vector.load %arg13[%c0_37, %c0_38, %c0_39] : memref<8x8x8xf32, #tpu.memory_space<vmem>>, vector<8x1x8xf32>
    %42 = vector.shape_cast %41 : vector<8x1x8xf32> to vector<8x8xf32>
    %43 = vector.shape_cast %40 : vector<8x8xf32> to vector<8x1x8xf32>
    tpu.vector_store %arg13[%c0_37, %c0_38, %c0_39], %43 {strides = array<i32>} : memref<8x8x8xf32, #tpu.memory_space<vmem>>, vector<8x1x8xf32>,
    %44 = vector.extract_strided_slice %24 {offsets = [1, 0, 0], sizes = [1, 8, 8], strides = [1, 1, 1]} : vector<8x8x8xf32> to vector<1x8x8xf32>
    %45 = vector.shape_cast %44 : vector<1x8x8xf32> to vector<8x8xf32>
    %c0_40 = arith.constant 0 : index
    %c1 = arith.constant 1 : index
    %c0_41 = arith.constant 0 : index
    %46 = vector.load %arg13[%c0_40, %c1, %c0_41] : memref<8x8x8xf32, #tpu.memory_space<vmem>>, vector<8x1x8xf32>
    %47 = vector.shape_cast %46 : vector<8x1x8xf32> to vector<8x8xf32>
    %48 = vector.shape_cast %45 : vector<8x8xf32> to vector<8x1x8xf32>
    tpu.vector_store %arg13[%c0_40, %c1, %c0_41], %48 {strides = array<i32>} : memref<8x8x8xf32, #tpu.memory_space<vmem>>, vector<8x1x8xf32>,
    %49 = vector.extract_strided_slice %24 {offsets = [2, 0, 0], sizes = [1, 8, 8], strides = [1, 1, 1]} : vector<8x8x8xf32> to vector<1x8x8xf32>
    %50 = vector.shape_cast %49 : vector<1x8x8xf32> to vector<8x8xf32>
    %c0_42 = arith.constant 0 : index
    %c2 = arith.constant 2 : index
    %c0_43 = arith.constant 0 : index
    %51 = vector.load %arg13[%c0_42, %c2, %c0_43] : memref<8x8x8xf32, #tpu.memory_space<vmem>>, vector<8x1x8xf32>
    %52 = vector.shape_cast %51 : vector<8x1x8xf32> to vector<8x8xf32>
    %53 = vector.shape_cast %50 : vector<8x8xf32> to vector<8x1x8xf32>
    tpu.vector_store %arg13[%c0_42, %c2, %c0_43], %53 {strides = array<i32>} : memref<8x8x8xf32, #tpu.memory_space<vmem>>, vector<8x1x8xf32>,
    %54 = vector.extract_strided_slice %24 {offsets = [3, 0, 0], sizes = [1, 8, 8], strides = [1, 1, 1]} : vector<8x8x8xf32> to vector<1x8x8xf32>
    %55 = vector.shape_cast %54 : vector<1x8x8xf32> to vector<8x8xf32>
    %c0_44 = arith.constant 0 : index
    %c3 = arith.constant 3 : index
    %c0_45 = arith.constant 0 : index
    %56 = vector.load %arg13[%c0_44, %c3, %c0_45] : memref<8x8x8xf32, #tpu.memory_space<vmem>>, vector<8x1x8xf32>
    %57 = vector.shape_cast %56 : vector<8x1x8xf32> to vector<8x8xf32>
    %58 = vector.shape_cast %55 : vector<8x8xf32> to vector<8x1x8xf32>
    tpu.vector_store %arg13[%c0_44, %c3, %c0_45], %58 {strides = array<i32>} : memref<8x8x8xf32, #tpu.memory_space<vmem>>, vector<8x1x8xf32>,
    %59 = vector.extract_strided_slice %24 {offsets = [4, 0, 0], sizes = [1, 8, 8], strides = [1, 1, 1]} : vector<8x8x8xf32> to vector<1x8x8xf32>
    %60 = vector.shape_cast %59 : vector<1x8x8xf32> to vector<8x8xf32>
    %c0_46 = arith.constant 0 : index
    %c4 = arith.constant 4 : index
    %c0_47 = arith.constant 0 : index
    %61 = vector.load %arg13[%c0_46, %c4, %c0_47] : memref<8x8x8xf32, #tpu.memory_space<vmem>>, vector<8x1x8xf32>
    %62 = vector.shape_cast %61 : vector<8x1x8xf32> to vector<8x8xf32>
    %63 = vector.shape_cast %60 : vector<8x8xf32> to vector<8x1x8xf32>
    tpu.vector_store %arg13[%c0_46, %c4, %c0_47], %63 {strides = array<i32>} : memref<8x8x8xf32, #tpu.memory_space<vmem>>, vector<8x1x8xf32>,
    %64 = vector.extract_strided_slice %24 {offsets = [5, 0, 0], sizes = [1, 8, 8], strides = [1, 1, 1]} : vector<8x8x8xf32> to vector<1x8x8xf32>
    %65 = vector.shape_cast %64 : vector<1x8x8xf32> to vector<8x8xf32>
    %c0_48 = arith.constant 0 : index
    %c5 = arith.constant 5 : index
    %c0_49 = arith.constant 0 : index
    %66 = vector.load %arg13[%c0_48, %c5, %c0_49] : memref<8x8x8xf32, #tpu.memory_space<vmem>>, vector<8x1x8xf32>
    %67 = vector.shape_cast %66 : vector<8x1x8xf32> to vector<8x8xf32>
    %68 = vector.shape_cast %65 : vector<8x8xf32> to vector<8x1x8xf32>
    tpu.vector_store %arg13[%c0_48, %c5, %c0_49], %68 {strides = array<i32>} : memref<8x8x8xf32, #tpu.memory_space<vmem>>, vector<8x1x8xf32>,
    %69 = vector.extract_strided_slice %24 {offsets = [6, 0, 0], sizes = [1, 8, 8], strides = [1, 1, 1]} : vector<8x8x8xf32> to vector<1x8x8xf32>
    %70 = vector.shape_cast %69 : vector<1x8x8xf32> to vector<8x8xf32>
    %c0_50 = arith.constant 0 : index
    %c6 = arith.constant 6 : index
    %c0_51 = arith.constant 0 : index
    %71 = vector.load %arg13[%c0_50, %c6, %c0_51] : memref<8x8x8xf32, #tpu.memory_space<vmem>>, vector<8x1x8xf32>
    %72 = vector.shape_cast %71 : vector<8x1x8xf32> to vector<8x8xf32>
    %73 = vector.shape_cast %70 : vector<8x8xf32> to vector<8x1x8xf32>
    tpu.vector_store %arg13[%c0_50, %c6, %c0_51], %73 {strides = array<i32>} : memref<8x8x8xf32, #tpu.memory_space<vmem>>, vector<8x1x8xf32>,
    %74 = vector.extract_strided_slice %24 {offsets = [7, 0, 0], sizes = [1, 8, 8], strides = [1, 1, 1]} : vector<8x8x8xf32> to vector<1x8x8xf32>
    %75 = vector.shape_cast %74 : vector<1x8x8xf32> to vector<8x8xf32>
    %c0_52 = arith.constant 0 : index
    %c7 = arith.constant 7 : index
    %c0_53 = arith.constant 0 : index
    %76 = vector.load %arg13[%c0_52, %c7, %c0_53] : memref<8x8x8xf32, #tpu.memory_space<vmem>>, vector<8x1x8xf32>
    %77 = vector.shape_cast %76 : vector<8x1x8xf32> to vector<8x8xf32>
    %78 = vector.shape_cast %75 : vector<8x8xf32> to vector<8x1x8xf32>
    tpu.vector_store %arg13[%c0_52, %c7, %c0_53], %78 {strides = array<i32>} : memref<8x8x8xf32, #tpu.memory_space<vmem>>, vector<8x1x8xf32>,
    %79 = tpu.transpose %20, [1, 0] : vector<8x8xf32> -> vector<8x8xf32>
    %80 = vector.shape_cast %79 : vector<8x8xf32> to vector<8x8x1xf32>
    %c0_54 = arith.constant 0 : index
    %c0_55 = arith.constant 0 : index
    %c0_56 = arith.constant 0 : index
    %81 = vector.load %arg12[%c0_54, %c0_55, %c0_56] : memref<8x8x32xf32, #tpu.memory_space<vmem>>, vector<8x8x32xf32>
    %82 = vector.broadcast %80 : vector<8x8x1xf32> to vector<8x8x32xf32>
    %83 = arith.mulf %82, %81 : vector<8x8x32xf32>
    %c0_57 = arith.constant 0 : index
    %c0_58 = arith.constant 0 : index
    %c0_59 = arith.constant 0 : index
    %84 = vector.load %arg13[%c0_57, %c0_58, %c0_59] : memref<8x8x8xf32, #tpu.memory_space<vmem>>, vector<8x8x8xf32>
    %85 = arith.truncf %84 : vector<8x8x8xf32> to vector<8x8x8xbf16>
    %cst_60 = arith.constant dense<0.000000e+00> : vector<8x8x32xf32>
    %86 = tpu.matmul %85, %10, %cst_60 {dimension_numbers = #tpu.dot_dimension_numbers<[2], [1], [1], [2], [0, 0, 0, 1, 1, 2], [0], [0]>} : vector<8x8x8xbf16>, vector<8x8x32xbf16>, vector<8x8x32xf32> -> vector<8x8x32xf32>
    %87 = arith.addf %83, %86 : vector<8x8x32xf32>
    %c0_61 = arith.constant 0 : index
    %c0_62 = arith.constant 0 : index
    %c0_63 = arith.constant 0 : index
    %88 = vector.load %arg12[%c0_61, %c0_62, %c0_63] : memref<8x8x32xf32, #tpu.memory_space<vmem>>, vector<8x8x32xf32>
    tpu.vector_store %arg12[%c0_61, %c0_62, %c0_63], %87 {strides = array<i32>} : memref<8x8x32xf32, #tpu.memory_space<vmem>>, vector<8x8x32xf32>,
    %c0_i32_64 = arith.constant 0 : i32
    %89 = arith.cmpi eq, %arg1, %c0_i32_64 : i32
    %90 = arith.extui %89 : i1 to i32
    %c0_i32_65 = arith.constant 0 : i32
    %91 = arith.cmpi ne, %90, %c0_i32_65 : i32
    scf.if %91 {
      %c0_66 = arith.constant 0 : index
      %c0_67 = arith.constant 0 : index
      %92 = vector.load %arg10[%c0_66, %c0_67] : memref<8x8xf32, #tpu.memory_space<vmem>>, vector<8x8xf32>
      %93 = tpu.reciprocal %92 {approx = true} : vector<8x8xf32> -> vector<8x8xf32>
      %c0_68 = arith.constant 0 : index
      %c0_69 = arith.constant 0 : index
      %c0_70 = arith.constant 0 : index
      %94 = vector.load %arg11[%c0_68, %c0_69, %c0_70] : memref<8x8x28xf32, #tpu.memory_space<vmem>>, vector<8x8x28xf32>
      %95 = vector.shape_cast %93 : vector<8x8xf32> to vector<8x8x1xf32>
      %96 = vector.broadcast %95 : vector<8x8x1xf32> to vector<8x8x28xf32>
      %97 = arith.mulf %94, %96 : vector<8x8x28xf32>
      %c0_71 = arith.constant 0 : index
      %c0_72 = arith.constant 0 : index
      %c0_73 = arith.constant 0 : index
      %c0_74 = arith.constant 0 : index
      %98 = vector.load %arg7[%c0_71, %c0_72, %c0_73, %c0_74] : memref<1x8x8x28xf32, #tpu.memory_space<vmem>>, vector<1x8x8x28xf32>
      %99 = vector.shape_cast %98 : vector<1x8x8x28xf32> to vector<8x8x28xf32>
      %100 = vector.shape_cast %97 : vector<8x8x28xf32> to vector<1x8x8x28xf32>
      tpu.vector_store %arg7[%c0_71, %c0_72, %c0_73, %c0_74], %100 {strides = array<i32>} : memref<1x8x8x28xf32, #tpu.memory_space<vmem>>, vector<1x8x8x28xf32>,
      %c0_75 = arith.constant 0 : index
      %c0_76 = arith.constant 0 : index
      %c0_77 = arith.constant 0 : index
      %101 = vector.load %arg12[%c0_75, %c0_76, %c0_77] : memref<8x8x32xf32, #tpu.memory_space<vmem>>, vector<8x8x32xf32>
      %102 = tpu.transpose %93, [1, 0] : vector<8x8xf32> -> vector<8x8xf32>
      %103 = vector.shape_cast %102 : vector<8x8xf32> to vector<8x8x1xf32>
      %104 = vector.broadcast %103 : vector<8x8x1xf32> to vector<8x8x32xf32>
      %105 = arith.mulf %101, %104 : vector<8x8x32xf32>
      %c0_78 = arith.constant 0 : index
      %c0_79 = arith.constant 0 : index
      %c0_80 = arith.constant 0 : index
      %c0_81 = arith.constant 0 : index
      %106 = vector.load %arg8[%c0_78, %c0_79, %c0_80, %c0_81] : memref<1x8x8x32xf32, #tpu.memory_space<vmem>>, vector<1x8x8x32xf32>
      %107 = vector.shape_cast %106 : vector<1x8x8x32xf32> to vector<8x8x32xf32>
      %108 = vector.shape_cast %105 : vector<8x8x32xf32> to vector<1x8x8x32xf32>
      tpu.vector_store %arg8[%c0_78, %c0_79, %c0_80, %c0_81], %108 {strides = array<i32>} : memref<1x8x8x32xf32, #tpu.memory_space<vmem>>, vector<1x8x8x32xf32>,
    } else {
    }
    return
  }
  func.func @transform_0(%arg0: i32, %arg1: i32) -> (i32, i32, i32, i32) {
    %c0_i32 = arith.constant 0 : i32
    %c0_i32_0 = arith.constant 0 : i32
    %c0_i32_1 = arith.constant 0 : i32
    %c0_i32_2 = arith.constant 0 : i32
    return %arg0, %c0_i32, %c0_i32_0, %c0_i32_1 : i32, i32, i32, i32
  }
  func.func @transform_1(%arg0: i32, %arg1: i32) -> (i32, i32, i32, i32) {
    %c0_i32 = arith.constant 0 : i32
    %c0_i32_0 = arith.constant 0 : i32
    %c0_i32_1 = arith.constant 0 : i32
    return %arg0, %c0_i32, %arg1, %c0_i32_0 : i32, i32, i32, i32
  }
  func.func @transform_2(%arg0: i32, %arg1: i32) -> (i32, i32, i32, i32) {
    %c0_i32 = arith.constant 0 : i32
    %c0_i32_0 = arith.constant 0 : i32
    %c0_i32_1 = arith.constant 0 : i32
    return %arg0, %c0_i32, %arg1, %c0_i32_0 : i32, i32, i32, i32
  }
  func.func @transform_3(%arg0: i32, %arg1: i32) -> (i32, i32, i32, i32) {
    %c0_i32 = arith.constant 0 : i32
    %c0_i32_0 = arith.constant 0 : i32
    %c0_i32_1 = arith.constant 0 : i32
    return %arg0, %c0_i32, %c0_i32_0, %arg1 : i32, i32, i32, i32
  }
  func.func @transform_4(%arg0: i32, %arg1: i32) -> (i32, i32, i32, i32) {
    %c0_i32 = arith.constant 0 : i32
    %c0_i32_0 = arith.constant 0 : i32
    %c0_i32_1 = arith.constant 0 : i32
    return %arg0, %c0_i32, %arg1, %c0_i32_0 : i32, i32, i32, i32
  }
  func.func @transform_5(%arg0: i32, %arg1: i32) -> (i32, i32, i32, i32) {
    %c0_i32 = arith.constant 0 : i32
    %c0_i32_0 = arith.constant 0 : i32
    %c0_i32_1 = arith.constant 0 : i32
    %c0_i32_2 = arith.constant 0 : i32
    return %arg0, %c0_i32, %c0_i32_0, %c0_i32_1 : i32, i32, i32, i32
  }
  func.func @transform_6(%arg0: i32, %arg1: i32) -> (i32, i32, i32, i32) {
    %c0_i32 = arith.constant 0 : i32
    %c0_i32_0 = arith.constant 0 : i32
    %c0_i32_1 = arith.constant 0 : i32
    %c0_i32_2 = arith.constant 0 : i32
    return %arg0, %c0_i32, %c0_i32_0, %c0_i32_1 : i32, i32, i32, i32
  }
}

module attributes {stable_mosaic.version = 11 : i64} {
  func.func @_post_kernel(%arg0: i32, %arg1: memref<16x512xbf16, #tpu.memory_space<vmem>>, %arg2: memref<16x32xf32, #tpu.memory_space<vmem>>, %arg3: memref<512x32xbf16, #tpu.memory_space<vmem>>, %arg4: memref<1x32xf32, #tpu.memory_space<vmem>>, %arg5: memref<1x32xf32, #tpu.memory_space<vmem>>, %arg6: memref<1x32xf32, #tpu.memory_space<vmem>>, %arg7: memref<32x32xbf16, #tpu.memory_space<vmem>>, %arg8: memref<1x32xf32, #tpu.memory_space<vmem>>, %arg9: memref<32x32xbf16, #tpu.memory_space<vmem>>, %arg10: memref<1x32xf32, #tpu.memory_space<vmem>>, %arg11: memref<32x32xbf16, #tpu.memory_space<vmem>>, %arg12: memref<1x32xf32, #tpu.memory_space<vmem>>, %arg13: memref<1x32xf32, #tpu.memory_space<vmem>>, %arg14: memref<1x32xf32, #tpu.memory_space<vmem>>, %arg15: memref<16x32xf32, #tpu.memory_space<vmem>>) attributes {dimension_semantics = [#tpu.dimension_semantics<parallel>], iteration_bounds = array<i64: 1>, scalar_prefetch = 0 : i64, scratch_operands = 0 : i64, tpu.core_type = #tpu.core_type<tc>, window_params = [{transform_indices = @transform_0, window_bounds = array<i64: 16, 512>}, {transform_indices = @transform_1, window_bounds = array<i64: 16, 32>}, {pipeline_mode = #tpu.pipeline_mode<synchronous>, transform_indices = @transform_2, window_bounds = array<i64: 512, 32>}, {pipeline_mode = #tpu.pipeline_mode<synchronous>, transform_indices = @transform_3, window_bounds = array<i64: 1, 32>}, {pipeline_mode = #tpu.pipeline_mode<synchronous>, transform_indices = @transform_4, window_bounds = array<i64: 1, 32>}, {pipeline_mode = #tpu.pipeline_mode<synchronous>, transform_indices = @transform_5, window_bounds = array<i64: 1, 32>}, {pipeline_mode = #tpu.pipeline_mode<synchronous>, transform_indices = @transform_6, window_bounds = array<i64: 32, 32>}, {pipeline_mode = #tpu.pipeline_mode<synchronous>, transform_indices = @transform_7, window_bounds = array<i64: 1, 32>}, {pipeline_mode = #tpu.pipeline_mode<synchronous>, transform_indices = @transform_8, window_bounds = array<i64: 32, 32>}, {pipeline_mode = #tpu.pipeline_mode<synchronous>, transform_indices = @transform_9, window_bounds = array<i64: 1, 32>}, {pipeline_mode = #tpu.pipeline_mode<synchronous>, transform_indices = @transform_10, window_bounds = array<i64: 32, 32>}, {pipeline_mode = #tpu.pipeline_mode<synchronous>, transform_indices = @transform_11, window_bounds = array<i64: 1, 32>}, {pipeline_mode = #tpu.pipeline_mode<synchronous>, transform_indices = @transform_12, window_bounds = array<i64: 1, 32>}, {pipeline_mode = #tpu.pipeline_mode<synchronous>, transform_indices = @transform_13, window_bounds = array<i64: 1, 32>}, {transform_indices = @transform_14, window_bounds = array<i64: 16, 32>}]} {
    %c0 = arith.constant 0 : index
    %c0_0 = arith.constant 0 : index
    %0 = vector.load %arg1[%c0, %c0_0] : memref<16x512xbf16, #tpu.memory_space<vmem>>, vector<16x512xbf16>
    %c0_1 = arith.constant 0 : index
    %c0_2 = arith.constant 0 : index
    %1 = vector.load %arg3[%c0_1, %c0_2] : memref<512x32xbf16, #tpu.memory_space<vmem>>, vector<512x32xbf16>
    %cst = arith.constant dense<0.000000e+00> : vector<16x32xf32>
    %2 = tpu.matmul %0, %1, %cst {dimension_numbers = #tpu.dot_dimension_numbers<[1], [0], [0], [1], [0, 0, 1, 1], [], []>} : vector<16x512xbf16>, vector<512x32xbf16>, vector<16x32xf32> -> vector<16x32xf32>
    %c0_3 = arith.constant 0 : index
    %c0_4 = arith.constant 0 : index
    %3 = vector.load %arg4[%c0_3, %c0_4] : memref<1x32xf32, #tpu.memory_space<vmem>>, vector<1x32xf32>
    %4 = vector.broadcast %3 : vector<1x32xf32> to vector<16x32xf32>
    %5 = arith.addf %2, %4 : vector<16x32xf32>
    %c0_5 = arith.constant 0 : index
    %c0_6 = arith.constant 0 : index
    %6 = vector.load %arg2[%c0_5, %c0_6] : memref<16x32xf32, #tpu.memory_space<vmem>>, vector<16x32xf32>
    %7 = arith.addf %5, %6 : vector<16x32xf32>
    %c0_7 = arith.constant 0 : index
    %c0_8 = arith.constant 0 : index
    %8 = vector.load %arg5[%c0_7, %c0_8] : memref<1x32xf32, #tpu.memory_space<vmem>>, vector<1x32xf32>
    %c0_9 = arith.constant 0 : index
    %c0_10 = arith.constant 0 : index
    %9 = vector.load %arg6[%c0_9, %c0_10] : memref<1x32xf32, #tpu.memory_space<vmem>>, vector<1x32xf32>
    %cst_11 = arith.constant dense<0.000000e+00> : vector<16xf32>
    %10 = vector.multi_reduction <add>, %7, %cst_11 [1] : vector<16x32xf32> to vector<16xf32>
    %11 = vector.shape_cast %10 : vector<16xf32> to vector<16x1xf32>
    %cst_12 = arith.constant 3.200000e+01 : f32
    %12 = vector.broadcast %cst_12 : f32 to vector<16x1xf32>
    %13 = arith.divf %11, %12 : vector<16x1xf32>
    %14 = vector.broadcast %13 : vector<16x1xf32> to vector<16x32xf32>
    %15 = arith.subf %7, %14 : vector<16x32xf32>
    %16 = arith.mulf %15, %15 : vector<16x32xf32>
    %cst_13 = arith.constant dense<0.000000e+00> : vector<16xf32>
    %17 = vector.multi_reduction <add>, %16, %cst_13 [1] : vector<16x32xf32> to vector<16xf32>
    %18 = vector.shape_cast %17 : vector<16xf32> to vector<16x1xf32>
    %cst_14 = arith.constant 3.200000e+01 : f32
    %19 = vector.broadcast %cst_14 : f32 to vector<16x1xf32>
    %20 = arith.divf %18, %19 : vector<16x1xf32>
    %cst_15 = arith.constant 9.99999974E-6 : f32
    %21 = vector.broadcast %cst_15 : f32 to vector<16x1xf32>
    %22 = arith.addf %20, %21 : vector<16x1xf32>
    %23 = math.rsqrt %22 : vector<16x1xf32>
    %24 = vector.broadcast %23 : vector<16x1xf32> to vector<16x32xf32>
    %25 = arith.mulf %15, %24 : vector<16x32xf32>
    %26 = vector.broadcast %8 : vector<1x32xf32> to vector<16x32xf32>
    %27 = arith.mulf %25, %26 : vector<16x32xf32>
    %28 = vector.broadcast %9 : vector<1x32xf32> to vector<16x32xf32>
    %29 = arith.addf %27, %28 : vector<16x32xf32>
    %30 = arith.truncf %29 : vector<16x32xf32> to vector<16x32xbf16>
    %c0_16 = arith.constant 0 : index
    %c0_17 = arith.constant 0 : index
    %31 = vector.load %arg7[%c0_16, %c0_17] : memref<32x32xbf16, #tpu.memory_space<vmem>>, vector<32x32xbf16>
    %cst_18 = arith.constant dense<0.000000e+00> : vector<16x32xf32>
    %32 = tpu.matmul %30, %31, %cst_18 {dimension_numbers = #tpu.dot_dimension_numbers<[1], [0], [0], [1], [0, 0, 1, 1], [], []>} : vector<16x32xbf16>, vector<32x32xbf16>, vector<16x32xf32> -> vector<16x32xf32>
    %c0_19 = arith.constant 0 : index
    %c0_20 = arith.constant 0 : index
    %33 = vector.load %arg8[%c0_19, %c0_20] : memref<1x32xf32, #tpu.memory_space<vmem>>, vector<1x32xf32>
    %34 = vector.broadcast %33 : vector<1x32xf32> to vector<16x32xf32>
    %35 = arith.addf %32, %34 : vector<16x32xf32>
    %cst_21 = arith.constant 0.000000e+00 : f32
    %36 = vector.broadcast %cst_21 : f32 to vector<16x32xf32>
    %37 = arith.maximumf %35, %36 : vector<16x32xf32>
    %38 = arith.truncf %37 : vector<16x32xf32> to vector<16x32xbf16>
    %c0_22 = arith.constant 0 : index
    %c0_23 = arith.constant 0 : index
    %39 = vector.load %arg9[%c0_22, %c0_23] : memref<32x32xbf16, #tpu.memory_space<vmem>>, vector<32x32xbf16>
    %cst_24 = arith.constant dense<0.000000e+00> : vector<16x32xf32>
    %40 = tpu.matmul %38, %39, %cst_24 {dimension_numbers = #tpu.dot_dimension_numbers<[1], [0], [0], [1], [0, 0, 1, 1], [], []>} : vector<16x32xbf16>, vector<32x32xbf16>, vector<16x32xf32> -> vector<16x32xf32>
    %c0_25 = arith.constant 0 : index
    %c0_26 = arith.constant 0 : index
    %41 = vector.load %arg10[%c0_25, %c0_26] : memref<1x32xf32, #tpu.memory_space<vmem>>, vector<1x32xf32>
    %42 = vector.broadcast %41 : vector<1x32xf32> to vector<16x32xf32>
    %43 = arith.addf %40, %42 : vector<16x32xf32>
    %cst_27 = arith.constant 0.000000e+00 : f32
    %44 = vector.broadcast %cst_27 : f32 to vector<16x32xf32>
    %45 = arith.maximumf %43, %44 : vector<16x32xf32>
    %46 = arith.truncf %45 : vector<16x32xf32> to vector<16x32xbf16>
    %c0_28 = arith.constant 0 : index
    %c0_29 = arith.constant 0 : index
    %47 = vector.load %arg11[%c0_28, %c0_29] : memref<32x32xbf16, #tpu.memory_space<vmem>>, vector<32x32xbf16>
    %cst_30 = arith.constant dense<0.000000e+00> : vector<16x32xf32>
    %48 = tpu.matmul %46, %47, %cst_30 {dimension_numbers = #tpu.dot_dimension_numbers<[1], [0], [0], [1], [0, 0, 1, 1], [], []>} : vector<16x32xbf16>, vector<32x32xbf16>, vector<16x32xf32> -> vector<16x32xf32>
    %c0_31 = arith.constant 0 : index
    %c0_32 = arith.constant 0 : index
    %49 = vector.load %arg12[%c0_31, %c0_32] : memref<1x32xf32, #tpu.memory_space<vmem>>, vector<1x32xf32>
    %50 = vector.broadcast %49 : vector<1x32xf32> to vector<16x32xf32>
    %51 = arith.addf %48, %50 : vector<16x32xf32>
    %52 = arith.addf %51, %29 : vector<16x32xf32>
    %c0_33 = arith.constant 0 : index
    %c0_34 = arith.constant 0 : index
    %53 = vector.load %arg13[%c0_33, %c0_34] : memref<1x32xf32, #tpu.memory_space<vmem>>, vector<1x32xf32>
    %c0_35 = arith.constant 0 : index
    %c0_36 = arith.constant 0 : index
    %54 = vector.load %arg14[%c0_35, %c0_36] : memref<1x32xf32, #tpu.memory_space<vmem>>, vector<1x32xf32>
    %cst_37 = arith.constant dense<0.000000e+00> : vector<16xf32>
    %55 = vector.multi_reduction <add>, %52, %cst_37 [1] : vector<16x32xf32> to vector<16xf32>
    %56 = vector.shape_cast %55 : vector<16xf32> to vector<16x1xf32>
    %cst_38 = arith.constant 3.200000e+01 : f32
    %57 = vector.broadcast %cst_38 : f32 to vector<16x1xf32>
    %58 = arith.divf %56, %57 : vector<16x1xf32>
    %59 = vector.broadcast %58 : vector<16x1xf32> to vector<16x32xf32>
    %60 = arith.subf %52, %59 : vector<16x32xf32>
    %61 = arith.mulf %60, %60 : vector<16x32xf32>
    %cst_39 = arith.constant dense<0.000000e+00> : vector<16xf32>
    %62 = vector.multi_reduction <add>, %61, %cst_39 [1] : vector<16x32xf32> to vector<16xf32>
    %63 = vector.shape_cast %62 : vector<16xf32> to vector<16x1xf32>
    %cst_40 = arith.constant 3.200000e+01 : f32
    %64 = vector.broadcast %cst_40 : f32 to vector<16x1xf32>
    %65 = arith.divf %63, %64 : vector<16x1xf32>
    %cst_41 = arith.constant 9.99999974E-6 : f32
    %66 = vector.broadcast %cst_41 : f32 to vector<16x1xf32>
    %67 = arith.addf %65, %66 : vector<16x1xf32>
    %68 = math.rsqrt %67 : vector<16x1xf32>
    %69 = vector.broadcast %68 : vector<16x1xf32> to vector<16x32xf32>
    %70 = arith.mulf %60, %69 : vector<16x32xf32>
    %71 = vector.broadcast %53 : vector<1x32xf32> to vector<16x32xf32>
    %72 = arith.mulf %70, %71 : vector<16x32xf32>
    %73 = vector.broadcast %54 : vector<1x32xf32> to vector<16x32xf32>
    %74 = arith.addf %72, %73 : vector<16x32xf32>
    %c0_42 = arith.constant 0 : index
    %c0_43 = arith.constant 0 : index
    %75 = vector.load %arg15[%c0_42, %c0_43] : memref<16x32xf32, #tpu.memory_space<vmem>>, vector<16x32xf32>
    tpu.vector_store %arg15[%c0_42, %c0_43], %74 {strides = array<i32>} : memref<16x32xf32, #tpu.memory_space<vmem>>, vector<16x32xf32>,
    return
  }
  func.func @transform_0(%arg0: i32) -> (i32, i32) {
    %c0_i32 = arith.constant 0 : i32
    %c0_i32_0 = arith.constant 0 : i32
    return %arg0, %c0_i32 : i32, i32
  }
  func.func @transform_1(%arg0: i32) -> (i32, i32) {
    %c0_i32 = arith.constant 0 : i32
    %c0_i32_0 = arith.constant 0 : i32
    return %arg0, %c0_i32 : i32, i32
  }
  func.func @transform_2(%arg0: i32) -> (i32, i32) {
    %c0_i32 = arith.constant 0 : i32
    %c0_i32_0 = arith.constant 0 : i32
    %c0_i32_1 = arith.constant 0 : i32
    return %c0_i32, %c0_i32_0 : i32, i32
  }
  func.func @transform_3(%arg0: i32) -> (i32, i32) {
    %c0_i32 = arith.constant 0 : i32
    %c0_i32_0 = arith.constant 0 : i32
    %c0_i32_1 = arith.constant 0 : i32
    return %c0_i32, %c0_i32_0 : i32, i32
  }
  func.func @transform_4(%arg0: i32) -> (i32, i32) {
    %c0_i32 = arith.constant 0 : i32
    %c0_i32_0 = arith.constant 0 : i32
    %c0_i32_1 = arith.constant 0 : i32
    return %c0_i32, %c0_i32_0 : i32, i32
  }
  func.func @transform_5(%arg0: i32) -> (i32, i32) {
    %c0_i32 = arith.constant 0 : i32
    %c0_i32_0 = arith.constant 0 : i32
    %c0_i32_1 = arith.constant 0 : i32
    return %c0_i32, %c0_i32_0 : i32, i32
  }
  func.func @transform_6(%arg0: i32) -> (i32, i32) {
    %c0_i32 = arith.constant 0 : i32
    %c0_i32_0 = arith.constant 0 : i32
    %c0_i32_1 = arith.constant 0 : i32
    return %c0_i32, %c0_i32_0 : i32, i32
  }
  func.func @transform_7(%arg0: i32) -> (i32, i32) {
    %c0_i32 = arith.constant 0 : i32
    %c0_i32_0 = arith.constant 0 : i32
    %c0_i32_1 = arith.constant 0 : i32
    return %c0_i32, %c0_i32_0 : i32, i32
  }
  func.func @transform_8(%arg0: i32) -> (i32, i32) {
    %c0_i32 = arith.constant 0 : i32
    %c0_i32_0 = arith.constant 0 : i32
    %c0_i32_1 = arith.constant 0 : i32
    return %c0_i32, %c0_i32_0 : i32, i32
  }
  func.func @transform_9(%arg0: i32) -> (i32, i32) {
    %c0_i32 = arith.constant 0 : i32
    %c0_i32_0 = arith.constant 0 : i32
    %c0_i32_1 = arith.constant 0 : i32
    return %c0_i32, %c0_i32_0 : i32, i32
  }
  func.func @transform_10(%arg0: i32) -> (i32, i32) {
    %c0_i32 = arith.constant 0 : i32
    %c0_i32_0 = arith.constant 0 : i32
    %c0_i32_1 = arith.constant 0 : i32
    return %c0_i32, %c0_i32_0 : i32, i32
  }
  func.func @transform_11(%arg0: i32) -> (i32, i32) {
    %c0_i32 = arith.constant 0 : i32
    %c0_i32_0 = arith.constant 0 : i32
    %c0_i32_1 = arith.constant 0 : i32
    return %c0_i32, %c0_i32_0 : i32, i32
  }
  func.func @transform_12(%arg0: i32) -> (i32, i32) {
    %c0_i32 = arith.constant 0 : i32
    %c0_i32_0 = arith.constant 0 : i32
    %c0_i32_1 = arith.constant 0 : i32
    return %c0_i32, %c0_i32_0 : i32, i32
  }
  func.func @transform_13(%arg0: i32) -> (i32, i32) {
    %c0_i32 = arith.constant 0 : i32
    %c0_i32_0 = arith.constant 0 : i32
    %c0_i32_1 = arith.constant 0 : i32
    return %c0_i32, %c0_i32_0 : i32, i32
  }
  func.func @transform_14(%arg0: i32) -> (i32, i32) {
    %c0_i32 = arith.constant 0 : i32
    %c0_i32_0 = arith.constant 0 : i32
    return %arg0, %c0_i32 : i32, i32
  }
}

</mosaic_0001>

<llo_original>
// kernel: ipa_block_forward.4
$region0: #{ipa_block_forward.4}
  #allocation0 [shape = 'u32[]', space=smem, size = 0x4, offset = 0x4, fixed_abs, tag = 'smem constant byte address 0x4 - core index']
  #allocation1 [shape = 'u32[144,128]{1,0:T(1,128)}', space=vmem, size = 0x12000, scoped, tag = 'internal scratch']
  %s0 = inlined_call_operand.vmem [shape: bf16[16,32], index: 0, kind: input, shape index: {}]
  %s1 = inlined_call_operand.vmem [shape: bf16[32,672], index: 1, kind: input, shape index: {}]
  %s2 = inlined_call_operand.vmem [shape: f32[1,672], index: 2, kind: input, shape index: {}]
  %s3 = inlined_call_operand.vmem [shape: f32[16,672], index: 3, kind: output, shape index: {}]
  %s4 = sld [smem:[#allocation0]]
  $region22: #{ipa_block_forward.4} parent=0
    _
  %s6 = ssub.s32 1, %s4
  %s7 = scalar_select 0, %s6, %s4
  // Predicated region
  $region2: #{ipa_block_forward.4} parent=0 // pred_check
    _
  $region3: #{ipa_block_forward.4} parent=0 // pred_check_branch
    %9 = sbr.rel (0) target = $region5
  $region4: #{ipa_block_forward.4} parent=0 // pred_region
    _
  $region5: #{ipa_block_forward.4} parent=0 // pred_fallthru
    _
  // Predicated region
  $region6: #{ipa_block_forward.4} parent=0 // pred_check
    _
  $region7: #{ipa_block_forward.4} parent=0 // pred_check_branch
    %11 = sbr.rel (0) target = $region9
  $region8: #{ipa_block_forward.4} parent=0 // pred_region
    _
  $region9: #{ipa_block_forward.4} parent=0 // pred_fallthru
    _
  // Predicated region
  $region10: #{ipa_block_forward.4} parent=0 // pred_check
    _
  $region11: #{ipa_block_forward.4} parent=0 // pred_check_branch
    %13 = sbr.rel (0) target = $region13
  $region12: #{ipa_block_forward.4} parent=0 // pred_region
    _
  $region13: #{ipa_block_forward.4} parent=0 // pred_fallthru
    _
  %v15 = vld [vmem:[%s0] sm:$0xf]
  %v16 = vld [vmem:[%s0 + $0x4] sm:$0xf]
  %v17 = vld [vmem:[%s1] sm:$0xff]
  %v18 = vld [vmem:[%s1 + $0x8] sm:$0xff]
  %v19 = vld [vmem:[%s1 + $0x10] sm:$0xff]
  %v20 = vld [vmem:[%s1 + $0x18] sm:$0xff]
  %v21 = vld [vmem:[%s1 + $0x20] sm:$0xff]
  %v22 = vld [vmem:[%s1 + $0x28] sm:$0xff]
  %v23 = vld [vmem:[%s1 + $0x30] sm:$0xff]
  %v24 = vld [vmem:[%s1 + $0x38] sm:$0xff]
  %v25 = vld [vmem:[%s1 + $0x40] sm:$0xff]
  %v26 = vld [vmem:[%s1 + $0x48] sm:$0xff]
  %v27 = vld [vmem:[%s1 + $0x50] sm:$0xff]
  %v28 = vld [vmem:[%s1 + $0x58] sm:$0xff]
  %v29 = vld [vmem:[%s2] sm:$0x3f]
  %v31 = vlaneseq
  %v32 = vshrl.u32 %v31, 7
  %v33 = vsub.s32 0, %v32
  %v34 = vrot.slane %v29, %v33
  %v35 = vlaneseq
  %v36 = vshrl.u32 %v35, 7
  %v37 = vsub.s32 1, %v36
  %v38 = vrot.slane %v29, %v37
  %v39 = vlaneseq
  %v40 = vshrl.u32 %v39, 7
  %v41 = vsub.s32 2, %v40
  %v42 = vrot.slane %v29, %v41
  %v43 = vlaneseq
  %v44 = vshrl.u32 %v43, 7
  %v45 = vsub.s32 3, %v44
  %v46 = vrot.slane %v29, %v45
  %v47 = vlaneseq
  %v48 = vshrl.u32 %v47, 7
  %v49 = vsub.s32 4, %v48
  %v50 = vrot.slane %v29, %v49
  %v51 = vlaneseq
  %v52 = vshrl.u32 %v51, 7
  %v53 = vsub.s32 5, %v52
  %v54 = vrot.slane %v29, %v53
  %v63 = vunpack.c.l.b16 %v15
  %v64 = vunpack.c.l.b16 %v16
  %v65 = vpack.c.b16 %v64, %v63
  %v78 = vunpack.c.l.b16 %v17
  %v79 = vunpack.c.h.b16 %v17
  %v80 = vunpack.c.l.b16 %v18
  %v81 = vunpack.c.h.b16 %v18
  %v82 = vunpack.c.l.b16 %v19
  %v83 = vunpack.c.h.b16 %v19
  %v84 = vunpack.c.l.b16 %v20
  %v85 = vunpack.c.h.b16 %v20
  %v86 = vunpack.c.l.b16 %v21
  %v87 = vunpack.c.h.b16 %v21
  %v88 = vunpack.c.l.b16 %v22
  %v89 = vunpack.c.h.b16 %v22
  %v90 = vunpack.c.l.b16 %v23
  %v91 = vunpack.c.h.b16 %v23
  %v92 = vunpack.c.l.b16 %v24
  %v93 = vunpack.c.h.b16 %v24
  %v94 = vunpack.c.l.b16 %v25
  %v95 = vunpack.c.h.b16 %v25
  %v96 = vunpack.c.l.b16 %v26
  %v97 = vunpack.c.h.b16 %v26
  %v98 = vunpack.c.l.b16 %v27
  %v99 = vunpack.c.h.b16 %v27
  %v100 = vunpack.c.l.b16 %v28
  %v101 = vunpack.c.h.b16 %v28
  %v102 = vpack.c.b16 %v84, %v78
  %v103 = vpack.c.b16 %v85, %v79
  %v104 = vpack.c.b16 %v86, %v80
  %v105 = vpack.c.b16 %v87, %v81
  %v106 = vpack.c.b16 %v88, %v82
  %v107 = vpack.c.b16 %v89, %v83
  %v108 = vpack.c.b16 %v96, %v90
  %v109 = vpack.c.b16 %v97, %v91
  %v110 = vpack.c.b16 %v98, %v92
  %v111 = vpack.c.b16 %v99, %v93
  %v112 = vpack.c.b16 %v100, %v94
  %v113 = vpack.c.b16 %v101, %v95
  %vm126 = vcmask 261120
  %v128 = vsel %vm126, %v65, 0
  %130 = vmatprep.subr.bf16.mxu0 %v103
  %131 = vmatpush1.bf16.msra.mxu0 %v102
  %132 = vmatprep.subr.bf16.mxu0 %v109
  %133 = vmatpush1.bf16.msra.mxu0 %v108
  %134 = vmatprep.subr.bf16.mxu0 0
  %135 = vmatpush1.bf16.msra.mxu0 0
  %136 = vmatprep.subr.bf16.mxu0 0
  %137 = vmatpush1.bf16.msra.mxu0 0
  %138 = vmatprep.subr.bf16.mxu0 0
  %139 = vmatpush1.bf16.msra.mxu0 0
  %140 = vmatprep.subr.bf16.mxu0 0
  %141 = vmatpush1.bf16.msra.mxu0 0
  %142 = vmatprep.subr.bf16.mxu0 0
  %143 = vmatpush1.bf16.msra.mxu0 0
  %144 = vmatprep.subr.bf16.mxu0 0
  %145 = vmatpush1.bf16.msra.mxu0 0
  %146 = vmatprep.subr.bf16.mxu0 0
  %147 = vmatpush1.bf16.msra.mxu0 0
  %148 = vmatprep.subr.bf16.mxu0 0
  %149 = vmatpush1.bf16.msra.mxu0 0
  %150 = vmatprep.subr.bf16.mxu0 0
  %151 = vmatpush1.bf16.msra.mxu0 0
  %152 = vmatprep.subr.bf16.mxu0 0
  %153 = vmatpush1.bf16.msra.mxu0 0
  %154 = vmatprep.subr.bf16.mxu0 0
  %155 = vmatpush1.bf16.msra.mxu0 0
  %156 = vmatprep.subr.bf16.mxu0 0
  %157 = vmatpush1.bf16.msra.mxu0 0
  %158 = vmatprep.subr.bf16.mxu0 0
  %159 = vmatpush1.bf16.msra.mxu0 0
  %160 = vmatprep.subr.bf16.mxu0 0
  %161 = vmatpush1.bf16.msra.mxu0 0
  %162 = vmatprep.mubr.bf16.mxu0 0
  %163 = vmatmul.mubr.bf16.gmra.mrb[0].mxu0 %v128
  %v164 = vpop.f32.mrb[0].mxu0
  %v165 = vadd.f32 %v34, %v164
  %v166 = vpop.f32.mrb[0].mxu0
  %v167 = vadd.f32 %v38, %v166
  %v168 = vpop.f32.mrb[0].mxu0
  %v169 = vadd.f32 %v34, %v168
  %v170 = vpop.f32.mrb[0].mxu0
  %v171 = vadd.f32 %v38, %v170
  %172 = vdwg.mxu0
  %173 = vmatprep.subr.bf16.mxu0 %v105
  %174 = vmatpush1.bf16.msra.mxu0 %v104
  %175 = vmatprep.subr.bf16.mxu0 %v111
  %176 = vmatpush1.bf16.msra.mxu0 %v110
  %177 = vmatprep.subr.bf16.mxu0 0
  %178 = vmatpush1.bf16.msra.mxu0 0
  %179 = vmatprep.subr.bf16.mxu0 0
  %180 = vmatpush1.bf16.msra.mxu0 0
  %181 = vmatprep.subr.bf16.mxu0 0
  %182 = vmatpush1.bf16.msra.mxu0 0
  %183 = vmatprep.subr.bf16.mxu0 0
  %184 = vmatpush1.bf16.msra.mxu0 0
  %185 = vmatprep.subr.bf16.mxu0 0
  %186 = vmatpush1.bf16.msra.mxu0 0
  %187 = vmatprep.subr.bf16.mxu0 0
  %188 = vmatpush1.bf16.msra.mxu0 0
  %189 = vmatprep.subr.bf16.mxu0 0
  %190 = vmatpush1.bf16.msra.mxu0 0
  %191 = vmatprep.subr.bf16.mxu0 0
  %192 = vmatpush1.bf16.msra.mxu0 0
  %193 = vmatprep.subr.bf16.mxu0 0
  %194 = vmatpush1.bf16.msra.mxu0 0
  %195 = vmatprep.subr.bf16.mxu0 0
  %196 = vmatpush1.bf16.msra.mxu0 0
  %197 = vmatprep.subr.bf16.mxu0 0
  %198 = vmatpush1.bf16.msra.mxu0 0
  %199 = vmatprep.subr.bf16.mxu0 0
  %200 = vmatpush1.bf16.msra.mxu0 0
  %201 = vmatprep.subr.bf16.mxu0 0
  %202 = vmatpush1.bf16.msra.mxu0 0
  %203 = vmatprep.subr.bf16.mxu0 0
  %204 = vmatpush1.bf16.msra.mxu0 0
  %205 = vmatprep.mubr.bf16.mxu0 0
  %206 = vmatmul.mubr.bf16.gmra.mrb[0].mxu0 %v128
  %v207 = vpop.f32.mrb[0].mxu0
  %v208 = vadd.f32 %v42, %v207
  %v209 = vpop.f32.mrb[0].mxu0
  %v210 = vadd.f32 %v46, %v209
  %v211 = vpop.f32.mrb[0].mxu0
  %v212 = vadd.f32 %v42, %v211
  %v213 = vpop.f32.mrb[0].mxu0
  %v214 = vadd.f32 %v46, %v213
  %215 = vdwg.mxu0
  %216 = vmatprep.subr.bf16.mxu0 %v107
  %217 = vmatpush1.bf16.msra.mxu0 %v106
  %218 = vmatprep.subr.bf16.mxu0 %v113
  %219 = vmatpush1.bf16.msra.mxu0 %v112
  %220 = vmatprep.subr.bf16.mxu0 0
  %221 = vmatpush1.bf16.msra.mxu0 0
  %222 = vmatprep.subr.bf16.mxu0 0
  %223 = vmatpush1.bf16.msra.mxu0 0
  %224 = vmatprep.subr.bf16.mxu0 0
  %225 = vmatpush1.bf16.msra.mxu0 0
  %226 = vmatprep.subr.bf16.mxu0 0
  %227 = vmatpush1.bf16.msra.mxu0 0
  %228 = vmatprep.subr.bf16.mxu0 0
  %229 = vmatpush1.bf16.msra.mxu0 0
  %230 = vmatprep.subr.bf16.mxu0 0
  %231 = vmatpush1.bf16.msra.mxu0 0
  %232 = vmatprep.subr.bf16.mxu0 0
  %233 = vmatpush1.bf16.msra.mxu0 0
  %234 = vmatprep.subr.bf16.mxu0 0
  %235 = vmatpush1.bf16.msra.mxu0 0
  %236 = vmatprep.subr.bf16.mxu0 0
  %237 = vmatpush1.bf16.msra.mxu0 0
  %238 = vmatprep.subr.bf16.mxu0 0
  %239 = vmatpush1.bf16.msra.mxu0 0
  %240 = vmatprep.subr.bf16.mxu0 0
  %241 = vmatpush1.bf16.msra.mxu0 0
  %242 = vmatprep.subr.bf16.mxu0 0
  %243 = vmatpush1.bf16.msra.mxu0 0
  %244 = vmatprep.subr.bf16.mxu0 0
  %245 = vmatpush1.bf16.msra.mxu0 0
  %246 = vmatprep.subr.bf16.mxu0 0
  %247 = vmatpush1.bf16.msra.mxu0 0
  %248 = vmatprep.mubr.bf16.mxu0 0
  %249 = vmatmul.mubr.bf16.gmra.mrb[0].mxu0 %v128
  %v250 = vpop.f32.mrb[0].mxu0
  %v251 = vadd.f32 %v50, %v250
  %v252 = vpop.f32.mrb[0].mxu0
  %v253 = vadd.f32 %v54, %v252
  %v254 = vpop.f32.mrb[0].mxu0
  %v255 = vadd.f32 %v50, %v254
  %v256 = vpop.f32.mrb[0].mxu0
  %v257 = vadd.f32 %v54, %v256
  %258 = vdwg.mxu0
  %259 = vst [vmem:[%s3] sm:$0xff] %v165
  %260 = vst [vmem:[%s3 + $0x8] sm:$0xff] %v167
  %261 = vst [vmem:[%s3 + $0x10] sm:$0xff] %v208
  %262 = vst [vmem:[%s3 + $0x18] sm:$0xff] %v210
  %263 = vst [vmem:[%s3 + $0x20] sm:$0xff] %v251
  %264 = vst.msk [vmem:[%s3 + $0x28] sm:$0xff] %vm126, %v253
  %265 = vst [vmem:[%s3 + $0x30] sm:$0xff] %v169
  %266 = vst [vmem:[%s3 + $0x38] sm:$0xff] %v171
  %267 = vst [vmem:[%s3 + $0x40] sm:$0xff] %v212
  %268 = vst [vmem:[%s3 + $0x48] sm:$0xff] %v214
  %269 = vst [vmem:[%s3 + $0x50] sm:$0xff] %v255
  %270 = vst.msk [vmem:[%s3 + $0x58] sm:$0xff] %vm126, %v257
  // Predicated region
  $region14: #{ipa_block_forward.4} parent=0 // pred_check
    _
  $region15: #{ipa_block_forward.4} parent=0 // pred_check_branch
    %272 = sbr.rel (0) target = $region17
  $region16: #{ipa_block_forward.4} parent=0 // pred_region
    _
  $region17: #{ipa_block_forward.4} parent=0 // pred_fallthru
    _
  // Predicated region
  $region18: #{ipa_block_forward.4} parent=0 // pred_check
    _
  $region19: #{ipa_block_forward.4} parent=0 // pred_check_branch
    %274 = sbr.rel (0) target = $region21
  $region20: #{ipa_block_forward.4} parent=0 // pred_region
    _
  $region21: #{ipa_block_forward.4} parent=0 // pred_fallthru
    _

// kernel: ipa_block_forward.5
$region0: #{ipa_block_forward.5}
  #allocation0 [shape = 'u32[]', space=smem, size = 0x4, offset = 0x4, fixed_abs, tag = 'smem constant byte address 0x4 - core index']
  #allocation1 [shape = 'u32[144,128]{1,0:T(1,128)}', space=vmem, size = 0x12000, scoped, tag = 'internal scratch']
  %s0 = inlined_call_operand.vmem [shape: bf16[128,32], index: 0, kind: input, shape index: {}]
  %s1 = inlined_call_operand.vmem [shape: bf16[32,8], index: 1, kind: input, shape index: {}]
  %s2 = inlined_call_operand.vmem [shape: f32[1,8], index: 2, kind: input, shape index: {}]
  %s3 = inlined_call_operand.vmem [shape: bf16[128,8], index: 3, kind: output, shape index: {}]
  %s4 = sld [smem:[#allocation0]]
  $region22: #{ipa_block_forward.5} parent=0
    _
  %s6 = ssub.s32 1, %s4
  %s7 = scalar_select 0, %s6, %s4
  // Predicated region
  $region2: #{ipa_block_forward.5} parent=0 // pred_check
    _
  $region3: #{ipa_block_forward.5} parent=0 // pred_check_branch
    %9 = sbr.rel (0) target = $region5
  $region4: #{ipa_block_forward.5} parent=0 // pred_region
    _
  $region5: #{ipa_block_forward.5} parent=0 // pred_fallthru
    _
  // Predicated region
  $region6: #{ipa_block_forward.5} parent=0 // pred_check
    _
  $region7: #{ipa_block_forward.5} parent=0 // pred_check_branch
    %11 = sbr.rel (0) target = $region9
  $region8: #{ipa_block_forward.5} parent=0 // pred_region
    _
  $region9: #{ipa_block_forward.5} parent=0 // pred_fallthru
    _
  // Predicated region
  $region10: #{ipa_block_forward.5} parent=0 // pred_check
    _
  $region11: #{ipa_block_forward.5} parent=0 // pred_check_branch
    %13 = sbr.rel (0) target = $region13
  $region12: #{ipa_block_forward.5} parent=0 // pred_region
    _
  $region13: #{ipa_block_forward.5} parent=0 // pred_fallthru
    _
  %v15 = vld [vmem:[%s0] sm:$0xf]
  %v16 = vld [vmem:[%s0 + $0x4] sm:$0xf]
  %v17 = vld [vmem:[%s0 + $0x8] sm:$0xf]
  %v18 = vld [vmem:[%s0 + $0xc] sm:$0xf]
  %v19 = vld [vmem:[%s0 + $0x10] sm:$0xf]
  %v20 = vld [vmem:[%s0 + $0x14] sm:$0xf]
  %v21 = vld [vmem:[%s0 + $0x18] sm:$0xf]
  %v22 = vld [vmem:[%s0 + $0x1c] sm:$0xf]
  %v23 = vld [vmem:[%s0 + $0x20] sm:$0xf]
  %v24 = vld [vmem:[%s0 + $0x24] sm:$0xf]
  %v25 = vld [vmem:[%s0 + $0x28] sm:$0xf]
  %v26 = vld [vmem:[%s0 + $0x2c] sm:$0xf]
  %v27 = vld [vmem:[%s0 + $0x30] sm:$0xf]
  %v28 = vld [vmem:[%s0 + $0x34] sm:$0xf]
  %v29 = vld [vmem:[%s0 + $0x38] sm:$0xf]
  %v30 = vld [vmem:[%s0 + $0x3c] sm:$0xf]
  %v31 = vld [vmem:[%s1] sm:$0xf]
  %v32 = vld [vmem:[%s1 + $0x4] sm:$0xf]
  %v33 = vld [vmem:[%s1 + $0x8] sm:$0xf]
  %v34 = vld [vmem:[%s1 + $0xc] sm:$0xf]
  %v35 = vld [vmem:[%s2] sm:$0x1]
  %v37 = vlaneseq
  %v38 = vshrl.u32 %v37, 7
  %v39 = vsub.s32 0, %v38
  %v40 = vrot.slane %v35, %v39
  %v58 = vunpack.c.l.b16 %v15
  %v59 = vunpack.c.l.b16 %v16
  %v60 = vunpack.c.l.b16 %v17
  %v61 = vunpack.c.l.b16 %v18
  %v62 = vunpack.c.l.b16 %v19
  %v63 = vunpack.c.l.b16 %v20
  %v64 = vunpack.c.l.b16 %v21
  %v65 = vunpack.c.l.b16 %v22
  %v66 = vunpack.c.l.b16 %v23
  %v67 = vunpack.c.l.b16 %v24
  %v68 = vunpack.c.l.b16 %v25
  %v69 = vunpack.c.l.b16 %v26
  %v70 = vunpack.c.l.b16 %v27
  %v71 = vunpack.c.l.b16 %v28
  %v72 = vunpack.c.l.b16 %v29
  %v73 = vunpack.c.l.b16 %v30
  %v74 = vpack.c.b16 %v59, %v58
  %v75 = vpack.c.b16 %v61, %v60
  %v76 = vpack.c.b16 %v63, %v62
  %v77 = vpack.c.b16 %v65, %v64
  %v78 = vpack.c.b16 %v67, %v66
  %v79 = vpack.c.b16 %v69, %v68
  %v80 = vpack.c.b16 %v71, %v70
  %v81 = vpack.c.b16 %v73, %v72
  %v86 = vunpack.c.l.b16 %v31
  %v87 = vunpack.c.l.b16 %v32
  %v88 = vunpack.c.l.b16 %v33
  %v89 = vunpack.c.l.b16 %v34
  %v90 = vpack.c.b16 %v87, %v86
  %v91 = vpack.c.b16 %v89, %v88
  %vm94 = vcmask 261120
  %v96 = vsel %vm94, %v74, 0
  %v99 = vsel %vm94, %v75, 0
  %v102 = vsel %vm94, %v76, 0
  %v105 = vsel %vm94, %v77, 0
  %v108 = vsel %vm94, %v78, 0
  %v111 = vsel %vm94, %v79, 0
  %v114 = vsel %vm94, %v80, 0
  %v117 = vsel %vm94, %v81, 0
  %119 = vmatprep.subr.bf16.mxu0 0
  %120 = vmatpush1.bf16.msra.mxu0 %v90
  %121 = vmatprep.subr.bf16.mxu0 0
  %122 = vmatpush1.bf16.msra.mxu0 %v91
  %123 = vmatprep.subr.bf16.mxu0 0
  %124 = vmatpush1.bf16.msra.mxu0 0
  %125 = vmatprep.subr.bf16.mxu0 0
  %126 = vmatpush1.bf16.msra.mxu0 0
  %127 = vmatprep.subr.bf16.mxu0 0
  %128 = vmatpush1.bf16.msra.mxu0 0
  %129 = vmatprep.subr.bf16.mxu0 0
  %130 = vmatpush1.bf16.msra.mxu0 0
  %131 = vmatprep.subr.bf16.mxu0 0
  %132 = vmatpush1.bf16.msra.mxu0 0
  %133 = vmatprep.subr.bf16.mxu0 0
  %134 = vmatpush1.bf16.msra.mxu0 0
  %135 = vmatprep.subr.bf16.mxu0 0
  %136 = vmatpush1.bf16.msra.mxu0 0
  %137 = vmatprep.subr.bf16.mxu0 0
  %138 = vmatpush1.bf16.msra.mxu0 0
  %139 = vmatprep.subr.bf16.mxu0 0
  %140 = vmatpush1.bf16.msra.mxu0 0
  %141 = vmatprep.subr.bf16.mxu0 0
  %142 = vmatpush1.bf16.msra.mxu0 0
  %143 = vmatprep.subr.bf16.mxu0 0
  %144 = vmatpush1.bf16.msra.mxu0 0
  %145 = vmatprep.subr.bf16.mxu0 0
  %146 = vmatpush1.bf16.msra.mxu0 0
  %147 = vmatprep.subr.bf16.mxu0 0
  %148 = vmatpush1.bf16.msra.mxu0 0
  %149 = vmatprep.subr.bf16.mxu0 0
  %150 = vmatpush1.bf16.msra.mxu0 0
  %151 = vmatprep.mubr.bf16.mxu0 0
  %152 = vmatmul.mubr.bf16.gmra.mrb[0].mxu0 %v96
  %v153 = vpop.f32.mrb[0].mxu0
  %v154 = vadd.f32 %v40, %v153
  %v155 = vpop.f32.mrb[0].mxu0
  %v156 = vpop.f32.mrb[0].mxu0
  %v157 = vadd.f32 %v40, %v156
  %v158 = vpop.f32.mrb[0].mxu0
  %159 = vmatprep.mubr.bf16.mxu0 0
  %160 = vmatmul.mubr.bf16.gmra.mrb[0].mxu0 %v99
  %v161 = vpop.f32.mrb[0].mxu0
  %v162 = vadd.f32 %v40, %v161
  %v163 = vpop.f32.mrb[0].mxu0
  %v164 = vpop.f32.mrb[0].mxu0
  %v165 = vadd.f32 %v40, %v164
  %v166 = vpop.f32.mrb[0].mxu0
  %167 = vmatprep.mubr.bf16.mxu0 0
  %168 = vmatmul.mubr.bf16.gmra.mrb[0].mxu0 %v102
  %v169 = vpop.f32.mrb[0].mxu0
  %v170 = vadd.f32 %v40, %v169
  %v171 = vpop.f32.mrb[0].mxu0
  %v172 = vpop.f32.mrb[0].mxu0
  %v173 = vadd.f32 %v40, %v172
  %v174 = vpop.f32.mrb[0].mxu0
  %175 = vmatprep.mubr.bf16.mxu0 0
  %176 = vmatmul.mubr.bf16.gmra.mrb[0].mxu0 %v105
  %v177 = vpop.f32.mrb[0].mxu0
  %v178 = vadd.f32 %v40, %v177
  %v179 = vpop.f32.mrb[0].mxu0
  %v180 = vpop.f32.mrb[0].mxu0
  %v181 = vadd.f32 %v40, %v180
  %v182 = vpop.f32.mrb[0].mxu0
  %183 = vmatprep.mubr.bf16.mxu0 0
  %184 = vmatmul.mubr.bf16.gmra.mrb[0].mxu0 %v108
  %v185 = vpop.f32.mrb[0].mxu0
  %v186 = vadd.f32 %v40, %v185
  %v187 = vpop.f32.mrb[0].mxu0
  %v188 = vpop.f32.mrb[0].mxu0
  %v189 = vadd.f32 %v40, %v188
  %v190 = vpop.f32.mrb[0].mxu0
  %191 = vmatprep.mubr.bf16.mxu0 0
  %192 = vmatmul.mubr.bf16.gmra.mrb[0].mxu0 %v111
  %v193 = vpop.f32.mrb[0].mxu0
  %v194 = vadd.f32 %v40, %v193
  %v195 = vpop.f32.mrb[0].mxu0
  %v196 = vpop.f32.mrb[0].mxu0
  %v197 = vadd.f32 %v40, %v196
  %v198 = vpop.f32.mrb[0].mxu0
  %199 = vmatprep.mubr.bf16.mxu0 0
  %200 = vmatmul.mubr.bf16.gmra.mrb[0].mxu0 %v114
  %v201 = vpop.f32.mrb[0].mxu0
  %v202 = vadd.f32 %v40, %v201
  %v203 = vpop.f32.mrb[0].mxu0
  %v204 = vpop.f32.mrb[0].mxu0
  %v205 = vadd.f32 %v40, %v204
  %v206 = vpop.f32.mrb[0].mxu0
  %207 = vmatprep.mubr.bf16.mxu0 0
  %208 = vmatmul.mubr.bf16.gmra.mrb[0].mxu0 %v117
  %v209 = vpop.f32.mrb[0].mxu0
  %v210 = vadd.f32 %v40, %v209
  %v211 = vpop.f32.mrb[0].mxu0
  %v212 = vpop.f32.mrb[0].mxu0
  %v213 = vadd.f32 %v40, %v212
  %v214 = vpop.f32.mrb[0].mxu0
  %215 = vdwg.mxu0
  %v216 = vpack.c.bf16 %v157, %v154
  %v217 = vpack.c.bf16 %v165, %v162
  %v218 = vpack.c.bf16 %v173, %v170
  %v219 = vpack.c.bf16 %v181, %v178
  %v220 = vpack.c.bf16 %v189, %v186
  %v221 = vpack.c.bf16 %v197, %v194
  %v222 = vpack.c.bf16 %v205, %v202
  %v223 = vpack.c.bf16 %v213, %v210
  %v232 = vunpack.c.l.b16 %v216
  %v233 = vunpack.c.h.b16 %v216
  %v234 = vunpack.c.l.b16 %v217
  %v235 = vunpack.c.h.b16 %v217
  %v236 = vunpack.c.l.b16 %v218
  %v237 = vunpack.c.h.b16 %v218
  %v238 = vunpack.c.l.b16 %v219
  %v239 = vunpack.c.h.b16 %v219
  %v240 = vunpack.c.l.b16 %v220
  %v241 = vunpack.c.h.b16 %v220
  %v242 = vunpack.c.l.b16 %v221
  %v243 = vunpack.c.h.b16 %v221
  %v244 = vunpack.c.l.b16 %v222
  %v245 = vunpack.c.h.b16 %v222
  %v246 = vunpack.c.l.b16 %v223
  %v247 = vunpack.c.h.b16 %v223
  %v248 = vpack.c.b16 %v232, %v232
  %v249 = vpack.c.b16 %v233, %v233
  %v250 = vpack.c.b16 %v234, %v234
  %v251 = vpack.c.b16 %v235, %v235
  %v252 = vpack.c.b16 %v236, %v236
  %v253 = vpack.c.b16 %v237, %v237
  %v254 = vpack.c.b16 %v238, %v238
  %v255 = vpack.c.b16 %v239, %v239
  %v256 = vpack.c.b16 %v240, %v240
  %v257 = vpack.c.b16 %v241, %v241
  %v258 = vpack.c.b16 %v242, %v242
  %v259 = vpack.c.b16 %v243, %v243
  %v260 = vpack.c.b16 %v244, %v244
  %v261 = vpack.c.b16 %v245, %v245
  %v262 = vpack.c.b16 %v246, %v246
  %v263 = vpack.c.b16 %v247, %v247
  %vm280 = vcmask 60416
  %281 = vst.msk [vmem:[%s3] sm:$0xf] %vm280, %v248
  %282 = vst.msk [vmem:[%s3 + $0x4] sm:$0xf] %vm280, %v249
  %283 = vst.msk [vmem:[%s3 + $0x8] sm:$0xf] %vm280, %v250
  %284 = vst.msk [vmem:[%s3 + $0xc] sm:$0xf] %vm280, %v251
  %285 = vst.msk [vmem:[%s3 + $0x10] sm:$0xf] %vm280, %v252
  %286 = vst.msk [vmem:[%s3 + $0x14] sm:$0xf] %vm280, %v253
  %287 = vst.msk [vmem:[%s3 + $0x18] sm:$0xf] %vm280, %v254
  %288 = vst.msk [vmem:[%s3 + $0x1c] sm:$0xf] %vm280, %v255
  %289 = vst.msk [vmem:[%s3 + $0x20] sm:$0xf] %vm280, %v256
  %290 = vst.msk [vmem:[%s3 + $0x24] sm:$0xf] %vm280, %v257
  %291 = vst.msk [vmem:[%s3 + $0x28] sm:$0xf] %vm280, %v258
  %292 = vst.msk [vmem:[%s3 + $0x2c] sm:$0xf] %vm280, %v259
  %293 = vst.msk [vmem:[%s3 + $0x30] sm:$0xf] %vm280, %v260
  %294 = vst.msk [vmem:[%s3 + $0x34] sm:$0xf] %vm280, %v261
  %295 = vst.msk [vmem:[%s3 + $0x38] sm:$0xf] %vm280, %v262
  %296 = vst.msk [vmem:[%s3 + $0x3c] sm:$0xf] %vm280, %v263
  // Predicated region
  $region14: #{ipa_block_forward.5} parent=0 // pred_check
    _
  $region15: #{ipa_block_forward.5} parent=0 // pred_check_branch
    %298 = sbr.rel (0) target = $region17
  $region16: #{ipa_block_forward.5} parent=0 // pred_region
    _
  $region17: #{ipa_block_forward.5} parent=0 // pred_fallthru
    _
  // Predicated region
  $region18: #{ipa_block_forward.5} parent=0 // pred_check
    _
  $region19: #{ipa_block_forward.5} parent=0 // pred_check_branch
    %300 = sbr.rel (0) target = $region21
  $region20: #{ipa_block_forward.5} parent=0 // pred_region
    _
  $region21: #{ipa_block_forward.5} parent=0 // pred_fallthru
    _

// kernel: ipa_block_forward.6
$region0: #{ipa_block_forward.6}
  #allocation0 [shape = 'u32[]', space=smem, size = 0x4, offset = 0x4, fixed_abs, tag = 'smem constant byte address 0x4 - core index']
  #allocation1 [shape = 'u32[144,128]{1,0:T(1,128)}', space=vmem, size = 0x12000, scoped, tag = 'internal scratch']
  #allocation2 [shape = 'f32[8,8]{1,0:T(8,128)}', space=vmem, size = 0x1000, scoped, tag = 'scratch operand']
  #allocation3 [shape = 'f32[8,8]{1,0:T(8,128)}', space=vmem, size = 0x1000, scoped, tag = 'scratch operand']
  #allocation4 [shape = 'f32[8,8,28]{2,1,0:T(8,128)}', space=vmem, size = 0x8000, scoped, tag = 'scratch operand']
  #allocation5 [shape = 'f32[8,8,32]{2,1,0:T(8,128)}', space=vmem, size = 0x8000, scoped, tag = 'scratch operand']
  #allocation6 [shape = 'f32[8,8,8]{2,1,0:T(8,128)}', space=vmem, size = 0x8000, scoped, tag = 'scratch operand']
  %s0 = inlined_call_operand.vmem [shape: bf16[2,8,8,32], index: 0, kind: input, shape index: {}]
  %s1 = inlined_call_operand.vmem [shape: bf16[2,8,8,32], index: 1, kind: input, shape index: {}]
  %s2 = inlined_call_operand.vmem [shape: bf16[2,8,8,28], index: 2, kind: input, shape index: {}]
  %s3 = inlined_call_operand.vmem [shape: bf16[2,8,8,8], index: 3, kind: input, shape index: {}]
  %s4 = inlined_call_operand.vmem [shape: bf16[2,8,8,32], index: 4, kind: input, shape index: {}]
  %s5 = inlined_call_operand.vmem [shape: f32[2,8,8,28], index: 5, kind: output, shape index: {0}]
  %s6 = inlined_call_operand.vmem [shape: f32[2,8,8,32], index: 6, kind: output, shape index: {1}]
  %7 = xla_tuple %s5, %s6
  %s8 = sld [smem:[#allocation0]]
  $region69: #{ipa_block_forward.6} parent=0
    _
  %s10 = ssub.s32 1, %s8
  %s11 = scalar_select 0, %s10, %s8
  loop: start=0, step=1, limit=4
  $region2: #{ipa_block_forward.6} parent=0 // loop_pre_header
    _
  $region3: #{ipa_block_forward.6} parent=0 // loop_header
    %s13 = sphi 0, %s17
    %p14 = scmp.ge.s32.totalorder %s13, 4
    %s20 = sphi 0, %s32
    %s21 = sphi 0, %s28
    %s22 = sphi 0, %s20
    %s23 = sphi 0, %s21
    %s24 = sphi 0, %s22
    %s25 = sphi 0, %s23
    %s35 = sphi 0, %s37
    %s38 = sphi 0, %s35
    %s39 = sphi 0, %s38
    %s55 = sphi 0, %s39
    %s63 = sphi 0, %s65
    %s66 = sphi 0, %s63
    %s67 = sphi 0, %s66
    %s83 = sphi 0, %s67
    %s91 = sphi 0, %s93
    %s94 = sphi 0, %s91
    %s95 = sphi 0, %s94
    %s111 = sphi 0, %s95
    %s119 = sphi 0, %s121
    %s122 = sphi 0, %s119
    %s123 = sphi 0, %s122
    %s139 = sphi 0, %s123
    %s147 = sphi 0, %s149
    %s150 = sphi 0, %s147
    %s151 = sphi 0, %s150
    %s167 = sphi 0, %s151
    %s173 = sphi 0, %s175
    %s176 = sphi 0, %s173
    %s177 = sphi 0, %s176
    %s193 = sphi 0, %s177
    %s199 = sphi 0, %s201
    %s202 = sphi 0, %s199
    %s203 = sphi 0, %s202
    %s219 = sphi 0, %s203
  $region4: #{ipa_block_forward.6} parent=0 // loop_header_branch
    %16 = sbr.rel (%p14) target = $region8
  $region5: #{ipa_block_forward.6} parent=0 // loop_body
    %s18 = ssub.s32 %s13, 1
    %s19 = ssub.s32 %s13, 2
    %s26 = sadd.s32 1, %s21
    %p27 = scmp.ge.s32.totalorder %s26, 1
    %s28 = scalar_select %p27, 0, %s26
    %s29 = sadd.s32 1, %s20
    %s30 = scalar_select %p27, %s29, %s20
    %p31 = scmp.ge.s32.totalorder %s30, 2
    %s32 = scalar_select %p31, 0, %s30
    %s33 = ssub.s32 %s20, %s32
    %p34 = scmp.eq.s32.totalorder %s33, 0
    %s36 = sadd.s32 %s35, 1
    %s37 = scalar_select %p34, %s35, %s36
    %p40 = pneg %p34
    %p41 = scmp.eq.s32.totalorder %s13, 1
    %p42 = por %p40, %p41
    %p43 = scmp.ne.s32.totalorder %s35, %s38
    %p44 = scmp.eq.s32.totalorder %s13, 0
    %p45 = por %p43, %p44
    %p46 = scmp.ne.s32.totalorder %s35, %s38
    %p47 = scmp.eq.s32.totalorder %s18, 1
    %p48 = por %p46, %p47
    %p49 = scmp.ne.s32.totalorder %s38, %s39
    %p50 = scmp.eq.s32.totalorder %s18, 0
    %p51 = por %p49, %p50
    %p52 = scmp.ne.s32.totalorder %s38, %s39
    %p53 = scmp.eq.s32.totalorder %s19, 1
    %p54 = por %p52, %p53
    %p56 = scmp.ne.s32.totalorder %s39, %s55
    %p57 = scmp.eq.s32.totalorder %s19, 0
    %p58 = por %p56, %p57
    %s59 = ssub.s32 %s20, %s32
    %s60 = ssub.s32 %s21, %s28
    %s61 = sor.u32 %s59, %s60
    %p62 = scmp.eq.s32.totalorder %s61, 0
    %s64 = sadd.s32 %s63, 1
    %s65 = scalar_select %p62, %s63, %s64
    %p68 = pneg %p62
    %p69 = scmp.eq.s32.totalorder %s13, 1
    %p70 = por %p68, %p69
    %p71 = scmp.ne.s32.totalorder %s63, %s66
    %p72 = scmp.eq.s32.totalorder %s13, 0
    %p73 = por %p71, %p72
    %p74 = scmp.ne.s32.totalorder %s63, %s66
    %p75 = scmp.eq.s32.totalorder %s18, 1
    %p76 = por %p74, %p75
    %p77 = scmp.ne.s32.totalorder %s66, %s67
    %p78 = scmp.eq.s32.totalorder %s18, 0
    %p79 = por %p77, %p78
    %p80 = scmp.ne.s32.totalorder %s66, %s67
    %p81 = scmp.eq.s32.totalorder %s19, 1
    %p82 = por %p80, %p81
    %p84 = scmp.ne.s32.totalorder %s67, %s83
    %p85 = scmp.eq.s32.totalorder %s19, 0
    %p86 = por %p84, %p85
    %s87 = ssub.s32 %s20, %s32
    %s88 = ssub.s32 %s21, %s28
    %s89 = sor.u32 %s87, %s88
    %p90 = scmp.eq.s32.totalorder %s89, 0
    %s92 = sadd.s32 %s91, 1
    %s93 = scalar_select %p90, %s91, %s92
    %p96 = pneg %p90
    %p97 = scmp.eq.s32.totalorder %s13, 1
    %p98 = por %p96, %p97
    %p99 = scmp.ne.s32.totalorder %s91, %s94
    %p100 = scmp.eq.s32.totalorder %s13, 0
    %p101 = por %p99, %p100
    %p102 = scmp.ne.s32.totalorder %s91, %s94
    %p103 = scmp.eq.s32.totalorder %s18, 1
    %p104 = por %p102, %p103
    %p105 = scmp.ne.s32.totalorder %s94, %s95
    %p106 = scmp.eq.s32.totalorder %s18, 0
    %p107 = por %p105, %p106
    %p108 = scmp.ne.s32.totalorder %s94, %s95
    %p109 = scmp.eq.s32.totalorder %s19, 1
    %p110 = por %p108, %p109
    %p112 = scmp.ne.s32.totalorder %s95, %s111
    %p113 = scmp.eq.s32.totalorder %s19, 0
    %p114 = por %p112, %p113
    %s115 = ssub.s32 %s20, %s32
    %s116 = ssub.s32 %s21, %s28
    %s117 = sor.u32 %s115, %s116
    %p118 = scmp.eq.s32.totalorder %s117, 0
    %s120 = sadd.s32 %s119, 1
    %s121 = scalar_select %p118, %s119, %s120
    %p124 = pneg %p118
    %p125 = scmp.eq.s32.totalorder %s13, 1
    %p126 = por %p124, %p125
    %p127 = scmp.ne.s32.totalorder %s119, %s122
    %p128 = scmp.eq.s32.totalorder %s13, 0
    %p129 = por %p127, %p128
    %p130 = scmp.ne.s32.totalorder %s119, %s122
    %p131 = scmp.eq.s32.totalorder %s18, 1
    %p132 = por %p130, %p131
    %p133 = scmp.ne.s32.totalorder %s122, %s123
    %p134 = scmp.eq.s32.totalorder %s18, 0
    %p135 = por %p133, %p134
    %p136 = scmp.ne.s32.totalorder %s122, %s123
    %p137 = scmp.eq.s32.totalorder %s19, 1
    %p138 = por %p136, %p137
    %p140 = scmp.ne.s32.totalorder %s123, %s139
    %p141 = scmp.eq.s32.totalorder %s19, 0
    %p142 = por %p140, %p141
    %s143 = ssub.s32 %s20, %s32
    %s144 = ssub.s32 %s21, %s28
    %s145 = sor.u32 %s143, %s144
    %p146 = scmp.eq.s32.totalorder %s145, 0
    %s148 = sadd.s32 %s147, 1
    %s149 = scalar_select %p146, %s147, %s148
    %p152 = pneg %p146
    %p153 = scmp.eq.s32.totalorder %s13, 1
    %p154 = por %p152, %p153
    %p155 = scmp.ne.s32.totalorder %s147, %s150
    %p156 = scmp.eq.s32.totalorder %s13, 0
    %p157 = por %p155, %p156
    %p158 = scmp.ne.s32.totalorder %s147, %s150
    %p159 = scmp.eq.s32.totalorder %s18, 1
    %p160 = por %p158, %p159
    %p161 = scmp.ne.s32.totalorder %s150, %s151
    %p162 = scmp.eq.s32.totalorder %s18, 0
    %p163 = por %p161, %p162
    %p164 = scmp.ne.s32.totalorder %s150, %s151
    %p165 = scmp.eq.s32.totalorder %s19, 1
    %p166 = por %p164, %p165
    %p168 = scmp.ne.s32.totalorder %s151, %s167
    %p169 = scmp.eq.s32.totalorder %s19, 0
    %p170 = por %p168, %p169
    %s171 = ssub.s32 %s20, %s32
    %p172 = scmp.eq.s32.totalorder %s171, 0
    %s174 = sadd.s32 %s173, 1
    %s175 = scalar_select %p172, %s173, %s174
    %p178 = pneg %p172
    %p179 = scmp.eq.s32.totalorder %s13, 1
    %p180 = por %p178, %p179
    %p181 = scmp.ne.s32.totalorder %s173, %s176
    %p182 = scmp.eq.s32.totalorder %s13, 0
    %p183 = por %p181, %p182
    %p184 = scmp.ne.s32.totalorder %s173, %s176
    %p185 = scmp.eq.s32.totalorder %s18, 1
    %p186 = por %p184, %p185
    %p187 = scmp.ne.s32.totalorder %s176, %s177
    %p188 = scmp.eq.s32.totalorder %s18, 0
    %p189 = por %p187, %p188
    %p190 = scmp.ne.s32.totalorder %s176, %s177
    %p191 = scmp.eq.s32.totalorder %s19, 1
    %p192 = por %p190, %p191
    %p194 = scmp.ne.s32.totalorder %s177, %s193
    %p195 = scmp.eq.s32.totalorder %s19, 0
    %p196 = por %p194, %p195
    %s197 = ssub.s32 %s20, %s32
    %p198 = scmp.eq.s32.totalorder %s197, 0
    %s200 = sadd.s32 %s199, 1
    %s201 = scalar_select %p198, %s199, %s200
    %p204 = pneg %p198
    %p205 = scmp.eq.s32.totalorder %s13, 1
    %p206 = por %p204, %p205
    %p207 = scmp.ne.s32.totalorder %s199, %s202
    %p208 = scmp.eq.s32.totalorder %s13, 0
    %p209 = por %p207, %p208
    %p210 = scmp.ne.s32.totalorder %s199, %s202
    %p211 = scmp.eq.s32.totalorder %s18, 1
    %p212 = por %p210, %p211
    %p213 = scmp.ne.s32.totalorder %s202, %s203
    %p214 = scmp.eq.s32.totalorder %s18, 0
    %p215 = por %p213, %p214
    %p216 = scmp.ne.s32.totalorder %s202, %s203
    %p217 = scmp.eq.s32.totalorder %s19, 1
    %p218 = por %p216, %p217
    %p220 = scmp.ne.s32.totalorder %s203, %s219
    %p221 = scmp.eq.s32.totalorder %s19, 0
    %p222 = por %p220, %p221
    %p223 = scmp.le.s32.totalorder 1, %s13
    %p224 = scmp.lt.s32.totalorder %s13, 3
    %p225 = pnand %p223, %p224
    %p226 = pneg %p225
    // Predicated region
    $region9: #{ipa_block_forward.6} parent=5 // pred_check
      _
    $region10: #{ipa_block_forward.6} parent=5 // pred_check_branch
      %228 = sbr.rel (%p225) target = $region12
    $region11: #{ipa_block_forward.6} parent=5 // pred_region
      %s229 = ssub.s32 %s13, 1
    $region12: #{ipa_block_forward.6} parent=5 // pred_fallthru
      _
    %p230 = scmp.lt.s32.totalorder %s13, 2
    // Predicated region
    $region13: #{ipa_block_forward.6} parent=5 // pred_check
      %p231 = pneg %p230
    $region14: #{ipa_block_forward.6} parent=5 // pred_check_branch
      %233 = sbr.rel (%p231) target = $region16
    $region15: #{ipa_block_forward.6} parent=5 // pred_region
      // Predicated region
      $region17: #{ipa_block_forward.6} parent=15 // pred_check
        %p234 = pneg %p45
      $region18: #{ipa_block_forward.6} parent=15 // pred_check_branch
        %236 = sbr.rel (%p234) target = $region20
      $region19: #{ipa_block_forward.6} parent=15 // pred_region
        %p237 = scmp.lt.s32.totalorder %s20, 1
        %s238 = scalar_select %p237, %s20, 1
        %s239 = smul.addr %s238, 8
        %s240 = smul.addr %s239, 4
        %s241 = scalar_lea.vmem %s0, %s240
      $region20: #{ipa_block_forward.6} parent=15 // pred_fallthru
        _
      // Predicated region
      $region21: #{ipa_block_forward.6} parent=15 // pred_check
        %p242 = pneg %p73
      $region22: #{ipa_block_forward.6} parent=15 // pred_check_branch
        %244 = sbr.rel (%p242) target = $region24
      $region23: #{ipa_block_forward.6} parent=15 // pred_region
        %p245 = scmp.lt.s32.totalorder %s20, 1
        %s246 = scalar_select %p245, %s20, 1
        %p247 = scmp.lt.s32.totalorder %s21, 0
        %s248 = scalar_select %p247, %s21, 0
        %s249 = smul.addr %s246, 8
        %s250 = sadd.s32 %s248, %s249
        %s251 = smul.addr %s250, 4
        %s252 = scalar_lea.vmem %s1, %s251
      $region24: #{ipa_block_forward.6} parent=15 // pred_fallthru
        _
      // Predicated region
      $region25: #{ipa_block_forward.6} parent=15 // pred_check
        %p253 = pneg %p101
      $region26: #{ipa_block_forward.6} parent=15 // pred_check_branch
        %255 = sbr.rel (%p253) target = $region28
      $region27: #{ipa_block_forward.6} parent=15 // pred_region
        %p256 = scmp.lt.s32.totalorder %s20, 1
        %s257 = scalar_select %p256, %s20, 1
        %p258 = scmp.lt.s32.totalorder %s21, 0
        %s259 = scalar_select %p258, %s21, 0
        %s260 = smul.addr %s257, 8
        %s261 = sadd.s32 %s259, %s260
        %s262 = smul.addr %s261, 4
        %s263 = scalar_lea.vmem %s2, %s262
      $region28: #{ipa_block_forward.6} parent=15 // pred_fallthru
        _
      // Predicated region
      $region29: #{ipa_block_forward.6} parent=15 // pred_check
        %p264 = pneg %p129
      $region30: #{ipa_block_forward.6} parent=15 // pred_check_branch
        %266 = sbr.rel (%p264) target = $region32
      $region31: #{ipa_block_forward.6} parent=15 // pred_region
        %p267 = scmp.lt.s32.totalorder %s20, 1
        %s268 = scalar_select %p267, %s20, 1
        %p269 = scmp.lt.s32.totalorder %s21, 0
        %s270 = scalar_select %p269, %s21, 0
        %s271 = smul.addr %s268, 8
        %s272 = sadd.s32 %s270, %s271
        %s273 = smul.addr %s272, 4
        %s274 = scalar_lea.vmem %s3, %s273
      $region32: #{ipa_block_forward.6} parent=15 // pred_fallthru
        _
      // Predicated region
      $region33: #{ipa_block_forward.6} parent=15 // pred_check
        %p275 = pneg %p157
      $region34: #{ipa_block_forward.6} parent=15 // pred_check_branch
        %277 = sbr.rel (%p275) target = $region36
      $region35: #{ipa_block_forward.6} parent=15 // pred_region
        %p278 = scmp.lt.s32.totalorder %s20, 1
        %s279 = scalar_select %p278, %s20, 1
        %p280 = scmp.lt.s32.totalorder %s21, 0
        %s281 = scalar_select %p280, %s21, 0
        %s282 = smul.addr %s279, 8
        %s283 = sadd.s32 %s281, %s282
        %s284 = smul.addr %s283, 4
        %s285 = scalar_lea.vmem %s4, %s284
      $region36: #{ipa_block_forward.6} parent=15 // pred_fallthru
        _
    $region16: #{ipa_block_forward.6} parent=5 // pred_fallthru
      _
    %p286 = scmp.le.s32.totalorder 1, %s13
    %p287 = scmp.lt.s32.totalorder %s13, 3
    %p288 = pnand %p286, %p287
    %p289 = pneg %p288
    // Predicated region
    $region37: #{ipa_block_forward.6} parent=5 // pred_check
      _
    $region38: #{ipa_block_forward.6} parent=5 // pred_check_branch
      %291 = sbr.rel (%p288) target = $region40
    $region39: #{ipa_block_forward.6} parent=5 // pred_region
      %s292 = ssub.s32 %s13, 1
      %p293 = scmp.lt.s32.totalorder %s22, 1
      %s294 = scalar_select %p293, %s22, 1
      %s295 = smul.addr %s294, 8
      %s296 = smul.addr %s295, 4
      %s297 = scalar_lea.vmem %s0, %s296
      %p298 = pneg %p51
      %p299 = pneg %p48
      %p300 = scmp.lt.s32.totalorder %s22, 1
      %s301 = scalar_select %p300, %s22, 1
      %p302 = scmp.lt.s32.totalorder %s23, 0
      %s303 = scalar_select %p302, %s23, 0
      %s304 = smul.addr %s301, 8
      %s305 = sadd.s32 %s303, %s304
      %s306 = smul.addr %s305, 4
      %s307 = scalar_lea.vmem %s1, %s306
      %p308 = pneg %p79
      %p309 = pneg %p76
      %p310 = scmp.lt.s32.totalorder %s22, 1
      %s311 = scalar_select %p310, %s22, 1
      %p312 = scmp.lt.s32.totalorder %s23, 0
      %s313 = scalar_select %p312, %s23, 0
      %s314 = smul.addr %s311, 8
      %s315 = sadd.s32 %s313, %s314
      %s316 = smul.addr %s315, 4
      %s317 = scalar_lea.vmem %s2, %s316
      %p318 = pneg %p107
      %p319 = pneg %p104
      %p320 = scmp.lt.s32.totalorder %s22, 1
      %s321 = scalar_select %p320, %s22, 1
      %p322 = scmp.lt.s32.totalorder %s23, 0
      %s323 = scalar_select %p322, %s23, 0
      %s324 = smul.addr %s321, 8
      %s325 = sadd.s32 %s323, %s324
      %s326 = smul.addr %s325, 4
      %s327 = scalar_lea.vmem %s3, %s326
      %p328 = pneg %p135
      %p329 = pneg %p132
      %p330 = scmp.lt.s32.totalorder %s22, 1
      %s331 = scalar_select %p330, %s22, 1
      %p332 = scmp.lt.s32.totalorder %s23, 0
      %s333 = scalar_select %p332, %s23, 0
      %s334 = smul.addr %s331, 8
      %s335 = sadd.s32 %s333, %s334
      %s336 = smul.addr %s335, 4
      %s337 = scalar_lea.vmem %s4, %s336
      %p338 = pneg %p163
      %p339 = pneg %p160
      %p340 = pneg %p189
      %p341 = pneg %p186
      %p342 = scmp.lt.s32.totalorder %s22, 1
      %s343 = scalar_select %p342, %s22, 1
      %s344 = smul.addr %s343, 8
      %s345 = smul.addr %s344, 8
      %s346 = scalar_lea.vmem %s5, %s345
      %p347 = pneg %p215
      %p348 = pneg %p212
      %p349 = scmp.lt.s32.totalorder %s22, 1
      %s350 = scalar_select %p349, %s22, 1
      %s351 = smul.addr %s350, 8
      %s352 = smul.addr %s351, 8
      %s353 = scalar_lea.vmem %s6, %s352
      %p354 = scmp.lt.s32.totalorder %s22, 1
      %s355 = scalar_select %p354, %s22, 1
      %s356 = smul.addr %s355, 8
      %s357 = smul.addr %s356, 4
      %s358 = scalar_lea.vmem %s0, %s357
      %p359 = scmp.lt.s32.totalorder %s22, 1
      %s360 = scalar_select %p359, %s22, 1
      %p361 = scmp.lt.s32.totalorder %s23, 0
      %s362 = scalar_select %p361, %s23, 0
      %s363 = smul.addr %s360, 8
      %s364 = sadd.s32 %s362, %s363
      %s365 = smul.addr %s364, 4
      %s366 = scalar_lea.vmem %s1, %s365
      %p367 = scmp.lt.s32.totalorder %s22, 1
      %s368 = scalar_select %p367, %s22, 1
      %p369 = scmp.lt.s32.totalorder %s23, 0
      %s370 = scalar_select %p369, %s23, 0
      %s371 = smul.addr %s368, 8
      %s372 = sadd.s32 %s370, %s371
      %s373 = smul.addr %s372, 4
      %s374 = scalar_lea.vmem %s2, %s373
      %p375 = scmp.lt.s32.totalorder %s22, 1
      %s376 = scalar_select %p375, %s22, 1
      %p377 = scmp.lt.s32.totalorder %s23, 0
      %s378 = scalar_select %p377, %s23, 0
      %s379 = smul.addr %s376, 8
      %s380 = sadd.s32 %s378, %s379
      %s381 = smul.addr %s380, 4
      %s382 = scalar_lea.vmem %s3, %s381
      %p383 = scmp.lt.s32.totalorder %s22, 1
      %s384 = scalar_select %p383, %s22, 1
      %p385 = scmp.lt.s32.totalorder %s23, 0
      %s386 = scalar_select %p385, %s23, 0
      %s387 = smul.addr %s384, 8
      %s388 = sadd.s32 %s386, %s387
      %s389 = smul.addr %s388, 4
      %s390 = scalar_lea.vmem %s4, %s389
      %p391 = scmp.lt.s32.totalorder %s22, 1
      %s392 = scalar_select %p391, %s22, 1
      %s393 = smul.addr %s392, 8
      %s394 = smul.addr %s393, 8
      %s395 = scalar_lea.vmem %s5, %s394
      %p396 = scmp.lt.s32.totalorder %s22, 1
      %s397 = scalar_select %p396, %s22, 1
      %s398 = smul.addr %s397, 8
      %s399 = smul.addr %s398, 8
      %s400 = scalar_lea.vmem %s6, %s399
      %p402 = scmp.eq.s32.totalorder %s23, 0
      // Predicated region
      $region41: #{ipa_block_forward.6} parent=39 // pred_check
        %p403 = pneg %p402
      $region42: #{ipa_block_forward.6} parent=39 // pred_check_branch
        %405 = sbr.rel (%p403) target = $region44
      $region43: #{ipa_block_forward.6} parent=39 // pred_region
        %vm406 = vcmask 64512
        %407 = vst.msk [vmem:[#allocation2] sm:$0xff] %vm406, -inf
        %408 = vst.msk [vmem:[#allocation3] sm:$0xff] %vm406, 0.0
        %vm409 = vcmask 228352
        %410 = vst.msk [vmem:[#allocation4] sm:$0xff] %vm409, 0.0
        %411 = vst.msk [vmem:[#allocation4 + $0x8] sm:$0xff] %vm409, 0.0
        %412 = vst.msk [vmem:[#allocation4 + $0x10] sm:$0xff] %vm409, 0.0
        %413 = vst.msk [vmem:[#allocation4 + $0x18] sm:$0xff] %vm409, 0.0
        %414 = vst.msk [vmem:[#allocation4 + $0x20] sm:$0xff] %vm409, 0.0
        %415 = vst.msk [vmem:[#allocation4 + $0x28] sm:$0xff] %vm409, 0.0
        %416 = vst.msk [vmem:[#allocation4 + $0x30] sm:$0xff] %vm409, 0.0
        %417 = vst.msk [vmem:[#allocation4 + $0x38] sm:$0xff] %vm409, 0.0
        %vm418 = vcmask 261120
        %419 = vst.msk [vmem:[#allocation5] sm:$0xff] %vm418, 0.0
        %420 = vst.msk [vmem:[#allocation5 + $0x8] sm:$0xff] %vm418, 0.0
        %421 = vst.msk [vmem:[#allocation5 + $0x10] sm:$0xff] %vm418, 0.0
        %422 = vst.msk [vmem:[#allocation5 + $0x18] sm:$0xff] %vm418, 0.0
        %423 = vst.msk [vmem:[#allocation5 + $0x20] sm:$0xff] %vm418, 0.0
        %424 = vst.msk [vmem:[#allocation5 + $0x28] sm:$0xff] %vm418, 0.0
        %425 = vst.msk [vmem:[#allocation5 + $0x30] sm:$0xff] %vm418, 0.0
        %426 = vst.msk [vmem:[#allocation5 + $0x38] sm:$0xff] %vm418, 0.0
      $region44: #{ipa_block_forward.6} parent=39 // pred_fallthru
        _
      %v427 = vld [vmem:[%s358] sm:$0xf]
      %v428 = vld [vmem:[%s358 + $0x4] sm:$0xf]
      %v429 = vld [vmem:[%s358 + $0x8] sm:$0xf]
      %v430 = vld [vmem:[%s358 + $0xc] sm:$0xf]
      %v431 = vld [vmem:[%s358 + $0x10] sm:$0xf]
      %v432 = vld [vmem:[%s358 + $0x14] sm:$0xf]
      %v433 = vld [vmem:[%s358 + $0x18] sm:$0xf]
      %v434 = vld [vmem:[%s358 + $0x1c] sm:$0xf]
      %v435 = vld [vmem:[%s366] sm:$0xf]
      %v436 = vld [vmem:[%s366 + $0x4] sm:$0xf]
      %v437 = vld [vmem:[%s366 + $0x8] sm:$0xf]
      %v438 = vld [vmem:[%s366 + $0xc] sm:$0xf]
      %v439 = vld [vmem:[%s366 + $0x10] sm:$0xf]
      %v440 = vld [vmem:[%s366 + $0x14] sm:$0xf]
      %v441 = vld [vmem:[%s366 + $0x18] sm:$0xf]
      %v442 = vld [vmem:[%s366 + $0x1c] sm:$0xf]
      %v443 = vld [vmem:[%s374] sm:$0xf]
      %v444 = vld [vmem:[%s374 + $0x4] sm:$0xf]
      %v445 = vld [vmem:[%s374 + $0x8] sm:$0xf]
      %v446 = vld [vmem:[%s374 + $0xc] sm:$0xf]
      %v447 = vld [vmem:[%s374 + $0x10] sm:$0xf]
      %v448 = vld [vmem:[%s374 + $0x14] sm:$0xf]
      %v449 = vld [vmem:[%s374 + $0x18] sm:$0xf]
      %v450 = vld [vmem:[%s374 + $0x1c] sm:$0xf]
      %v451 = vld [vmem:[%s390] sm:$0xf]
      %v452 = vld [vmem:[%s390 + $0x4] sm:$0xf]
      %v453 = vld [vmem:[%s390 + $0x8] sm:$0xf]
      %v454 = vld [vmem:[%s390 + $0xc] sm:$0xf]
      %v455 = vld [vmem:[%s390 + $0x10] sm:$0xf]
      %v456 = vld [vmem:[%s390 + $0x14] sm:$0xf]
      %v457 = vld [vmem:[%s390 + $0x18] sm:$0xf]
      %v458 = vld [vmem:[%s390 + $0x1c] sm:$0xf]
      %v459 = vld [vmem:[%s382] sm:$0xf]
      %v460 = vld [vmem:[%s382 + $0x4] sm:$0xf]
      %v461 = vld [vmem:[%s382 + $0x8] sm:$0xf]
      %v462 = vld [vmem:[%s382 + $0xc] sm:$0xf]
      %v463 = vld [vmem:[%s382 + $0x10] sm:$0xf]
      %v464 = vld [vmem:[%s382 + $0x14] sm:$0xf]
      %v465 = vld [vmem:[%s382 + $0x18] sm:$0xf]
      %v466 = vld [vmem:[%s382 + $0x1c] sm:$0xf]
      %v467 = vunpack.c.l.bf16 %v459
      %v468 = vunpack.c.l.bf16 %v460
      %v469 = vunpack.c.l.bf16 %v461
      %v470 = vunpack.c.l.bf16 %v462
      %v471 = vunpack.c.l.bf16 %v463
      %v472 = vunpack.c.l.bf16 %v464
      %v473 = vunpack.c.l.bf16 %v465
      %v474 = vunpack.c.l.bf16 %v466
      %vm475 = vcmask 261120
      %v477 = vsel %vm475, %v427, 0
      %v480 = vsel %vm475, %v435, 0
      %482 = vmatprep.subr.bf16.mxu0 0
      %483 = vmatpush1.bf16.xpose.msra.mxu0 %v480
      %484 = vmatprep.subr.bf16.mxu0 0
      %485 = vmatpush1.bf16.xpose.msra.mxu0 0
      %486 = vmatprep.subr.bf16.mxu0 0
      %487 = vmatpush1.bf16.xpose.msra.mxu0 0
      %488 = vmatprep.subr.bf16.mxu0 0
      %489 = vmatpush1.bf16.xpose.msra.mxu0 0
      %490 = vmatprep.subr.bf16.mxu0 0
      %491 = vmatpush1.bf16.xpose.msra.mxu0 0
      %492 = vmatprep.subr.bf16.mxu0 0
      %493 = vmatpush1.bf16.xpose.msra.mxu0 0
      %494 = vmatprep.subr.bf16.mxu0 0
      %495 = vmatpush1.bf16.xpose.msra.mxu0 0
      %496 = vmatprep.subr.bf16.mxu0 0
      %497 = vmatpush1.bf16.xpose.msra.mxu0 0
      %498 = vmatprep.subr.bf16.mxu0 0
      %499 = vmatpush1.bf16.xpose.msra.mxu0 0
      %500 = vmatprep.subr.bf16.mxu0 0
      %501 = vmatpush1.bf16.xpose.msra.mxu0 0
      %502 = vmatprep.subr.bf16.mxu0 0
      %503 = vmatpush1.bf16.xpose.msra.mxu0 0
      %504 = vmatprep.subr.bf16.mxu0 0
      %505 = vmatpush1.bf16.xpose.msra.mxu0 0
      %506 = vmatprep.subr.bf16.mxu0 0
      %507 = vmatpush1.bf16.xpose.msra.mxu0 0
      %508 = vmatprep.subr.bf16.mxu0 0
      %509 = vmatpush1.bf16.xpose.msra.mxu0 0
      %510 = vmatprep.subr.bf16.mxu0 0
      %511 = vmatpush1.bf16.xpose.msra.mxu0 0
      %512 = vmatprep.subr.bf16.mxu0 0
      %513 = vmatpush1.bf16.xpose.msra.mxu0 0
      %514 = vmatprep.mubr.bf16.mxu0 0
      %515 = vmatmul.mubr.bf16.gmra.mrb[0].mxu0 %v477
      %v516 = vpop.f32.mrb[0].mxu0
      %v517 = vadd.f32 %v467, %v516
      %v518 = vpop.f32.mrb[0].mxu0
      %v519 = vpop.f32.mrb[0].mxu0
      %v520 = vpop.f32.mrb[0].mxu0
      %521 = vdwg.mxu0
      %v523 = vsel %vm475, %v428, 0
      %v526 = vsel %vm475, %v436, 0
      %528 = vmatprep.subr.bf16.mxu0 0
      %529 = vmatpush1.bf16.xpose.msra.mxu0 %v526
      %530 = vmatprep.subr.bf16.mxu0 0
      %531 = vmatpush1.bf16.xpose.msra.mxu0 0
      %532 = vmatprep.subr.bf16.mxu0 0
      %533 = vmatpush1.bf16.xpose.msra.mxu0 0
      %534 = vmatprep.subr.bf16.mxu0 0
      %535 = vmatpush1.bf16.xpose.msra.mxu0 0
      %536 = vmatprep.subr.bf16.mxu0 0
      %537 = vmatpush1.bf16.xpose.msra.mxu0 0
      %538 = vmatprep.subr.bf16.mxu0 0
      %539 = vmatpush1.bf16.xpose.msra.mxu0 0
      %540 = vmatprep.subr.bf16.mxu0 0
      %541 = vmatpush1.bf16.xpose.msra.mxu0 0
      %542 = vmatprep.subr.bf16.mxu0 0
      %543 = vmatpush1.bf16.xpose.msra.mxu0 0
      %544 = vmatprep.subr.bf16.mxu0 0
      %545 = vmatpush1.bf16.xpose.msra.mxu0 0
      %546 = vmatprep.subr.bf16.mxu0 0
      %547 = vmatpush1.bf16.xpose.msra.mxu0 0
      %548 = vmatprep.subr.bf16.mxu0 0
      %549 = vmatpush1.bf16.xpose.msra.mxu0 0
      %550 = vmatprep.subr.bf16.mxu0 0
      %551 = vmatpush1.bf16.xpose.msra.mxu0 0
      %552 = vmatprep.subr.bf16.mxu0 0
      %553 = vmatpush1.bf16.xpose.msra.mxu0 0
      %554 = vmatprep.subr.bf16.mxu0 0
      %555 = vmatpush1.bf16.xpose.msra.mxu0 0
      %556 = vmatprep.subr.bf16.mxu0 0
      %557 = vmatpush1.bf16.xpose.msra.mxu0 0
      %558 = vmatprep.subr.bf16.mxu0 0
      %559 = vmatpush1.bf16.xpose.msra.mxu0 0
      %560 = vmatprep.mubr.bf16.mxu0 0
      %561 = vmatmul.mubr.bf16.gmra.mrb[0].mxu0 %v523
      %v562 = vpop.f32.mrb[0].mxu0
      %v563 = vadd.f32 %v468, %v562
      %v564 = vpop.f32.mrb[0].mxu0
      %v565 = vpop.f32.mrb[0].mxu0
      %v566 = vpop.f32.mrb[0].mxu0
      %567 = vdwg.mxu0
      %v569 = vsel %vm475, %v429, 0
      %v572 = vsel %vm475, %v437, 0
      %574 = vmatprep.subr.bf16.mxu0 0
      %575 = vmatpush1.bf16.xpose.msra.mxu0 %v572
      %576 = vmatprep.subr.bf16.mxu0 0
      %577 = vmatpush1.bf16.xpose.msra.mxu0 0
      %578 = vmatprep.subr.bf16.mxu0 0
      %579 = vmatpush1.bf16.xpose.msra.mxu0 0
      %580 = vmatprep.subr.bf16.mxu0 0
      %581 = vmatpush1.bf16.xpose.msra.mxu0 0
      %582 = vmatprep.subr.bf16.mxu0 0
      %583 = vmatpush1.bf16.xpose.msra.mxu0 0
      %584 = vmatprep.subr.bf16.mxu0 0
      %585 = vmatpush1.bf16.xpose.msra.mxu0 0
      %586 = vmatprep.subr.bf16.mxu0 0
      %587 = vmatpush1.bf16.xpose.msra.mxu0 0
      %588 = vmatprep.subr.bf16.mxu0 0
      %589 = vmatpush1.bf16.xpose.msra.mxu0 0
      %590 = vmatprep.subr.bf16.mxu0 0
      %591 = vmatpush1.bf16.xpose.msra.mxu0 0
      %592 = vmatprep.subr.bf16.mxu0 0
      %593 = vmatpush1.bf16.xpose.msra.mxu0 0
      %594 = vmatprep.subr.bf16.mxu0 0
      %595 = vmatpush1.bf16.xpose.msra.mxu0 0
      %596 = vmatprep.subr.bf16.mxu0 0
      %597 = vmatpush1.bf16.xpose.msra.mxu0 0
      %598 = vmatprep.subr.bf16.mxu0 0
      %599 = vmatpush1.bf16.xpose.msra.mxu0 0
      %600 = vmatprep.subr.bf16.mxu0 0
      %601 = vmatpush1.bf16.xpose.msra.mxu0 0
      %602 = vmatprep.subr.bf16.mxu0 0
      %603 = vmatpush1.bf16.xpose.msra.mxu0 0
      %604 = vmatprep.subr.bf16.mxu0 0
      %605 = vmatpush1.bf16.xpose.msra.mxu0 0
      %606 = vmatprep.mubr.bf16.mxu0 0
      %607 = vmatmul.mubr.bf16.gmra.mrb[0].mxu0 %v569
      %v608 = vpop.f32.mrb[0].mxu0
      %v609 = vadd.f32 %v469, %v608
      %v610 = vpop.f32.mrb[0].mxu0
      %v611 = vpop.f32.mrb[0].mxu0
      %v612 = vpop.f32.mrb[0].mxu0
      %613 = vdwg.mxu0
      %v615 = vsel %vm475, %v430, 0
      %v618 = vsel %vm475, %v438, 0
      %620 = vmatprep.subr.bf16.mxu0 0
      %621 = vmatpush1.bf16.xpose.msra.mxu0 %v618
      %622 = vmatprep.subr.bf16.mxu0 0
      %623 = vmatpush1.bf16.xpose.msra.mxu0 0
      %624 = vmatprep.subr.bf16.mxu0 0
      %625 = vmatpush1.bf16.xpose.msra.mxu0 0
      %626 = vmatprep.subr.bf16.mxu0 0
      %627 = vmatpush1.bf16.xpose.msra.mxu0 0
      %628 = vmatprep.subr.bf16.mxu0 0
      %629 = vmatpush1.bf16.xpose.msra.mxu0 0
      %630 = vmatprep.subr.bf16.mxu0 0
      %631 = vmatpush1.bf16.xpose.msra.mxu0 0
      %632 = vmatprep.subr.bf16.mxu0 0
      %633 = vmatpush1.bf16.xpose.msra.mxu0 0
      %634 = vmatprep.subr.bf16.mxu0 0
      %635 = vmatpush1.bf16.xpose.msra.mxu0 0
      %636 = vmatprep.subr.bf16.mxu0 0
      %637 = vmatpush1.bf16.xpose.msra.mxu0 0
      %638 = vmatprep.subr.bf16.mxu0 0
      %639 = vmatpush1.bf16.xpose.msra.mxu0 0
      %640 = vmatprep.subr.bf16.mxu0 0
      %641 = vmatpush1.bf16.xpose.msra.mxu0 0
      %642 = vmatprep.subr.bf16.mxu0 0
      %643 = vmatpush1.bf16.xpose.msra.mxu0 0
      %644 = vmatprep.subr.bf16.mxu0 0
      %645 = vmatpush1.bf16.xpose.msra.mxu0 0
      %646 = vmatprep.subr.bf16.mxu0 0
      %647 = vmatpush1.bf16.xpose.msra.mxu0 0
      %648 = vmatprep.subr.bf16.mxu0 0
      %649 = vmatpush1.bf16.xpose.msra.mxu0 0
      %650 = vmatprep.subr.bf16.mxu0 0
      %651 = vmatpush1.bf16.xpose.msra.mxu0 0
      %652 = vmatprep.mubr.bf16.mxu0 0
      %653 = vmatmul.mubr.bf16.gmra.mrb[0].mxu0 %v615
      %v654 = vpop.f32.mrb[0].mxu0
      %v655 = vadd.f32 %v470, %v654
      %v656 = vpop.f32.mrb[0].mxu0
      %v657 = vpop.f32.mrb[0].mxu0
      %v658 = vpop.f32.mrb[0].mxu0
      %659 = vdwg.mxu0
      %v661 = vsel %vm475, %v431, 0
      %v664 = vsel %vm475, %v439, 0
      %666 = vmatprep.subr.bf16.mxu0 0
      %667 = vmatpush1.bf16.xpose.msra.mxu0 %v664
      %668 = vmatprep.subr.bf16.mxu0 0
      %669 = vmatpush1.bf16.xpose.msra.mxu0 0
      %670 = vmatprep.subr.bf16.mxu0 0
      %671 = vmatpush1.bf16.xpose.msra.mxu0 0
      %672 = vmatprep.subr.bf16.mxu0 0
      %673 = vmatpush1.bf16.xpose.msra.mxu0 0
      %674 = vmatprep.subr.bf16.mxu0 0
      %675 = vmatpush1.bf16.xpose.msra.mxu0 0
      %676 = vmatprep.subr.bf16.mxu0 0
      %677 = vmatpush1.bf16.xpose.msra.mxu0 0
      %678 = vmatprep.subr.bf16.mxu0 0
      %679 = vmatpush1.bf16.xpose.msra.mxu0 0
      %680 = vmatprep.subr.bf16.mxu0 0
      %681 = vmatpush1.bf16.xpose.msra.mxu0 0
      %682 = vmatprep.subr.bf16.mxu0 0
      %683 = vmatpush1.bf16.xpose.msra.mxu0 0
      %684 = vmatprep.subr.bf16.mxu0 0
      %685 = vmatpush1.bf16.xpose.msra.mxu0 0
      %686 = vmatprep.subr.bf16.mxu0 0
      %687 = vmatpush1.bf16.xpose.msra.mxu0 0
      %688 = vmatprep.subr.bf16.mxu0 0
      %689 = vmatpush1.bf16.xpose.msra.mxu0 0
      %690 = vmatprep.subr.bf16.mxu0 0
      %691 = vmatpush1.bf16.xpose.msra.mxu0 0
      %692 = vmatprep.subr.bf16.mxu0 0
      %693 = vmatpush1.bf16.xpose.msra.mxu0 0
      %694 = vmatprep.subr.bf16.mxu0 0
      %695 = vmatpush1.bf16.xpose.msra.mxu0 0
      %696 = vmatprep.subr.bf16.mxu0 0
      %697 = vmatpush1.bf16.xpose.msra.mxu0 0
      %698 = vmatprep.mubr.bf16.mxu0 0
      %699 = vmatmul.mubr.bf16.gmra.mrb[0].mxu0 %v661
      %v700 = vpop.f32.mrb[0].mxu0
      %v701 = vadd.f32 %v471, %v700
      %v702 = vpop.f32.mrb[0].mxu0
      %v703 = vpop.f32.mrb[0].mxu0
      %v704 = vpop.f32.mrb[0].mxu0
      %705 = vdwg.mxu0
      %v707 = vsel %vm475, %v432, 0
      %v710 = vsel %vm475, %v440, 0
      %712 = vmatprep.subr.bf16.mxu0 0
      %713 = vmatpush1.bf16.xpose.msra.mxu0 %v710
      %714 = vmatprep.subr.bf16.mxu0 0
      %715 = vmatpush1.bf16.xpose.msra.mxu0 0
      %716 = vmatprep.subr.bf16.mxu0 0
      %717 = vmatpush1.bf16.xpose.msra.mxu0 0
      %718 = vmatprep.subr.bf16.mxu0 0
      %719 = vmatpush1.bf16.xpose.msra.mxu0 0
      %720 = vmatprep.subr.bf16.mxu0 0
      %721 = vmatpush1.bf16.xpose.msra.mxu0 0
      %722 = vmatprep.subr.bf16.mxu0 0
      %723 = vmatpush1.bf16.xpose.msra.mxu0 0
      %724 = vmatprep.subr.bf16.mxu0 0
      %725 = vmatpush1.bf16.xpose.msra.mxu0 0
      %726 = vmatprep.subr.bf16.mxu0 0
      %727 = vmatpush1.bf16.xpose.msra.mxu0 0
      %728 = vmatprep.subr.bf16.mxu0 0
      %729 = vmatpush1.bf16.xpose.msra.mxu0 0
      %730 = vmatprep.subr.bf16.mxu0 0
      %731 = vmatpush1.bf16.xpose.msra.mxu0 0
      %732 = vmatprep.subr.bf16.mxu0 0
      %733 = vmatpush1.bf16.xpose.msra.mxu0 0
      %734 = vmatprep.subr.bf16.mxu0 0
      %735 = vmatpush1.bf16.xpose.msra.mxu0 0
      %736 = vmatprep.subr.bf16.mxu0 0
      %737 = vmatpush1.bf16.xpose.msra.mxu0 0
      %738 = vmatprep.subr.bf16.mxu0 0
      %739 = vmatpush1.bf16.xpose.msra.mxu0 0
      %740 = vmatprep.subr.bf16.mxu0 0
      %741 = vmatpush1.bf16.xpose.msra.mxu0 0
      %742 = vmatprep.subr.bf16.mxu0 0
      %743 = vmatpush1.bf16.xpose.msra.mxu0 0
      %744 = vmatprep.mubr.bf16.mxu0 0
      %745 = vmatmul.mubr.bf16.gmra.mrb[0].mxu0 %v707
      %v746 = vpop.f32.mrb[0].mxu0
      %v747 = vadd.f32 %v472, %v746
      %v748 = vpop.f32.mrb[0].mxu0
      %v749 = vpop.f32.mrb[0].mxu0
      %v750 = vpop.f32.mrb[0].mxu0
      %751 = vdwg.mxu0
      %v753 = vsel %vm475, %v433, 0
      %v756 = vsel %vm475, %v441, 0
      %758 = vmatprep.subr.bf16.mxu0 0
      %759 = vmatpush1.bf16.xpose.msra.mxu0 %v756
      %760 = vmatprep.subr.bf16.mxu0 0
      %761 = vmatpush1.bf16.xpose.msra.mxu0 0
      %762 = vmatprep.subr.bf16.mxu0 0
      %763 = vmatpush1.bf16.xpose.msra.mxu0 0
      %764 = vmatprep.subr.bf16.mxu0 0
      %765 = vmatpush1.bf16.xpose.msra.mxu0 0
      %766 = vmatprep.subr.bf16.mxu0 0
      %767 = vmatpush1.bf16.xpose.msra.mxu0 0
      %768 = vmatprep.subr.bf16.mxu0 0
      %769 = vmatpush1.bf16.xpose.msra.mxu0 0
      %770 = vmatprep.subr.bf16.mxu0 0
      %771 = vmatpush1.bf16.xpose.msra.mxu0 0
      %772 = vmatprep.subr.bf16.mxu0 0
      %773 = vmatpush1.bf16.xpose.msra.mxu0 0
      %774 = vmatprep.subr.bf16.mxu0 0
      %775 = vmatpush1.bf16.xpose.msra.mxu0 0
      %776 = vmatprep.subr.bf16.mxu0 0
      %777 = vmatpush1.bf16.xpose.msra.mxu0 0
      %778 = vmatprep.subr.bf16.mxu0 0
      %779 = vmatpush1.bf16.xpose.msra.mxu0 0
      %780 = vmatprep.subr.bf16.mxu0 0
      %781 = vmatpush1.bf16.xpose.msra.mxu0 0
      %782 = vmatprep.subr.bf16.mxu0 0
      %783 = vmatpush1.bf16.xpose.msra.mxu0 0
      %784 = vmatprep.subr.bf16.mxu0 0
      %785 = vmatpush1.bf16.xpose.msra.mxu0 0
      %786 = vmatprep.subr.bf16.mxu0 0
      %787 = vmatpush1.bf16.xpose.msra.mxu0 0
      %788 = vmatprep.subr.bf16.mxu0 0
      %789 = vmatpush1.bf16.xpose.msra.mxu0 0
      %790 = vmatprep.mubr.bf16.mxu0 0
      %791 = vmatmul.mubr.bf16.gmra.mrb[0].mxu0 %v753
      %v792 = vpop.f32.mrb[0].mxu0
      %v793 = vadd.f32 %v473, %v792
      %v794 = vpop.f32.mrb[0].mxu0
      %v795 = vpop.f32.mrb[0].mxu0
      %v796 = vpop.f32.mrb[0].mxu0
      %797 = vdwg.mxu0
      %v799 = vsel %vm475, %v434, 0
      %v802 = vsel %vm475, %v442, 0
      %804 = vmatprep.subr.bf16.mxu0 0
      %805 = vmatpush1.bf16.xpose.msra.mxu0 %v802
      %806 = vmatprep.subr.bf16.mxu0 0
      %807 = vmatpush1.bf16.xpose.msra.mxu0 0
      %808 = vmatprep.subr.bf16.mxu0 0
      %809 = vmatpush1.bf16.xpose.msra.mxu0 0
      %810 = vmatprep.subr.bf16.mxu0 0
      %811 = vmatpush1.bf16.xpose.msra.mxu0 0
      %812 = vmatprep.subr.bf16.mxu0 0
      %813 = vmatpush1.bf16.xpose.msra.mxu0 0
      %814 = vmatprep.subr.bf16.mxu0 0
      %815 = vmatpush1.bf16.xpose.msra.mxu0 0
      %816 = vmatprep.subr.bf16.mxu0 0
      %817 = vmatpush1.bf16.xpose.msra.mxu0 0
      %818 = vmatprep.subr.bf16.mxu0 0
      %819 = vmatpush1.bf16.xpose.msra.mxu0 0
      %820 = vmatprep.subr.bf16.mxu0 0
      %821 = vmatpush1.bf16.xpose.msra.mxu0 0
      %822 = vmatprep.subr.bf16.mxu0 0
      %823 = vmatpush1.bf16.xpose.msra.mxu0 0
      %824 = vmatprep.subr.bf16.mxu0 0
      %825 = vmatpush1.bf16.xpose.msra.mxu0 0
      %826 = vmatprep.subr.bf16.mxu0 0
      %827 = vmatpush1.bf16.xpose.msra.mxu0 0
      %828 = vmatprep.subr.bf16.mxu0 0
      %829 = vmatpush1.bf16.xpose.msra.mxu0 0
      %830 = vmatprep.subr.bf16.mxu0 0
      %831 = vmatpush1.bf16.xpose.msra.mxu0 0
      %832 = vmatprep.subr.bf16.mxu0 0
      %833 = vmatpush1.bf16.xpose.msra.mxu0 0
      %834 = vmatprep.subr.bf16.mxu0 0
      %835 = vmatpush1.bf16.xpose.msra.mxu0 0
      %836 = vmatprep.mubr.bf16.mxu0 0
      %837 = vmatmul.mubr.bf16.gmra.mrb[0].mxu0 %v799
      %v838 = vpop.f32.mrb[0].mxu0
      %v839 = vadd.f32 %v474, %v838
      %v840 = vpop.f32.mrb[0].mxu0
      %v841 = vpop.f32.mrb[0].mxu0
      %v842 = vpop.f32.mrb[0].mxu0
      %843 = vdwg.mxu0
      %v844 = vld [vmem:[#allocation2] sm:$0xff]
      %vm845 = vcmask 64512
      %v846 = vsel %vm845, %v517, -inf
      %847 = vmax.xlane.f32.xlu0 %v846
      %v848 = vpop.xlane.xlu0 %847
      %v849 = vsel %vm845, %v563, -inf
      %850 = vmax.xlane.f32.xlu0 %v849
      %v851 = vpop.xlane.xlu0 %850
      %v852 = vsel %vm845, %v609, -inf
      %853 = vmax.xlane.f32.xlu0 %v852
      %v854 = vpop.xlane.xlu0 %853
      %v855 = vsel %vm845, %v655, -inf
      %856 = vmax.xlane.f32.xlu0 %v855
      %v857 = vpop.xlane.xlu0 %856
      %v858 = vsel %vm845, %v701, -inf
      %859 = vmax.xlane.f32.xlu0 %v858
      %v860 = vpop.xlane.xlu0 %859
      %v861 = vsel %vm845, %v747, -inf
      %862 = vmax.xlane.f32.xlu0 %v861
      %v863 = vpop.xlane.xlu0 %862
      %v864 = vsel %vm845, %v793, -inf
      %865 = vmax.xlane.f32.xlu0 %v864
      %v866 = vpop.xlane.xlu0 %865
      %v867 = vsel %vm845, %v839, -inf
      %868 = vmax.xlane.f32.xlu0 %v867
      %v869 = vpop.xlane.xlu0 %868
      %v878 = vlaneseq
      %v879 = vand.u32 %v878, 127
      %v880 = vlaneseq
      %v881 = vshrl.u32 %v880, 7
      %v882 = vsub.s32 %v879, %v881
      %v883 = vrot.slane %v848, %v882
      %v884 = vlaneseq
      %v885 = vshrl.u32 %v884, 7
      %v886 = vsub.s32 %v879, %v885
      %v887 = vrot.slane %v851, %v886
      %v888 = vlaneseq
      %v889 = vshrl.u32 %v888, 7
      %v890 = vsub.s32 %v879, %v889
      %v891 = vrot.slane %v854, %v890
      %v892 = vlaneseq
      %v893 = vshrl.u32 %v892, 7
      %v894 = vsub.s32 %v879, %v893
      %v895 = vrot.slane %v857, %v894
      %v896 = vlaneseq
      %v897 = vshrl.u32 %v896, 7
      %v898 = vsub.s32 %v879, %v897
      %v899 = vrot.slane %v860, %v898
      %v900 = vlaneseq
      %v901 = vshrl.u32 %v900, 7
      %v902 = vsub.s32 %v879, %v901
      %v903 = vrot.slane %v863, %v902
      %v904 = vlaneseq
      %v905 = vshrl.u32 %v904, 7
      %v906 = vsub.s32 %v879, %v905
      %v907 = vrot.slane %v866, %v906
      %v908 = vlaneseq
      %v909 = vshrl.u32 %v908, 7
      %v910 = vsub.s32 %v879, %v909
      %v911 = vrot.slane %v869, %v910
      %vm912 = vcmask 1041409
      %v913 = vsel %vm912, %v887, %v883
      %vm914 = vcmask 1042434
      %v915 = vsel %vm914, %v891, %v913
      %vm916 = vcmask 1043459
      %v917 = vsel %vm916, %v895, %v915
      %vm918 = vcmask 1044484
      %v919 = vsel %vm918, %v899, %v917
      %vm920 = vcmask 1045509
      %v921 = vsel %vm920, %v903, %v919
      %vm922 = vcmask 1046534
      %v923 = vsel %vm922, %v907, %v921
      %vm924 = vcmask 1047559
      %v925 = vsel %vm924, %v911, %v923
      %v927 = vmax.f32 %v844, %v925
      %v928 = vsub.f32 %v844, %v927
      %v929 = vmul.f32 %v928, 1.442695
      %v930 = vpow.pop %v929
      %v931 = vlaneseq
      %v932 = vshrl.u32 %v931, 7
      %v933 = vsub.s32 0, %v932
      %v934 = vrot.slane %v927, %v933
      %936 = vbcast.lane.b32.xlu0 %v934, 256
      %v937 = vpop.permute.xlu0 %936
      %v938 = vlaneseq
      %v939 = vshrl.u32 %v938, 7
      %v940 = vsub.s32 1, %v939
      %v941 = vrot.slane %v927, %v940
      %943 = vbcast.lane.b32.xlu0 %v941, 256
      %v944 = vpop.permute.xlu0 %943
      %v945 = vlaneseq
      %v946 = vshrl.u32 %v945, 7
      %v947 = vsub.s32 2, %v946
      %v948 = vrot.slane %v927, %v947
      %950 = vbcast.lane.b32.xlu0 %v948, 256
      %v951 = vpop.permute.xlu0 %950
      %v952 = vlaneseq
      %v953 = vshrl.u32 %v952, 7
      %v954 = vsub.s32 3, %v953
      %v955 = vrot.slane %v927, %v954
      %957 = vbcast.lane.b32.xlu0 %v955, 256
      %v958 = vpop.permute.xlu0 %957
      %v959 = vlaneseq
      %v960 = vshrl.u32 %v959, 7
      %v961 = vsub.s32 4, %v960
      %v962 = vrot.slane %v927, %v961
      %964 = vbcast.lane.b32.xlu0 %v962, 256
      %v965 = vpop.permute.xlu0 %964
      %v966 = vlaneseq
      %v967 = vshrl.u32 %v966, 7
      %v968 = vsub.s32 5, %v967
      %v969 = vrot.slane %v927, %v968
      %971 = vbcast.lane.b32.xlu0 %v969, 256
      %v972 = vpop.permute.xlu0 %971
      %v973 = vlaneseq
      %v974 = vshrl.u32 %v973, 7
      %v975 = vsub.s32 6, %v974
      %v976 = vrot.slane %v927, %v975
      %978 = vbcast.lane.b32.xlu0 %v976, 256
      %v979 = vpop.permute.xlu0 %978
      %v980 = vlaneseq
      %v981 = vshrl.u32 %v980, 7
      %v982 = vsub.s32 7, %v981
      %v983 = vrot.slane %v927, %v982
      %985 = vbcast.lane.b32.xlu0 %v983, 256
      %v986 = vpop.permute.xlu0 %985
      %v987 = vsub.f32 %v517, %v937
      %v988 = vsub.f32 %v563, %v944
      %v989 = vsub.f32 %v609, %v951
      %v990 = vsub.f32 %v655, %v958
      %v991 = vsub.f32 %v701, %v965
      %v992 = vsub.f32 %v747, %v972
      %v993 = vsub.f32 %v793, %v979
      %v994 = vsub.f32 %v839, %v986
      %v995 = vmul.f32 %v987, 1.442695
      %v996 = vpow.pop %v995
      %v997 = vmul.f32 %v988, 1.442695
      %v998 = vpow.pop %v997
      %v999 = vmul.f32 %v989, 1.442695
      %v1000 = vpow.pop %v999
      %v1001 = vmul.f32 %v990, 1.442695
      %v1002 = vpow.pop %v1001
      %v1003 = vmul.f32 %v991, 1.442695
      %v1004 = vpow.pop %v1003
      %v1005 = vmul.f32 %v992, 1.442695
      %v1006 = vpow.pop %v1005
      %v1007 = vmul.f32 %v993, 1.442695
      %v1008 = vpow.pop %v1007
      %v1009 = vmul.f32 %v994, 1.442695
      %v1010 = vpow.pop %v1009
      %v1011 = vld [vmem:[#allocation3] sm:$0xff]
      %v1012 = vmul.f32 %v930, %v1011
      %v1013 = vsel %vm845, %v996, 0.0
      %1014 = vadd.xlane.f32.xlu0 %v1013
      %v1015 = vpop.xlane.xlu0 %1014
      %v1016 = vsel %vm845, %v998, 0.0
      %1017 = vadd.xlane.f32.xlu0 %v1016
      %v1018 = vpop.xlane.xlu0 %1017
      %v1019 = vsel %vm845, %v1000, 0.0
      %1020 = vadd.xlane.f32.xlu0 %v1019
      %v1021 = vpop.xlane.xlu0 %1020
      %v1022 = vsel %vm845, %v1002, 0.0
      %1023 = vadd.xlane.f32.xlu0 %v1022
      %v1024 = vpop.xlane.xlu0 %1023
      %v1025 = vsel %vm845, %v1004, 0.0
      %1026 = vadd.xlane.f32.xlu0 %v1025
      %v1027 = vpop.xlane.xlu0 %1026
      %v1028 = vsel %vm845, %v1006, 0.0
      %1029 = vadd.xlane.f32.xlu0 %v1028
      %v1030 = vpop.xlane.xlu0 %1029
      %v1031 = vsel %vm845, %v1008, 0.0
      %1032 = vadd.xlane.f32.xlu0 %v1031
      %v1033 = vpop.xlane.xlu0 %1032
      %v1034 = vsel %vm845, %v1010, 0.0
      %1035 = vadd.xlane.f32.xlu0 %v1034
      %v1036 = vpop.xlane.xlu0 %1035
      %v1045 = vlaneseq
      %v1046 = vshrl.u32 %v1045, 7
      %v1047 = vsub.s32 %v879, %v1046
      %v1048 = vrot.slane %v1015, %v1047
      %v1049 = vlaneseq
      %v1050 = vshrl.u32 %v1049, 7
      %v1051 = vsub.s32 %v879, %v1050
      %v1052 = vrot.slane %v1018, %v1051
      %v1053 = vlaneseq
      %v1054 = vshrl.u32 %v1053, 7
      %v1055 = vsub.s32 %v879, %v1054
      %v1056 = vrot.slane %v1021, %v1055
      %v1057 = vlaneseq
      %v1058 = vshrl.u32 %v1057, 7
      %v1059 = vsub.s32 %v879, %v1058
      %v1060 = vrot.slane %v1024, %v1059
      %v1061 = vlaneseq
      %v1062 = vshrl.u32 %v1061, 7
      %v1063 = vsub.s32 %v879, %v1062
      %v1064 = vrot.slane %v1027, %v1063
      %v1065 = vlaneseq
      %v1066 = vshrl.u32 %v1065, 7
      %v1067 = vsub.s32 %v879, %v1066
      %v1068 = vrot.slane %v1030, %v1067
      %v1069 = vlaneseq
      %v1070 = vshrl.u32 %v1069, 7
      %v1071 = vsub.s32 %v879, %v1070
      %v1072 = vrot.slane %v1033, %v1071
      %v1073 = vlaneseq
      %v1074 = vshrl.u32 %v1073, 7
      %v1075 = vsub.s32 %v879, %v1074
      %v1076 = vrot.slane %v1036, %v1075
      %v1077 = vsel %vm912, %v1052, %v1048
      %v1078 = vsel %vm914, %v1056, %v1077
      %v1079 = vsel %vm916, %v1060, %v1078
      %v1080 = vsel %vm918, %v1064, %v1079
      %v1081 = vsel %vm920, %v1068, %v1080
      %v1082 = vsel %vm922, %v1072, %v1081
      %v1083 = vsel %vm924, %v1076, %v1082
      %v1085 = vadd.f32 %v1012, %v1083
      %1086 = vst.msk [vmem:[#allocation3] sm:$0xff] %vm845, %v1085
      %1087 = vst.msk [vmem:[#allocation2] sm:$0xff] %vm845, %v927
      %v1088 = vpack.c.bf16 %v996, %v996
      %v1089 = vpack.c.bf16 %v998, %v998
      %v1090 = vpack.c.bf16 %v1000, %v1000
      %v1091 = vpack.c.bf16 %v1002, %v1002
      %v1092 = vpack.c.bf16 %v1004, %v1004
      %v1093 = vpack.c.bf16 %v1006, %v1006
      %v1094 = vpack.c.bf16 %v1008, %v1008
      %v1095 = vpack.c.bf16 %v1010, %v1010
      %v1096 = vlaneseq
      %v1097 = vshrl.u32 %v1096, 7
      %v1098 = vsub.s32 0, %v1097
      %v1099 = vrot.slane %v930, %v1098
      %1101 = vbcast.lane.b32.xlu0 %v1099, 256
      %v1102 = vpop.permute.xlu0 %1101
      %v1103 = vlaneseq
      %v1104 = vshrl.u32 %v1103, 7
      %v1105 = vsub.s32 1, %v1104
      %v1106 = vrot.slane %v930, %v1105
      %1108 = vbcast.lane.b32.xlu0 %v1106, 256
      %v1109 = vpop.permute.xlu0 %1108
      %v1110 = vlaneseq
      %v1111 = vshrl.u32 %v1110, 7
      %v1112 = vsub.s32 2, %v1111
      %v1113 = vrot.slane %v930, %v1112
      %1115 = vbcast.lane.b32.xlu0 %v1113, 256
      %v1116 = vpop.permute.xlu0 %1115
      %v1117 = vlaneseq
      %v1118 = vshrl.u32 %v1117, 7
      %v1119 = vsub.s32 3, %v1118
      %v1120 = vrot.slane %v930, %v1119
      %1122 = vbcast.lane.b32.xlu0 %v1120, 256
      %v1123 = vpop.permute.xlu0 %1122
      %v1124 = vlaneseq
      %v1125 = vshrl.u32 %v1124, 7
      %v1126 = vsub.s32 4, %v1125
      %v1127 = vrot.slane %v930, %v1126
      %1129 = vbcast.lane.b32.xlu0 %v1127, 256
      %v1130 = vpop.permute.xlu0 %1129
      %v1131 = vlaneseq
      %v1132 = vshrl.u32 %v1131, 7
      %v1133 = vsub.s32 5, %v1132
      %v1134 = vrot.slane %v930, %v1133
      %1136 = vbcast.lane.b32.xlu0 %v1134, 256
      %v1137 = vpop.permute.xlu0 %1136
      %v1138 = vlaneseq
      %v1139 = vshrl.u32 %v1138, 7
      %v1140 = vsub.s32 6, %v1139
      %v1141 = vrot.slane %v930, %v1140
      %1143 = vbcast.lane.b32.xlu0 %v1141, 256
      %v1144 = vpop.permute.xlu0 %1143
      %v1145 = vlaneseq
      %v1146 = vshrl.u32 %v1145, 7
      %v1147 = vsub.s32 7, %v1146
      %v1148 = vrot.slane %v930, %v1147
      %1150 = vbcast.lane.b32.xlu0 %v1148, 256
      %v1151 = vpop.permute.xlu0 %1150
      %v1152 = vld [vmem:[#allocation4] sm:$0xff]
      %v1153 = vld [vmem:[#allocation4 + $0x8] sm:$0xff]
      %v1154 = vld [vmem:[#allocation4 + $0x10] sm:$0xff]
      %v1155 = vld [vmem:[#allocation4 + $0x18] sm:$0xff]
      %v1156 = vld [vmem:[#allocation4 + $0x20] sm:$0xff]
      %v1157 = vld [vmem:[#allocation4 + $0x28] sm:$0xff]
      %v1158 = vld [vmem:[#allocation4 + $0x30] sm:$0xff]
      %v1159 = vld [vmem:[#allocation4 + $0x38] sm:$0xff]
      %v1160 = vmul.f32 %v1102, %v1152
      %v1161 = vmul.f32 %v1109, %v1153
      %v1162 = vmul.f32 %v1116, %v1154
      %v1163 = vmul.f32 %v1123, %v1155
      %v1164 = vmul.f32 %v1130, %v1156
      %v1165 = vmul.f32 %v1137, %v1157
      %v1166 = vmul.f32 %v1144, %v1158
      %v1167 = vmul.f32 %v1151, %v1159
      %v1169 = vsel %vm845, %v1088, 0
      %vm1171 = vcmask 1043456
      %v1173 = vsel %vm1171, %v443, 0
      %1175 = vmatprep.subr.bf16.mxu0 0
      %1176 = vmatpush1.bf16.msra.mxu0 %v1173
      %1177 = vmatprep.subr.bf16.mxu0 0
      %1178 = vmatpush1.bf16.msra.mxu0 0
      %1179 = vmatprep.subr.bf16.mxu0 0
      %1180 = vmatpush1.bf16.msra.mxu0 0
      %1181 = vmatprep.subr.bf16.mxu0 0
      %1182 = vmatpush1.bf16.msra.mxu0 0
      %1183 = vmatprep.subr.bf16.mxu0 0
      %1184 = vmatpush1.bf16.msra.mxu0 0
      %1185 = vmatprep.subr.bf16.mxu0 0
      %1186 = vmatpush1.bf16.msra.mxu0 0
      %1187 = vmatprep.subr.bf16.mxu0 0
      %1188 = vmatpush1.bf16.msra.mxu0 0
      %1189 = vmatprep.subr.bf16.mxu0 0
      %1190 = vmatpush1.bf16.msra.mxu0 0
      %1191 = vmatprep.subr.bf16.mxu0 0
      %1192 = vmatpush1.bf16.msra.mxu0 0
      %1193 = vmatprep.subr.bf16.mxu0 0
      %1194 = vmatpush1.bf16.msra.mxu0 0
      %1195 = vmatprep.subr.bf16.mxu0 0
      %1196 = vmatpush1.bf16.msra.mxu0 0
      %1197 = vmatprep.subr.bf16.mxu0 0
      %1198 = vmatpush1.bf16.msra.mxu0 0
      %1199 = vmatprep.subr.bf16.mxu0 0
      %1200 = vmatpush1.bf16.msra.mxu0 0
      %1201 = vmatprep.subr.bf16.mxu0 0
      %1202 = vmatpush1.bf16.msra.mxu0 0
      %1203 = vmatprep.subr.bf16.mxu0 0
      %1204 = vmatpush1.bf16.msra.mxu0 0
      %1205 = vmatprep.subr.bf16.mxu0 0
      %1206 = vmatpush1.bf16.msra.mxu0 0
      %1207 = vmatprep.mubr.bf16.mxu0 0
      %1208 = vmatmul.mubr.bf16.gmra.mrb[0].mxu0 %v1169
      %v1209 = vpop.f32.mrb[0].mxu0
      %v1210 = vadd.f32 0.0, %v1209
      %v1211 = vpop.f32.mrb[0].mxu0
      %v1212 = vpop.f32.mrb[0].mxu0
      %v1213 = vpop.f32.mrb[0].mxu0
      %1214 = vdwg.mxu0
      %v1216 = vsel %vm845, %v1089, 0
      %v1219 = vsel %vm1171, %v444, 0
      %1221 = vmatprep.subr.bf16.mxu0 0
      %1222 = vmatpush1.bf16.msra.mxu0 %v1219
      %1223 = vmatprep.subr.bf16.mxu0 0
      %1224 = vmatpush1.bf16.msra.mxu0 0
      %1225 = vmatprep.subr.bf16.mxu0 0
      %1226 = vmatpush1.bf16.msra.mxu0 0
      %1227 = vmatprep.subr.bf16.mxu0 0
      %1228 = vmatpush1.bf16.msra.mxu0 0
      %1229 = vmatprep.subr.bf16.mxu0 0
      %1230 = vmatpush1.bf16.msra.mxu0 0
      %1231 = vmatprep.subr.bf16.mxu0 0
      %1232 = vmatpush1.bf16.msra.mxu0 0
      %1233 = vmatprep.subr.bf16.mxu0 0
      %1234 = vmatpush1.bf16.msra.mxu0 0
      %1235 = vmatprep.subr.bf16.mxu0 0
      %1236 = vmatpush1.bf16.msra.mxu0 0
      %1237 = vmatprep.subr.bf16.mxu0 0
      %1238 = vmatpush1.bf16.msra.mxu0 0
      %1239 = vmatprep.subr.bf16.mxu0 0
      %1240 = vmatpush1.bf16.msra.mxu0 0
      %1241 = vmatprep.subr.bf16.mxu0 0
      %1242 = vmatpush1.bf16.msra.mxu0 0
      %1243 = vmatprep.subr.bf16.mxu0 0
      %1244 = vmatpush1.bf16.msra.mxu0 0
      %1245 = vmatprep.subr.bf16.mxu0 0
      %1246 = vmatpush1.bf16.msra.mxu0 0
      %1247 = vmatprep.subr.bf16.mxu0 0
      %1248 = vmatpush1.bf16.msra.mxu0 0
      %1249 = vmatprep.subr.bf16.mxu0 0
      %1250 = vmatpush1.bf16.msra.mxu0 0
      %1251 = vmatprep.subr.bf16.mxu0 0
      %1252 = vmatpush1.bf16.msra.mxu0 0
      %1253 = vmatprep.mubr.bf16.mxu0 0
      %1254 = vmatmul.mubr.bf16.gmra.mrb[0].mxu0 %v1216
      %v1255 = vpop.f32.mrb[0].mxu0
      %v1256 = vadd.f32 0.0, %v1255
      %v1257 = vpop.f32.mrb[0].mxu0
      %v1258 = vpop.f32.mrb[0].mxu0
      %v1259 = vpop.f32.mrb[0].mxu0
      %1260 = vdwg.mxu0
      %v1262 = vsel %vm845, %v1090, 0
      %v1265 = vsel %vm1171, %v445, 0
      %1267 = vmatprep.subr.bf16.mxu0 0
      %1268 = vmatpush1.bf16.msra.mxu0 %v1265
      %1269 = vmatprep.subr.bf16.mxu0 0
      %1270 = vmatpush1.bf16.msra.mxu0 0
      %1271 = vmatprep.subr.bf16.mxu0 0
      %1272 = vmatpush1.bf16.msra.mxu0 0
      %1273 = vmatprep.subr.bf16.mxu0 0
      %1274 = vmatpush1.bf16.msra.mxu0 0
      %1275 = vmatprep.subr.bf16.mxu0 0
      %1276 = vmatpush1.bf16.msra.mxu0 0
      %1277 = vmatprep.subr.bf16.mxu0 0
      %1278 = vmatpush1.bf16.msra.mxu0 0
      %1279 = vmatprep.subr.bf16.mxu0 0
      %1280 = vmatpush1.bf16.msra.mxu0 0
      %1281 = vmatprep.subr.bf16.mxu0 0
      %1282 = vmatpush1.bf16.msra.mxu0 0
      %1283 = vmatprep.subr.bf16.mxu0 0
      %1284 = vmatpush1.bf16.msra.mxu0 0
      %1285 = vmatprep.subr.bf16.mxu0 0
      %1286 = vmatpush1.bf16.msra.mxu0 0
      %1287 = vmatprep.subr.bf16.mxu0 0
      %1288 = vmatpush1.bf16.msra.mxu0 0
      %1289 = vmatprep.subr.bf16.mxu0 0
      %1290 = vmatpush1.bf16.msra.mxu0 0
      %1291 = vmatprep.subr.bf16.mxu0 0
      %1292 = vmatpush1.bf16.msra.mxu0 0
      %1293 = vmatprep.subr.bf16.mxu0 0
      %1294 = vmatpush1.bf16.msra.mxu0 0
      %1295 = vmatprep.subr.bf16.mxu0 0
      %1296 = vmatpush1.bf16.msra.mxu0 0
      %1297 = vmatprep.subr.bf16.mxu0 0
      %1298 = vmatpush1.bf16.msra.mxu0 0
      %1299 = vmatprep.mubr.bf16.mxu0 0
      %1300 = vmatmul.mubr.bf16.gmra.mrb[0].mxu0 %v1262
      %v1301 = vpop.f32.mrb[0].mxu0
      %v1302 = vadd.f32 0.0, %v1301
      %v1303 = vpop.f32.mrb[0].mxu0
      %v1304 = vpop.f32.mrb[0].mxu0
      %v1305 = vpop.f32.mrb[0].mxu0
      %1306 = vdwg.mxu0
      %v1308 = vsel %vm845, %v1091, 0
      %v1311 = vsel %vm1171, %v446, 0
      %1313 = vmatprep.subr.bf16.mxu0 0
      %1314 = vmatpush1.bf16.msra.mxu0 %v1311
      %1315 = vmatprep.subr.bf16.mxu0 0
      %1316 = vmatpush1.bf16.msra.mxu0 0
      %1317 = vmatprep.subr.bf16.mxu0 0
      %1318 = vmatpush1.bf16.msra.mxu0 0
      %1319 = vmatprep.subr.bf16.mxu0 0
      %1320 = vmatpush1.bf16.msra.mxu0 0
      %1321 = vmatprep.subr.bf16.mxu0 0
      %1322 = vmatpush1.bf16.msra.mxu0 0
      %1323 = vmatprep.subr.bf16.mxu0 0
      %1324 = vmatpush1.bf16.msra.mxu0 0
      %1325 = vmatprep.subr.bf16.mxu0 0
      %1326 = vmatpush1.bf16.msra.mxu0 0
      %1327 = vmatprep.subr.bf16.mxu0 0
      %1328 = vmatpush1.bf16.msra.mxu0 0
      %1329 = vmatprep.subr.bf16.mxu0 0
      %1330 = vmatpush1.bf16.msra.mxu0 0
      %1331 = vmatprep.subr.bf16.mxu0 0
      %1332 = vmatpush1.bf16.msra.mxu0 0
      %1333 = vmatprep.subr.bf16.mxu0 0
      %1334 = vmatpush1.bf16.msra.mxu0 0
      %1335 = vmatprep.subr.bf16.mxu0 0
      %1336 = vmatpush1.bf16.msra.mxu0 0
      %1337 = vmatprep.subr.bf16.mxu0 0
      %1338 = vmatpush1.bf16.msra.mxu0 0
      %1339 = vmatprep.subr.bf16.mxu0 0
      %1340 = vmatpush1.bf16.msra.mxu0 0
      %1341 = vmatprep.subr.bf16.mxu0 0
      %1342 = vmatpush1.bf16.msra.mxu0 0
      %1343 = vmatprep.subr.bf16.mxu0 0
      %1344 = vmatpush1.bf16.msra.mxu0 0
      %1345 = vmatprep.mubr.bf16.mxu0 0
      %1346 = vmatmul.mubr.bf16.gmra.mrb[0].mxu0 %v1308
      %v1347 = vpop.f32.mrb[0].mxu0
      %v1348 = vadd.f32 0.0, %v1347
      %v1349 = vpop.f32.mrb[0].mxu0
      %v1350 = vpop.f32.mrb[0].mxu0
      %v1351 = vpop.f32.mrb[0].mxu0
      %1352 = vdwg.mxu0
      %v1354 = vsel %vm845, %v1092, 0
      %v1357 = vsel %vm1171, %v447, 0
      %1359 = vmatprep.subr.bf16.mxu0 0
      %1360 = vmatpush1.bf16.msra.mxu0 %v1357
      %1361 = vmatprep.subr.bf16.mxu0 0
      %1362 = vmatpush1.bf16.msra.mxu0 0
      %1363 = vmatprep.subr.bf16.mxu0 0
      %1364 = vmatpush1.bf16.msra.mxu0 0
      %1365 = vmatprep.subr.bf16.mxu0 0
      %1366 = vmatpush1.bf16.msra.mxu0 0
      %1367 = vmatprep.subr.bf16.mxu0 0
      %1368 = vmatpush1.bf16.msra.mxu0 0
      %1369 = vmatprep.subr.bf16.mxu0 0
      %1370 = vmatpush1.bf16.msra.mxu0 0
      %1371 = vmatprep.subr.bf16.mxu0 0
      %1372 = vmatpush1.bf16.msra.mxu0 0
      %1373 = vmatprep.subr.bf16.mxu0 0
      %1374 = vmatpush1.bf16.msra.mxu0 0
      %1375 = vmatprep.subr.bf16.mxu0 0
      %1376 = vmatpush1.bf16.msra.mxu0 0
      %1377 = vmatprep.subr.bf16.mxu0 0
      %1378 = vmatpush1.bf16.msra.mxu0 0
      %1379 = vmatprep.subr.bf16.mxu0 0
      %1380 = vmatpush1.bf16.msra.mxu0 0
      %1381 = vmatprep.subr.bf16.mxu0 0
      %1382 = vmatpush1.bf16.msra.mxu0 0
      %1383 = vmatprep.subr.bf16.mxu0 0
      %1384 = vmatpush1.bf16.msra.mxu0 0
      %1385 = vmatprep.subr.bf16.mxu0 0
      %1386 = vmatpush1.bf16.msra.mxu0 0
      %1387 = vmatprep.subr.bf16.mxu0 0
      %1388 = vmatpush1.bf16.msra.mxu0 0
      %1389 = vmatprep.subr.bf16.mxu0 0
      %1390 = vmatpush1.bf16.msra.mxu0 0
      %1391 = vmatprep.mubr.bf16.mxu0 0
      %1392 = vmatmul.mubr.bf16.gmra.mrb[0].mxu0 %v1354
      %v1393 = vpop.f32.mrb[0].mxu0
      %v1394 = vadd.f32 0.0, %v1393
      %v1395 = vpop.f32.mrb[0].mxu0
      %v1396 = vpop.f32.mrb[0].mxu0
      %v1397 = vpop.f32.mrb[0].mxu0
      %1398 = vdwg.mxu0
      %v1400 = vsel %vm845, %v1093, 0
      %v1403 = vsel %vm1171, %v448, 0
      %1405 = vmatprep.subr.bf16.mxu0 0
      %1406 = vmatpush1.bf16.msra.mxu0 %v1403
      %1407 = vmatprep.subr.bf16.mxu0 0
      %1408 = vmatpush1.bf16.msra.mxu0 0
      %1409 = vmatprep.subr.bf16.mxu0 0
      %1410 = vmatpush1.bf16.msra.mxu0 0
      %1411 = vmatprep.subr.bf16.mxu0 0
      %1412 = vmatpush1.bf16.msra.mxu0 0
      %1413 = vmatprep.subr.bf16.mxu0 0
      %1414 = vmatpush1.bf16.msra.mxu0 0
      %1415 = vmatprep.subr.bf16.mxu0 0
      %1416 = vmatpush1.bf16.msra.mxu0 0
      %1417 = vmatprep.subr.bf16.mxu0 0
      %1418 = vmatpush1.bf16.msra.mxu0 0
      %1419 = vmatprep.subr.bf16.mxu0 0
      %1420 = vmatpush1.bf16.msra.mxu0 0
      %1421 = vmatprep.subr.bf16.mxu0 0
      %1422 = vmatpush1.bf16.msra.mxu0 0
      %1423 = vmatprep.subr.bf16.mxu0 0
      %1424 = vmatpush1.bf16.msra.mxu0 0
      %1425 = vmatprep.subr.bf16.mxu0 0
      %1426 = vmatpush1.bf16.msra.mxu0 0
      %1427 = vmatprep.subr.bf16.mxu0 0
      %1428 = vmatpush1.bf16.msra.mxu0 0
      %1429 = vmatprep.subr.bf16.mxu0 0
      %1430 = vmatpush1.bf16.msra.mxu0 0
      %1431 = vmatprep.subr.bf16.mxu0 0
      %1432 = vmatpush1.bf16.msra.mxu0 0
      %1433 = vmatprep.subr.bf16.mxu0 0
      %1434 = vmatpush1.bf16.msra.mxu0 0
      %1435 = vmatprep.subr.bf16.mxu0 0
      %1436 = vmatpush1.bf16.msra.mxu0 0
      %1437 = vmatprep.mubr.bf16.mxu0 0
      %1438 = vmatmul.mubr.bf16.gmra.mrb[0].mxu0 %v1400
      %v1439 = vpop.f32.mrb[0].mxu0
      %v1440 = vadd.f32 0.0, %v1439
      %v1441 = vpop.f32.mrb[0].mxu0
      %v1442 = vpop.f32.mrb[0].mxu0
      %v1443 = vpop.f32.mrb[0].mxu0
      %1444 = vdwg.mxu0
      %v1446 = vsel %vm845, %v1094, 0
      %v1449 = vsel %vm1171, %v449, 0
      %1451 = vmatprep.subr.bf16.mxu0 0
      %1452 = vmatpush1.bf16.msra.mxu0 %v1449
      %1453 = vmatprep.subr.bf16.mxu0 0
      %1454 = vmatpush1.bf16.msra.mxu0 0
      %1455 = vmatprep.subr.bf16.mxu0 0
      %1456 = vmatpush1.bf16.msra.mxu0 0
      %1457 = vmatprep.subr.bf16.mxu0 0
      %1458 = vmatpush1.bf16.msra.mxu0 0
      %1459 = vmatprep.subr.bf16.mxu0 0
      %1460 = vmatpush1.bf16.msra.mxu0 0
      %1461 = vmatprep.subr.bf16.mxu0 0
      %1462 = vmatpush1.bf16.msra.mxu0 0
      %1463 = vmatprep.subr.bf16.mxu0 0
      %1464 = vmatpush1.bf16.msra.mxu0 0
      %1465 = vmatprep.subr.bf16.mxu0 0
      %1466 = vmatpush1.bf16.msra.mxu0 0
      %1467 = vmatprep.subr.bf16.mxu0 0
      %1468 = vmatpush1.bf16.msra.mxu0 0
      %1469 = vmatprep.subr.bf16.mxu0 0
      %1470 = vmatpush1.bf16.msra.mxu0 0
      %1471 = vmatprep.subr.bf16.mxu0 0
      %1472 = vmatpush1.bf16.msra.mxu0 0
      %1473 = vmatprep.subr.bf16.mxu0 0
      %1474 = vmatpush1.bf16.msra.mxu0 0
      %1475 = vmatprep.subr.bf16.mxu0 0
      %1476 = vmatpush1.bf16.msra.mxu0 0
      %1477 = vmatprep.subr.bf16.mxu0 0
      %1478 = vmatpush1.bf16.msra.mxu0 0
      %1479 = vmatprep.subr.bf16.mxu0 0
      %1480 = vmatpush1.bf16.msra.mxu0 0
      %1481 = vmatprep.subr.bf16.mxu0 0
      %1482 = vmatpush1.bf16.msra.mxu0 0
      %1483 = vmatprep.mubr.bf16.mxu0 0
      %1484 = vmatmul.mubr.bf16.gmra.mrb[0].mxu0 %v1446
      %v1485 = vpop.f32.mrb[0].mxu0
      %v1486 = vadd.f32 0.0, %v1485
      %v1487 = vpop.f32.mrb[0].mxu0
      %v1488 = vpop.f32.mrb[0].mxu0
      %v1489 = vpop.f32.mrb[0].mxu0
      %1490 = vdwg.mxu0
      %v1492 = vsel %vm845, %v1095, 0
      %v1495 = vsel %vm1171, %v450, 0
      %1497 = vmatprep.subr.bf16.mxu0 0
      %1498 = vmatpush1.bf16.msra.mxu0 %v1495
      %1499 = vmatprep.subr.bf16.mxu0 0
      %1500 = vmatpush1.bf16.msra.mxu0 0
      %1501 = vmatprep.subr.bf16.mxu0 0
      %1502 = vmatpush1.bf16.msra.mxu0 0
      %1503 = vmatprep.subr.bf16.mxu0 0
      %1504 = vmatpush1.bf16.msra.mxu0 0
      %1505 = vmatprep.subr.bf16.mxu0 0
      %1506 = vmatpush1.bf16.msra.mxu0 0
      %1507 = vmatprep.subr.bf16.mxu0 0
      %1508 = vmatpush1.bf16.msra.mxu0 0
      %1509 = vmatprep.subr.bf16.mxu0 0
      %1510 = vmatpush1.bf16.msra.mxu0 0
      %1511 = vmatprep.subr.bf16.mxu0 0
      %1512 = vmatpush1.bf16.msra.mxu0 0
      %1513 = vmatprep.subr.bf16.mxu0 0
      %1514 = vmatpush1.bf16.msra.mxu0 0
      %1515 = vmatprep.subr.bf16.mxu0 0
      %1516 = vmatpush1.bf16.msra.mxu0 0
      %1517 = vmatprep.subr.bf16.mxu0 0
      %1518 = vmatpush1.bf16.msra.mxu0 0
      %1519 = vmatprep.subr.bf16.mxu0 0
      %1520 = vmatpush1.bf16.msra.mxu0 0
      %1521 = vmatprep.subr.bf16.mxu0 0
      %1522 = vmatpush1.bf16.msra.mxu0 0
      %1523 = vmatprep.subr.bf16.mxu0 0
      %1524 = vmatpush1.bf16.msra.mxu0 0
      %1525 = vmatprep.subr.bf16.mxu0 0
      %1526 = vmatpush1.bf16.msra.mxu0 0
      %1527 = vmatprep.subr.bf16.mxu0 0
      %1528 = vmatpush1.bf16.msra.mxu0 0
      %1529 = vmatprep.mubr.bf16.mxu0 0
      %1530 = vmatmul.mubr.bf16.gmra.mrb[0].mxu0 %v1492
      %v1531 = vpop.f32.mrb[0].mxu0
      %v1532 = vadd.f32 0.0, %v1531
      %v1533 = vpop.f32.mrb[0].mxu0
      %v1534 = vpop.f32.mrb[0].mxu0
      %v1535 = vpop.f32.mrb[0].mxu0
      %1536 = vdwg.mxu0
      %v1537 = vadd.f32 %v1160, %v1210
      %v1538 = vadd.f32 %v1161, %v1256
      %v1539 = vadd.f32 %v1162, %v1302
      %v1540 = vadd.f32 %v1163, %v1348
      %v1541 = vadd.f32 %v1164, %v1394
      %v1542 = vadd.f32 %v1165, %v1440
      %v1543 = vadd.f32 %v1166, %v1486
      %v1544 = vadd.f32 %v1167, %v1532
      %vm1545 = vcmask 228352
      %1546 = vst.msk [vmem:[#allocation4] sm:$0xff] %vm1545, %v1537
      %1547 = vst.msk [vmem:[#allocation4 + $0x8] sm:$0xff] %vm1545, %v1538
      %1548 = vst.msk [vmem:[#allocation4 + $0x10] sm:$0xff] %vm1545, %v1539
      %1549 = vst.msk [vmem:[#allocation4 + $0x18] sm:$0xff] %vm1545, %v1540
      %1550 = vst.msk [vmem:[#allocation4 + $0x20] sm:$0xff] %vm1545, %v1541
      %1551 = vst.msk [vmem:[#allocation4 + $0x28] sm:$0xff] %vm1545, %v1542
      %1552 = vst.msk [vmem:[#allocation4 + $0x30] sm:$0xff] %vm1545, %v1543
      %1553 = vst.msk [vmem:[#allocation4 + $0x38] sm:$0xff] %vm1545, %v1544
      %v1555 = vcombine.high %v996, %v996
      %v1557 = vunpack.c.l.s4 1966171168
      %v1558 = vunpack.c.0.s8 %v1557
      %v1559 = vlaneseq
      %v1560 = vshrl.u32 %v1559, 7
      %v1561 = vsub.s32 %v1558, %v1560
      %v1562 = vrot.slane %v996, %v1561
      %v1564 = vunpack.c.l.s4 1966171168
      %v1565 = vunpack.c.0.s8 %v1564
      %v1566 = vlaneseq
      %v1567 = vshrl.u32 %v1566, 7
      %v1568 = vsub.s32 %v1565, %v1567
      %v1569 = vrot.slane %v1555, %v1568
      %v1570 = vcombine.high %v1562, %v1562
      %v1571 = vcombine.high %v1569, %v1569
      %v1573 = vunpack.c.l.s4 1966171168
      %v1574 = vunpack.c.0.s8 %v1573
      %v1575 = vlaneseq
      %v1576 = vshrl.u32 %v1575, 7
      %v1577 = vsub.s32 %v1574, %v1576
      %v1578 = vrot.slane %v1562, %v1577
      %v1580 = vunpack.c.l.s4 1966171168
      %v1581 = vunpack.c.0.s8 %v1580
      %v1582 = vlaneseq
      %v1583 = vshrl.u32 %v1582, 7
      %v1584 = vsub.s32 %v1581, %v1583
      %v1585 = vrot.slane %v1569, %v1584
      %v1587 = vunpack.c.l.s4 1966171168
      %v1588 = vunpack.c.0.s8 %v1587
      %v1589 = vlaneseq
      %v1590 = vshrl.u32 %v1589, 7
      %v1591 = vsub.s32 %v1588, %v1590
      %v1592 = vrot.slane %v1570, %v1591
      %v1594 = vunpack.c.l.s4 1966171168
      %v1595 = vunpack.c.0.s8 %v1594
      %v1596 = vlaneseq
      %v1597 = vshrl.u32 %v1596, 7
      %v1598 = vsub.s32 %v1595, %v1597
      %v1599 = vrot.slane %v1571, %v1598
      %v1600 = vcombine.high %v1578, %v1578
      %v1601 = vcombine.high %v1585, %v1585
      %v1602 = vcombine.high %v1592, %v1592
      %v1603 = vcombine.high %v1599, %v1599
      %vm1612 = vcmask 57344
      %1613 = vst.msk [vmem:[#allocation6] sm:$0x1] %vm1612, %v1578
      %1614 = vst.msk [vmem:[#allocation6 + $0x8] sm:$0x1] %vm1612, %v1592
      %1615 = vst.msk [vmem:[#allocation6 + $0x10] sm:$0x1] %vm1612, %v1600
      %1616 = vst.msk [vmem:[#allocation6 + $0x18] sm:$0x1] %vm1612, %v1602
      %1617 = vst.msk [vmem:[#allocation6 + $0x20] sm:$0x1] %vm1612, %v1585
      %1618 = vst.msk [vmem:[#allocation6 + $0x28] sm:$0x1] %vm1612, %v1599
      %1619 = vst.msk [vmem:[#allocation6 + $0x30] sm:$0x1] %vm1612, %v1601
      %1620 = vst.msk [vmem:[#allocation6 + $0x38] sm:$0x1] %vm1612, %v1603
      %v1622 = vcombine.high %v998, %v998
      %v1624 = vunpack.c.l.s4 1966171168
      %v1625 = vunpack.c.0.s8 %v1624
      %v1626 = vlaneseq
      %v1627 = vshrl.u32 %v1626, 7
      %v1628 = vsub.s32 %v1625, %v1627
      %v1629 = vrot.slane %v998, %v1628
      %v1631 = vunpack.c.l.s4 1966171168
      %v1632 = vunpack.c.0.s8 %v1631
      %v1633 = vlaneseq
      %v1634 = vshrl.u32 %v1633, 7
      %v1635 = vsub.s32 %v1632, %v1634
      %v1636 = vrot.slane %v1622, %v1635
      %v1637 = vcombine.high %v1629, %v1629
      %v1638 = vcombine.high %v1636, %v1636
      %v1640 = vunpack.c.l.s4 1966171168
      %v1641 = vunpack.c.0.s8 %v1640
      %v1642 = vlaneseq
      %v1643 = vshrl.u32 %v1642, 7
      %v1644 = vsub.s32 %v1641, %v1643
      %v1645 = vrot.slane %v1629, %v1644
      %v1647 = vunpack.c.l.s4 1966171168
      %v1648 = vunpack.c.0.s8 %v1647
      %v1649 = vlaneseq
      %v1650 = vshrl.u32 %v1649, 7
      %v1651 = vsub.s32 %v1648, %v1650
      %v1652 = vrot.slane %v1636, %v1651
      %v1654 = vunpack.c.l.s4 1966171168
      %v1655 = vunpack.c.0.s8 %v1654
      %v1656 = vlaneseq
      %v1657 = vshrl.u32 %v1656, 7
      %v1658 = vsub.s32 %v1655, %v1657
      %v1659 = vrot.slane %v1637, %v1658
      %v1661 = vunpack.c.l.s4 1966171168
      %v1662 = vunpack.c.0.s8 %v1661
      %v1663 = vlaneseq
      %v1664 = vshrl.u32 %v1663, 7
      %v1665 = vsub.s32 %v1662, %v1664
      %v1666 = vrot.slane %v1638, %v1665
      %v1667 = vcombine.high %v1645, %v1645
      %v1668 = vcombine.high %v1652, %v1652
      %v1669 = vcombine.high %v1659, %v1659
      %v1670 = vcombine.high %v1666, %v1666
      %1679 = vst.msk [vmem:[#allocation6 + $0x1] sm:$0x1] %vm1612, %v1645
      %1680 = vst.msk [vmem:[#allocation6 + $0x9] sm:$0x1] %vm1612, %v1659
      %1681 = vst.msk [vmem:[#allocation6 + $0x11] sm:$0x1] %vm1612, %v1667
      %1682 = vst.msk [vmem:[#allocation6 + $0x19] sm:$0x1] %vm1612, %v1669
      %1683 = vst.msk [vmem:[#allocation6 + $0x21] sm:$0x1] %vm1612, %v1652
      %1684 = vst.msk [vmem:[#allocation6 + $0x29] sm:$0x1] %vm1612, %v1666
      %1685 = vst.msk [vmem:[#allocation6 + $0x31] sm:$0x1] %vm1612, %v1668
      %1686 = vst.msk [vmem:[#allocation6 + $0x39] sm:$0x1] %vm1612, %v1670
      %v1688 = vcombine.high %v1000, %v1000
      %v1690 = vunpack.c.l.s4 1966171168
      %v1691 = vunpack.c.0.s8 %v1690
      %v1692 = vlaneseq
      %v1693 = vshrl.u32 %v1692, 7
      %v1694 = vsub.s32 %v1691, %v1693
      %v1695 = vrot.slane %v1000, %v1694
      %v1697 = vunpack.c.l.s4 1966171168
      %v1698 = vunpack.c.0.s8 %v1697
      %v1699 = vlaneseq
      %v1700 = vshrl.u32 %v1699, 7
      %v1701 = vsub.s32 %v1698, %v1700
      %v1702 = vrot.slane %v1688, %v1701
      %v1703 = vcombine.high %v1695, %v1695
      %v1704 = vcombine.high %v1702, %v1702
      %v1706 = vunpack.c.l.s4 1966171168
      %v1707 = vunpack.c.0.s8 %v1706
      %v1708 = vlaneseq
      %v1709 = vshrl.u32 %v1708, 7
      %v1710 = vsub.s32 %v1707, %v1709
      %v1711 = vrot.slane %v1695, %v1710
      %v1713 = vunpack.c.l.s4 1966171168
      %v1714 = vunpack.c.0.s8 %v1713
      %v1715 = vlaneseq
      %v1716 = vshrl.u32 %v1715, 7
      %v1717 = vsub.s32 %v1714, %v1716
      %v1718 = vrot.slane %v1702, %v1717
      %v1720 = vunpack.c.l.s4 1966171168
      %v1721 = vunpack.c.0.s8 %v1720
      %v1722 = vlaneseq
      %v1723 = vshrl.u32 %v1722, 7
      %v1724 = vsub.s32 %v1721, %v1723
      %v1725 = vrot.slane %v1703, %v1724
      %v1727 = vunpack.c.l.s4 1966171168
      %v1728 = vunpack.c.0.s8 %v1727
      %v1729 = vlaneseq
      %v1730 = vshrl.u32 %v1729, 7
      %v1731 = vsub.s32 %v1728, %v1730
      %v1732 = vrot.slane %v1704, %v1731
      %v1733 = vcombine.high %v1711, %v1711
      %v1734 = vcombine.high %v1718, %v1718
      %v1735 = vcombine.high %v1725, %v1725
      %v1736 = vcombine.high %v1732, %v1732
      %1745 = vst.msk [vmem:[#allocation6 + $0x2] sm:$0x1] %vm1612, %v1711
      %1746 = vst.msk [vmem:[#allocation6 + $0xa] sm:$0x1] %vm1612, %v1725
      %1747 = vst.msk [vmem:[#allocation6 + $0x12] sm:$0x1] %vm1612, %v1733
      %1748 = vst.msk [vmem:[#allocation6 + $0x1a] sm:$0x1] %vm1612, %v1735
      %1749 = vst.msk [vmem:[#allocation6 + $0x22] sm:$0x1] %vm1612, %v1718
      %1750 = vst.msk [vmem:[#allocation6 + $0x2a] sm:$0x1] %vm1612, %v1732
      %1751 = vst.msk [vmem:[#allocation6 + $0x32] sm:$0x1] %vm1612, %v1734
      %1752 = vst.msk [vmem:[#allocation6 + $0x3a] sm:$0x1] %vm1612, %v1736
      %v1754 = vcombine.high %v1002, %v1002
      %v1756 = vunpack.c.l.s4 1966171168
      %v1757 = vunpack.c.0.s8 %v1756
      %v1758 = vlaneseq
      %v1759 = vshrl.u32 %v1758, 7
      %v1760 = vsub.s32 %v1757, %v1759
      %v1761 = vrot.slane %v1002, %v1760
      %v1763 = vunpack.c.l.s4 1966171168
      %v1764 = vunpack.c.0.s8 %v1763
      %v1765 = vlaneseq
      %v1766 = vshrl.u32 %v1765, 7
      %v1767 = vsub.s32 %v1764, %v1766
      %v1768 = vrot.slane %v1754, %v1767
      %v1769 = vcombine.high %v1761, %v1761
      %v1770 = vcombine.high %v1768, %v1768
      %v1772 = vunpack.c.l.s4 1966171168
      %v1773 = vunpack.c.0.s8 %v1772
      %v1774 = vlaneseq
      %v1775 = vshrl.u32 %v1774, 7
      %v1776 = vsub.s32 %v1773, %v1775
      %v1777 = vrot.slane %v1761, %v1776
      %v1779 = vunpack.c.l.s4 1966171168
      %v1780 = vunpack.c.0.s8 %v1779
      %v1781 = vlaneseq
      %v1782 = vshrl.u32 %v1781, 7
      %v1783 = vsub.s32 %v1780, %v1782
      %v1784 = vrot.slane %v1768, %v1783
      %v1786 = vunpack.c.l.s4 1966171168
      %v1787 = vunpack.c.0.s8 %v1786
      %v1788 = vlaneseq
      %v1789 = vshrl.u32 %v1788, 7
      %v1790 = vsub.s32 %v1787, %v1789
      %v1791 = vrot.slane %v1769, %v1790
      %v1793 = vunpack.c.l.s4 1966171168
      %v1794 = vunpack.c.0.s8 %v1793
      %v1795 = vlaneseq
      %v1796 = vshrl.u32 %v1795, 7
      %v1797 = vsub.s32 %v1794, %v1796
      %v1798 = vrot.slane %v1770, %v1797
      %v1799 = vcombine.high %v1777, %v1777
      %v1800 = vcombine.high %v1784, %v1784
      %v1801 = vcombine.high %v1791, %v1791
      %v1802 = vcombine.high %v1798, %v1798
      %1811 = vst.msk [vmem:[#allocation6 + $0x3] sm:$0x1] %vm1612, %v1777
      %1812 = vst.msk [vmem:[#allocation6 + $0xb] sm:$0x1] %vm1612, %v1791
      %1813 = vst.msk [vmem:[#allocation6 + $0x13] sm:$0x1] %vm1612, %v1799
      %1814 = vst.msk [vmem:[#allocation6 + $0x1b] sm:$0x1] %vm1612, %v1801
      %1815 = vst.msk [vmem:[#allocation6 + $0x23] sm:$0x1] %vm1612, %v1784
      %1816 = vst.msk [vmem:[#allocation6 + $0x2b] sm:$0x1] %vm1612, %v1798
      %1817 = vst.msk [vmem:[#allocation6 + $0x33] sm:$0x1] %vm1612, %v1800
      %1818 = vst.msk [vmem:[#allocation6 + $0x3b] sm:$0x1] %vm1612, %v1802
      %v1820 = vcombine.high %v1004, %v1004
      %v1822 = vunpack.c.l.s4 1966171168
      %v1823 = vunpack.c.0.s8 %v1822
      %v1824 = vlaneseq
      %v1825 = vshrl.u32 %v1824, 7
      %v1826 = vsub.s32 %v1823, %v1825
      %v1827 = vrot.slane %v1004, %v1826
      %v1829 = vunpack.c.l.s4 1966171168
      %v1830 = vunpack.c.0.s8 %v1829
      %v1831 = vlaneseq
      %v1832 = vshrl.u32 %v1831, 7
      %v1833 = vsub.s32 %v1830, %v1832
      %v1834 = vrot.slane %v1820, %v1833
      %v1835 = vcombine.high %v1827, %v1827
      %v1836 = vcombine.high %v1834, %v1834
      %v1838 = vunpack.c.l.s4 1966171168
      %v1839 = vunpack.c.0.s8 %v1838
      %v1840 = vlaneseq
      %v1841 = vshrl.u32 %v1840, 7
      %v1842 = vsub.s32 %v1839, %v1841
      %v1843 = vrot.slane %v1827, %v1842
      %v1845 = vunpack.c.l.s4 1966171168
      %v1846 = vunpack.c.0.s8 %v1845
      %v1847 = vlaneseq
      %v1848 = vshrl.u32 %v1847, 7
      %v1849 = vsub.s32 %v1846, %v1848
      %v1850 = vrot.slane %v1834, %v1849
      %v1852 = vunpack.c.l.s4 1966171168
      %v1853 = vunpack.c.0.s8 %v1852
      %v1854 = vlaneseq
      %v1855 = vshrl.u32 %v1854, 7
      %v1856 = vsub.s32 %v1853, %v1855
      %v1857 = vrot.slane %v1835, %v1856
      %v1859 = vunpack.c.l.s4 1966171168
      %v1860 = vunpack.c.0.s8 %v1859
      %v1861 = vlaneseq
      %v1862 = vshrl.u32 %v1861, 7
      %v1863 = vsub.s32 %v1860, %v1862
      %v1864 = vrot.slane %v1836, %v1863
      %v1865 = vcombine.high %v1843, %v1843
      %v1866 = vcombine.high %v1850, %v1850
      %v1867 = vcombine.high %v1857, %v1857
      %v1868 = vcombine.high %v1864, %v1864
      %1877 = vst.msk [vmem:[#allocation6 + $0x4] sm:$0x1] %vm1612, %v1843
      %1878 = vst.msk [vmem:[#allocation6 + $0xc] sm:$0x1] %vm1612, %v1857
      %1879 = vst.msk [vmem:[#allocation6 + $0x14] sm:$0x1] %vm1612, %v1865
      %1880 = vst.msk [vmem:[#allocation6 + $0x1c] sm:$0x1] %vm1612, %v1867
      %1881 = vst.msk [vmem:[#allocation6 + $0x24] sm:$0x1] %vm1612, %v1850
      %1882 = vst.msk [vmem:[#allocation6 + $0x2c] sm:$0x1] %vm1612, %v1864
      %1883 = vst.msk [vmem:[#allocation6 + $0x34] sm:$0x1] %vm1612, %v1866
      %1884 = vst.msk [vmem:[#allocation6 + $0x3c] sm:$0x1] %vm1612, %v1868
      %v1886 = vcombine.high %v1006, %v1006
      %v1888 = vunpack.c.l.s4 1966171168
      %v1889 = vunpack.c.0.s8 %v1888
      %v1890 = vlaneseq
      %v1891 = vshrl.u32 %v1890, 7
      %v1892 = vsub.s32 %v1889, %v1891
      %v1893 = vrot.slane %v1006, %v1892
      %v1895 = vunpack.c.l.s4 1966171168
      %v1896 = vunpack.c.0.s8 %v1895
      %v1897 = vlaneseq
      %v1898 = vshrl.u32 %v1897, 7
      %v1899 = vsub.s32 %v1896, %v1898
      %v1900 = vrot.slane %v1886, %v1899
      %v1901 = vcombine.high %v1893, %v1893
      %v1902 = vcombine.high %v1900, %v1900
      %v1904 = vunpack.c.l.s4 1966171168
      %v1905 = vunpack.c.0.s8 %v1904
      %v1906 = vlaneseq
      %v1907 = vshrl.u32 %v1906, 7
      %v1908 = vsub.s32 %v1905, %v1907
      %v1909 = vrot.slane %v1893, %v1908
      %v1911 = vunpack.c.l.s4 1966171168
      %v1912 = vunpack.c.0.s8 %v1911
      %v1913 = vlaneseq
      %v1914 = vshrl.u32 %v1913, 7
      %v1915 = vsub.s32 %v1912, %v1914
      %v1916 = vrot.slane %v1900, %v1915
      %v1918 = vunpack.c.l.s4 1966171168
      %v1919 = vunpack.c.0.s8 %v1918
      %v1920 = vlaneseq
      %v1921 = vshrl.u32 %v1920, 7
      %v1922 = vsub.s32 %v1919, %v1921
      %v1923 = vrot.slane %v1901, %v1922
      %v1925 = vunpack.c.l.s4 1966171168
      %v1926 = vunpack.c.0.s8 %v1925
      %v1927 = vlaneseq
      %v1928 = vshrl.u32 %v1927, 7
      %v1929 = vsub.s32 %v1926, %v1928
      %v1930 = vrot.slane %v1902, %v1929
      %v1931 = vcombine.high %v1909, %v1909
      %v1932 = vcombine.high %v1916, %v1916
      %v1933 = vcombine.high %v1923, %v1923
      %v1934 = vcombine.high %v1930, %v1930
      %1943 = vst.msk [vmem:[#allocation6 + $0x5] sm:$0x1] %vm1612, %v1909
      %1944 = vst.msk [vmem:[#allocation6 + $0xd] sm:$0x1] %vm1612, %v1923
      %1945 = vst.msk [vmem:[#allocation6 + $0x15] sm:$0x1] %vm1612, %v1931
      %1946 = vst.msk [vmem:[#allocation6 + $0x1d] sm:$0x1] %vm1612, %v1933
      %1947 = vst.msk [vmem:[#allocation6 + $0x25] sm:$0x1] %vm1612, %v1916
      %1948 = vst.msk [vmem:[#allocation6 + $0x2d] sm:$0x1] %vm1612, %v1930
      %1949 = vst.msk [vmem:[#allocation6 + $0x35] sm:$0x1] %vm1612, %v1932
      %1950 = vst.msk [vmem:[#allocation6 + $0x3d] sm:$0x1] %vm1612, %v1934
      %v1952 = vcombine.high %v1008, %v1008
      %v1954 = vunpack.c.l.s4 1966171168
      %v1955 = vunpack.c.0.s8 %v1954
      %v1956 = vlaneseq
      %v1957 = vshrl.u32 %v1956, 7
      %v1958 = vsub.s32 %v1955, %v1957
      %v1959 = vrot.slane %v1008, %v1958
      %v1961 = vunpack.c.l.s4 1966171168
      %v1962 = vunpack.c.0.s8 %v1961
      %v1963 = vlaneseq
      %v1964 = vshrl.u32 %v1963, 7
      %v1965 = vsub.s32 %v1962, %v1964
      %v1966 = vrot.slane %v1952, %v1965
      %v1967 = vcombine.high %v1959, %v1959
      %v1968 = vcombine.high %v1966, %v1966
      %v1970 = vunpack.c.l.s4 1966171168
      %v1971 = vunpack.c.0.s8 %v1970
      %v1972 = vlaneseq
      %v1973 = vshrl.u32 %v1972, 7
      %v1974 = vsub.s32 %v1971, %v1973
      %v1975 = vrot.slane %v1959, %v1974
      %v1977 = vunpack.c.l.s4 1966171168
      %v1978 = vunpack.c.0.s8 %v1977
      %v1979 = vlaneseq
      %v1980 = vshrl.u32 %v1979, 7
      %v1981 = vsub.s32 %v1978, %v1980
      %v1982 = vrot.slane %v1966, %v1981
      %v1984 = vunpack.c.l.s4 1966171168
      %v1985 = vunpack.c.0.s8 %v1984
      %v1986 = vlaneseq
      %v1987 = vshrl.u32 %v1986, 7
      %v1988 = vsub.s32 %v1985, %v1987
      %v1989 = vrot.slane %v1967, %v1988
      %v1991 = vunpack.c.l.s4 1966171168
      %v1992 = vunpack.c.0.s8 %v1991
      %v1993 = vlaneseq
      %v1994 = vshrl.u32 %v1993, 7
      %v1995 = vsub.s32 %v1992, %v1994
      %v1996 = vrot.slane %v1968, %v1995
      %v1997 = vcombine.high %v1975, %v1975
      %v1998 = vcombine.high %v1982, %v1982
      %v1999 = vcombine.high %v1989, %v1989
      %v2000 = vcombine.high %v1996, %v1996
      %2009 = vst.msk [vmem:[#allocation6 + $0x6] sm:$0x1] %vm1612, %v1975
      %2010 = vst.msk [vmem:[#allocation6 + $0xe] sm:$0x1] %vm1612, %v1989
      %2011 = vst.msk [vmem:[#allocation6 + $0x16] sm:$0x1] %vm1612, %v1997
      %2012 = vst.msk [vmem:[#allocation6 + $0x1e] sm:$0x1] %vm1612, %v1999
      %2013 = vst.msk [vmem:[#allocation6 + $0x26] sm:$0x1] %vm1612, %v1982
      %2014 = vst.msk [vmem:[#allocation6 + $0x2e] sm:$0x1] %vm1612, %v1996
      %2015 = vst.msk [vmem:[#allocation6 + $0x36] sm:$0x1] %vm1612, %v1998
      %2016 = vst.msk [vmem:[#allocation6 + $0x3e] sm:$0x1] %vm1612, %v2000
      %v2018 = vcombine.high %v1010, %v1010
      %v2020 = vunpack.c.l.s4 1966171168
      %v2021 = vunpack.c.0.s8 %v2020
      %v2022 = vlaneseq
      %v2023 = vshrl.u32 %v2022, 7
      %v2024 = vsub.s32 %v2021, %v2023
      %v2025 = vrot.slane %v1010, %v2024
      %v2027 = vunpack.c.l.s4 1966171168
      %v2028 = vunpack.c.0.s8 %v2027
      %v2029 = vlaneseq
      %v2030 = vshrl.u32 %v2029, 7
      %v2031 = vsub.s32 %v2028, %v2030
      %v2032 = vrot.slane %v2018, %v2031
      %v2033 = vcombine.high %v2025, %v2025
      %v2034 = vcombine.high %v2032, %v2032
      %v2036 = vunpack.c.l.s4 1966171168
      %v2037 = vunpack.c.0.s8 %v2036
      %v2038 = vlaneseq
      %v2039 = vshrl.u32 %v2038, 7
      %v2040 = vsub.s32 %v2037, %v2039
      %v2041 = vrot.slane %v2025, %v2040
      %v2043 = vunpack.c.l.s4 1966171168
      %v2044 = vunpack.c.0.s8 %v2043
      %v2045 = vlaneseq
      %v2046 = vshrl.u32 %v2045, 7
      %v2047 = vsub.s32 %v2044, %v2046
      %v2048 = vrot.slane %v2032, %v2047
      %v2050 = vunpack.c.l.s4 1966171168
      %v2051 = vunpack.c.0.s8 %v2050
      %v2052 = vlaneseq
      %v2053 = vshrl.u32 %v2052, 7
      %v2054 = vsub.s32 %v2051, %v2053
      %v2055 = vrot.slane %v2033, %v2054
      %v2057 = vunpack.c.l.s4 1966171168
      %v2058 = vunpack.c.0.s8 %v2057
      %v2059 = vlaneseq
      %v2060 = vshrl.u32 %v2059, 7
      %v2061 = vsub.s32 %v2058, %v2060
      %v2062 = vrot.slane %v2034, %v2061
      %v2063 = vcombine.high %v2041, %v2041
      %v2064 = vcombine.high %v2048, %v2048
      %v2065 = vcombine.high %v2055, %v2055
      %v2066 = vcombine.high %v2062, %v2062
      %2075 = vst.msk [vmem:[#allocation6 + $0x7] sm:$0x1] %vm1612, %v2041
      %2076 = vst.msk [vmem:[#allocation6 + $0xf] sm:$0x1] %vm1612, %v2055
      %2077 = vst.msk [vmem:[#allocation6 + $0x17] sm:$0x1] %vm1612, %v2063
      %2078 = vst.msk [vmem:[#allocation6 + $0x1f] sm:$0x1] %vm1612, %v2065
      %2079 = vst.msk [vmem:[#allocation6 + $0x27] sm:$0x1] %vm1612, %v2048
      %2080 = vst.msk [vmem:[#allocation6 + $0x2f] sm:$0x1] %vm1612, %v2062
      %2081 = vst.msk [vmem:[#allocation6 + $0x37] sm:$0x1] %vm1612, %v2064
      %2082 = vst.msk [vmem:[#allocation6 + $0x3f] sm:$0x1] %vm1612, %v2066
      %2083 = vxpose.xlu0.b32.start [1/16] %v930, 128
      %2084 = vxpose.xlu0.b32.cont [2/16] 0.0, 128
      %2085 = vxpose.xlu0.b32.cont [3/16] 0.0, 128
      %2086 = vxpose.xlu0.b32.cont [4/16] 0.0, 128
      %2087 = vxpose.xlu0.b32.cont [5/16] 0.0, 128
      %2088 = vxpose.xlu0.b32.cont [6/16] 0.0, 128
      %2089 = vxpose.xlu0.b32.cont [7/16] 0.0, 128
      %2090 = vxpose.xlu0.b32.cont [8/16] 0.0, 128
      %2091 = vxpose.xlu0.b32.cont [9/16] 0.0, 128
      %2092 = vxpose.xlu0.b32.cont [10/16] 0.0, 128
      %2093 = vxpose.xlu0.b32.cont [11/16] 0.0, 128
      %2094 = vxpose.xlu0.b32.cont [12/16] 0.0, 128
      %2095 = vxpose.xlu0.b32.cont [13/16] 0.0, 128
      %2096 = vxpose.xlu0.b32.cont [14/16] 0.0, 128
      %2097 = vxpose.xlu0.b32.cont [15/16] 0.0, 128
      %2098 = vxpose.xlu0.b32.end [16/16] 0.0, 128
      %v2099 = vpop.trf.xlu0
      %v2100 = vpop.trf.xlu0
      %v2101 = vpop.trf.xlu0
      %v2102 = vpop.trf.xlu0
      %v2103 = vpop.trf.xlu0
      %v2104 = vpop.trf.xlu0
      %v2105 = vpop.trf.xlu0
      %v2106 = vpop.trf.xlu0
      %v2107 = vpop.trf.xlu0
      %v2108 = vpop.trf.xlu0
      %v2109 = vpop.trf.xlu0
      %v2110 = vpop.trf.xlu0
      %v2111 = vpop.trf.xlu0
      %v2112 = vpop.trf.xlu0
      %v2113 = vpop.trf.xlu0
      %v2114 = vpop.trf.xlu0
      %v2115 = vlaneseq
      %v2116 = vshrl.u32 %v2115, 7
      %v2117 = vsub.s32 0, %v2116
      %v2118 = vrot.slane %v2099, %v2117
      %2120 = vbcast.lane.b32.xlu0 %v2118, 256
      %v2121 = vpop.permute.xlu0 %2120
      %v2122 = vlaneseq
      %v2123 = vshrl.u32 %v2122, 7
      %v2124 = vsub.s32 1, %v2123
      %v2125 = vrot.slane %v2099, %v2124
      %2127 = vbcast.lane.b32.xlu0 %v2125, 256
      %v2128 = vpop.permute.xlu0 %2127
      %v2129 = vlaneseq
      %v2130 = vshrl.u32 %v2129, 7
      %v2131 = vsub.s32 2, %v2130
      %v2132 = vrot.slane %v2099, %v2131
      %2134 = vbcast.lane.b32.xlu0 %v2132, 256
      %v2135 = vpop.permute.xlu0 %2134
      %v2136 = vlaneseq
      %v2137 = vshrl.u32 %v2136, 7
      %v2138 = vsub.s32 3, %v2137
      %v2139 = vrot.slane %v2099, %v2138
      %2141 = vbcast.lane.b32.xlu0 %v2139, 256
      %v2142 = vpop.permute.xlu0 %2141
      %v2143 = vlaneseq
      %v2144 = vshrl.u32 %v2143, 7
      %v2145 = vsub.s32 4, %v2144
      %v2146 = vrot.slane %v2099, %v2145
      %2148 = vbcast.lane.b32.xlu0 %v2146, 256
      %v2149 = vpop.permute.xlu0 %2148
      %v2150 = vlaneseq
      %v2151 = vshrl.u32 %v2150, 7
      %v2152 = vsub.s32 5, %v2151
      %v2153 = vrot.slane %v2099, %v2152
      %2155 = vbcast.lane.b32.xlu0 %v2153, 256
      %v2156 = vpop.permute.xlu0 %2155
      %v2157 = vlaneseq
      %v2158 = vshrl.u32 %v2157, 7
      %v2159 = vsub.s32 6, %v2158
      %v2160 = vrot.slane %v2099, %v2159
      %2162 = vbcast.lane.b32.xlu0 %v2160, 256
      %v2163 = vpop.permute.xlu0 %2162
      %v2164 = vlaneseq
      %v2165 = vshrl.u32 %v2164, 7
      %v2166 = vsub.s32 7, %v2165
      %v2167 = vrot.slane %v2099, %v2166
      %2169 = vbcast.lane.b32.xlu0 %v2167, 256
      %v2170 = vpop.permute.xlu0 %2169
      %v2171 = vld [vmem:[#allocation5] sm:$0xff]
      %v2172 = vld [vmem:[#allocation5 + $0x8] sm:$0xff]
      %v2173 = vld [vmem:[#allocation5 + $0x10] sm:$0xff]
      %v2174 = vld [vmem:[#allocation5 + $0x18] sm:$0xff]
      %v2175 = vld [vmem:[#allocation5 + $0x20] sm:$0xff]
      %v2176 = vld [vmem:[#allocation5 + $0x28] sm:$0xff]
      %v2177 = vld [vmem:[#allocation5 + $0x30] sm:$0xff]
      %v2178 = vld [vmem:[#allocation5 + $0x38] sm:$0xff]
      %v2179 = vmul.f32 %v2121, %v2171
      %v2180 = vmul.f32 %v2128, %v2172
      %v2181 = vmul.f32 %v2135, %v2173
      %v2182 = vmul.f32 %v2142, %v2174
      %v2183 = vmul.f32 %v2149, %v2175
      %v2184 = vmul.f32 %v2156, %v2176
      %v2185 = vmul.f32 %v2163, %v2177
      %v2186 = vmul.f32 %v2170, %v2178
      %v2187 = vld [vmem:[#allocation6] sm:$0xff]
      %v2188 = vld [vmem:[#allocation6 + $0x8] sm:$0xff]
      %v2189 = vld [vmem:[#allocation6 + $0x10] sm:$0xff]
      %v2190 = vld [vmem:[#allocation6 + $0x18] sm:$0xff]
      %v2191 = vld [vmem:[#allocation6 + $0x20] sm:$0xff]
      %v2192 = vld [vmem:[#allocation6 + $0x28] sm:$0xff]
      %v2193 = vld [vmem:[#allocation6 + $0x30] sm:$0xff]
      %v2194 = vld [vmem:[#allocation6 + $0x38] sm:$0xff]
      %v2195 = vpack.c.bf16 %v2187, %v2187
      %v2196 = vpack.c.bf16 %v2188, %v2188
      %v2197 = vpack.c.bf16 %v2189, %v2189
      %v2198 = vpack.c.bf16 %v2190, %v2190
      %v2199 = vpack.c.bf16 %v2191, %v2191
      %v2200 = vpack.c.bf16 %v2192, %v2192
      %v2201 = vpack.c.bf16 %v2193, %v2193
      %v2202 = vpack.c.bf16 %v2194, %v2194
      %v2204 = vsel %vm845, %v2195, 0
      %v2207 = vsel %vm1171, %v451, 0
      %2209 = vmatprep.subr.bf16.mxu0 0
      %2210 = vmatpush1.bf16.msra.mxu0 %v2207
      %2211 = vmatprep.subr.bf16.mxu0 0
      %2212 = vmatpush1.bf16.msra.mxu0 0
      %2213 = vmatprep.subr.bf16.mxu0 0
      %2214 = vmatpush1.bf16.msra.mxu0 0
      %2215 = vmatprep.subr.bf16.mxu0 0
      %2216 = vmatpush1.bf16.msra.mxu0 0
      %2217 = vmatprep.subr.bf16.mxu0 0
      %2218 = vmatpush1.bf16.msra.mxu0 0
      %2219 = vmatprep.subr.bf16.mxu0 0
      %2220 = vmatpush1.bf16.msra.mxu0 0
      %2221 = vmatprep.subr.bf16.mxu0 0
      %2222 = vmatpush1.bf16.msra.mxu0 0
      %2223 = vmatprep.subr.bf16.mxu0 0
      %2224 = vmatpush1.bf16.msra.mxu0 0
      %2225 = vmatprep.subr.bf16.mxu0 0
      %2226 = vmatpush1.bf16.msra.mxu0 0
      %2227 = vmatprep.subr.bf16.mxu0 0
      %2228 = vmatpush1.bf16.msra.mxu0 0
      %2229 = vmatprep.subr.bf16.mxu0 0
      %2230 = vmatpush1.bf16.msra.mxu0 0
      %2231 = vmatprep.subr.bf16.mxu0 0
      %2232 = vmatpush1.bf16.msra.mxu0 0
      %2233 = vmatprep.subr.bf16.mxu0 0
      %2234 = vmatpush1.bf16.msra.mxu0 0
      %2235 = vmatprep.subr.bf16.mxu0 0
      %2236 = vmatpush1.bf16.msra.mxu0 0
      %2237 = vmatprep.subr.bf16.mxu0 0
      %2238 = vmatpush1.bf16.msra.mxu0 0
      %2239 = vmatprep.subr.bf16.mxu0 0
      %2240 = vmatpush1.bf16.msra.mxu0 0
      %2241 = vmatprep.mubr.bf16.mxu0 0
      %2242 = vmatmul.mubr.bf16.gmra.mrb[0].mxu0 %v2204
      %v2243 = vpop.f32.mrb[0].mxu0
      %v2244 = vadd.f32 0.0, %v2243
      %v2245 = vpop.f32.mrb[0].mxu0
      %v2246 = vpop.f32.mrb[0].mxu0
      %v2247 = vpop.f32.mrb[0].mxu0
      %2248 = vdwg.mxu0
      %v2250 = vsel %vm845, %v2196, 0
      %v2253 = vsel %vm1171, %v452, 0
      %2255 = vmatprep.subr.bf16.mxu0 0
      %2256 = vmatpush1.bf16.msra.mxu0 %v2253
      %2257 = vmatprep.subr.bf16.mxu0 0
      %2258 = vmatpush1.bf16.msra.mxu0 0
      %2259 = vmatprep.subr.bf16.mxu0 0
      %2260 = vmatpush1.bf16.msra.mxu0 0
      %2261 = vmatprep.subr.bf16.mxu0 0
      %2262 = vmatpush1.bf16.msra.mxu0 0
      %2263 = vmatprep.subr.bf16.mxu0 0
      %2264 = vmatpush1.bf16.msra.mxu0 0
      %2265 = vmatprep.subr.bf16.mxu0 0
      %2266 = vmatpush1.bf16.msra.mxu0 0
      %2267 = vmatprep.subr.bf16.mxu0 0
      %2268 = vmatpush1.bf16.msra.mxu0 0
      %2269 = vmatprep.subr.bf16.mxu0 0
      %2270 = vmatpush1.bf16.msra.mxu0 0
      %2271 = vmatprep.subr.bf16.mxu0 0
      %2272 = vmatpush1.bf16.msra.mxu0 0
      %2273 = vmatprep.subr.bf16.mxu0 0
      %2274 = vmatpush1.bf16.msra.mxu0 0
      %2275 = vmatprep.subr.bf16.mxu0 0
      %2276 = vmatpush1.bf16.msra.mxu0 0
      %2277 = vmatprep.subr.bf16.mxu0 0
      %2278 = vmatpush1.bf16.msra.mxu0 0
      %2279 = vmatprep.subr.bf16.mxu0 0
      %2280 = vmatpush1.bf16.msra.mxu0 0
      %2281 = vmatprep.subr.bf16.mxu0 0
      %2282 = vmatpush1.bf16.msra.mxu0 0
      %2283 = vmatprep.subr.bf16.mxu0 0
      %2284 = vmatpush1.bf16.msra.mxu0 0
      %2285 = vmatprep.subr.bf16.mxu0 0
      %2286 = vmatpush1.bf16.msra.mxu0 0
      %2287 = vmatprep.mubr.bf16.mxu0 0
      %2288 = vmatmul.mubr.bf16.gmra.mrb[0].mxu0 %v2250
      %v2289 = vpop.f32.mrb[0].mxu0
      %v2290 = vadd.f32 0.0, %v2289
      %v2291 = vpop.f32.mrb[0].mxu0
      %v2292 = vpop.f32.mrb[0].mxu0
      %v2293 = vpop.f32.mrb[0].mxu0
      %2294 = vdwg.mxu0
      %v2296 = vsel %vm845, %v2197, 0
      %v2299 = vsel %vm1171, %v453, 0
      %2301 = vmatprep.subr.bf16.mxu0 0
      %2302 = vmatpush1.bf16.msra.mxu0 %v2299
      %2303 = vmatprep.subr.bf16.mxu0 0
      %2304 = vmatpush1.bf16.msra.mxu0 0
      %2305 = vmatprep.subr.bf16.mxu0 0
      %2306 = vmatpush1.bf16.msra.mxu0 0
      %2307 = vmatprep.subr.bf16.mxu0 0
      %2308 = vmatpush1.bf16.msra.mxu0 0
      %2309 = vmatprep.subr.bf16.mxu0 0
      %2310 = vmatpush1.bf16.msra.mxu0 0
      %2311 = vmatprep.subr.bf16.mxu0 0
      %2312 = vmatpush1.bf16.msra.mxu0 0
      %2313 = vmatprep.subr.bf16.mxu0 0
      %2314 = vmatpush1.bf16.msra.mxu0 0
      %2315 = vmatprep.subr.bf16.mxu0 0
      %2316 = vmatpush1.bf16.msra.mxu0 0
      %2317 = vmatprep.subr.bf16.mxu0 0
      %2318 = vmatpush1.bf16.msra.mxu0 0
      %2319 = vmatprep.subr.bf16.mxu0 0
      %2320 = vmatpush1.bf16.msra.mxu0 0
      %2321 = vmatprep.subr.bf16.mxu0 0
      %2322 = vmatpush1.bf16.msra.mxu0 0
      %2323 = vmatprep.subr.bf16.mxu0 0
      %2324 = vmatpush1.bf16.msra.mxu0 0
      %2325 = vmatprep.subr.bf16.mxu0 0
      %2326 = vmatpush1.bf16.msra.mxu0 0
      %2327 = vmatprep.subr.bf16.mxu0 0
      %2328 = vmatpush1.bf16.msra.mxu0 0
      %2329 = vmatprep.subr.bf16.mxu0 0
      %2330 = vmatpush1.bf16.msra.mxu0 0
      %2331 = vmatprep.subr.bf16.mxu0 0
      %2332 = vmatpush1.bf16.msra.mxu0 0
      %2333 = vmatprep.mubr.bf16.mxu0 0
      %2334 = vmatmul.mubr.bf16.gmra.mrb[0].mxu0 %v2296
      %v2335 = vpop.f32.mrb[0].mxu0
      %v2336 = vadd.f32 0.0, %v2335
      %v2337 = vpop.f32.mrb[0].mxu0
      %v2338 = vpop.f32.mrb[0].mxu0
      %v2339 = vpop.f32.mrb[0].mxu0
      %2340 = vdwg.mxu0
      %v2342 = vsel %vm845, %v2198, 0
      %v2345 = vsel %vm1171, %v454, 0
      %2347 = vmatprep.subr.bf16.mxu0 0
      %2348 = vmatpush1.bf16.msra.mxu0 %v2345
      %2349 = vmatprep.subr.bf16.mxu0 0
      %2350 = vmatpush1.bf16.msra.mxu0 0
      %2351 = vmatprep.subr.bf16.mxu0 0
      %2352 = vmatpush1.bf16.msra.mxu0 0
      %2353 = vmatprep.subr.bf16.mxu0 0
      %2354 = vmatpush1.bf16.msra.mxu0 0
      %2355 = vmatprep.subr.bf16.mxu0 0
      %2356 = vmatpush1.bf16.msra.mxu0 0
      %2357 = vmatprep.subr.bf16.mxu0 0
      %2358 = vmatpush1.bf16.msra.mxu0 0
      %2359 = vmatprep.subr.bf16.mxu0 0
      %2360 = vmatpush1.bf16.msra.mxu0 0
      %2361 = vmatprep.subr.bf16.mxu0 0
      %2362 = vmatpush1.bf16.msra.mxu0 0
      %2363 = vmatprep.subr.bf16.mxu0 0
      %2364 = vmatpush1.bf16.msra.mxu0 0
      %2365 = vmatprep.subr.bf16.mxu0 0
      %2366 = vmatpush1.bf16.msra.mxu0 0
      %2367 = vmatprep.subr.bf16.mxu0 0
      %2368 = vmatpush1.bf16.msra.mxu0 0
      %2369 = vmatprep.subr.bf16.mxu0 0
      %2370 = vmatpush1.bf16.msra.mxu0 0
      %2371 = vmatprep.subr.bf16.mxu0 0
      %2372 = vmatpush1.bf16.msra.mxu0 0
      %2373 = vmatprep.subr.bf16.mxu0 0
      %2374 = vmatpush1.bf16.msra.mxu0 0
      %2375 = vmatprep.subr.bf16.mxu0 0
      %2376 = vmatpush1.bf16.msra.mxu0 0
      %2377 = vmatprep.subr.bf16.mxu0 0
      %2378 = vmatpush1.bf16.msra.mxu0 0
      %2379 = vmatprep.mubr.bf16.mxu0 0
      %2380 = vmatmul.mubr.bf16.gmra.mrb[0].mxu0 %v2342
      %v2381 = vpop.f32.mrb[0].mxu0
      %v2382 = vadd.f32 0.0, %v2381
      %v2383 = vpop.f32.mrb[0].mxu0
      %v2384 = vpop.f32.mrb[0].mxu0
      %v2385 = vpop.f32.mrb[0].mxu0
      %2386 = vdwg.mxu0
      %v2388 = vsel %vm845, %v2199, 0
      %v2391 = vsel %vm1171, %v455, 0
      %2393 = vmatprep.subr.bf16.mxu0 0
      %2394 = vmatpush1.bf16.msra.mxu0 %v2391
      %2395 = vmatprep.subr.bf16.mxu0 0
      %2396 = vmatpush1.bf16.msra.mxu0 0
      %2397 = vmatprep.subr.bf16.mxu0 0
      %2398 = vmatpush1.bf16.msra.mxu0 0
      %2399 = vmatprep.subr.bf16.mxu0 0
      %2400 = vmatpush1.bf16.msra.mxu0 0
      %2401 = vmatprep.subr.bf16.mxu0 0
      %2402 = vmatpush1.bf16.msra.mxu0 0
      %2403 = vmatprep.subr.bf16.mxu0 0
      %2404 = vmatpush1.bf16.msra.mxu0 0
      %2405 = vmatprep.subr.bf16.mxu0 0
      %2406 = vmatpush1.bf16.msra.mxu0 0
      %2407 = vmatprep.subr.bf16.mxu0 0
      %2408 = vmatpush1.bf16.msra.mxu0 0
      %2409 = vmatprep.subr.bf16.mxu0 0
      %2410 = vmatpush1.bf16.msra.mxu0 0
      %2411 = vmatprep.subr.bf16.mxu0 0
      %2412 = vmatpush1.bf16.msra.mxu0 0
      %2413 = vmatprep.subr.bf16.mxu0 0
      %2414 = vmatpush1.bf16.msra.mxu0 0
      %2415 = vmatprep.subr.bf16.mxu0 0
      %2416 = vmatpush1.bf16.msra.mxu0 0
      %2417 = vmatprep.subr.bf16.mxu0 0
      %2418 = vmatpush1.bf16.msra.mxu0 0
      %2419 = vmatprep.subr.bf16.mxu0 0
      %2420 = vmatpush1.bf16.msra.mxu0 0
      %2421 = vmatprep.subr.bf16.mxu0 0
      %2422 = vmatpush1.bf16.msra.mxu0 0
      %2423 = vmatprep.subr.bf16.mxu0 0
      %2424 = vmatpush1.bf16.msra.mxu0 0
      %2425 = vmatprep.mubr.bf16.mxu0 0
      %2426 = vmatmul.mubr.bf16.gmra.mrb[0].mxu0 %v2388
      %v2427 = vpop.f32.mrb[0].mxu0
      %v2428 = vadd.f32 0.0, %v2427
      %v2429 = vpop.f32.mrb[0].mxu0
      %v2430 = vpop.f32.mrb[0].mxu0
      %v2431 = vpop.f32.mrb[0].mxu0
      %2432 = vdwg.mxu0
      %v2434 = vsel %vm845, %v2200, 0
      %v2437 = vsel %vm1171, %v456, 0
      %2439 = vmatprep.subr.bf16.mxu0 0
      %2440 = vmatpush1.bf16.msra.mxu0 %v2437
      %2441 = vmatprep.subr.bf16.mxu0 0
      %2442 = vmatpush1.bf16.msra.mxu0 0
      %2443 = vmatprep.subr.bf16.mxu0 0
      %2444 = vmatpush1.bf16.msra.mxu0 0
      %2445 = vmatprep.subr.bf16.mxu0 0
      %2446 = vmatpush1.bf16.msra.mxu0 0
      %2447 = vmatprep.subr.bf16.mxu0 0
      %2448 = vmatpush1.bf16.msra.mxu0 0
      %2449 = vmatprep.subr.bf16.mxu0 0
      %2450 = vmatpush1.bf16.msra.mxu0 0
      %2451 = vmatprep.subr.bf16.mxu0 0
      %2452 = vmatpush1.bf16.msra.mxu0 0
      %2453 = vmatprep.subr.bf16.mxu0 0
      %2454 = vmatpush1.bf16.msra.mxu0 0
      %2455 = vmatprep.subr.bf16.mxu0 0
      %2456 = vmatpush1.bf16.msra.mxu0 0
      %2457 = vmatprep.subr.bf16.mxu0 0
      %2458 = vmatpush1.bf16.msra.mxu0 0
      %2459 = vmatprep.subr.bf16.mxu0 0
      %2460 = vmatpush1.bf16.msra.mxu0 0
      %2461 = vmatprep.subr.bf16.mxu0 0
      %2462 = vmatpush1.bf16.msra.mxu0 0
      %2463 = vmatprep.subr.bf16.mxu0 0
      %2464 = vmatpush1.bf16.msra.mxu0 0
      %2465 = vmatprep.subr.bf16.mxu0 0
      %2466 = vmatpush1.bf16.msra.mxu0 0
      %2467 = vmatprep.subr.bf16.mxu0 0
      %2468 = vmatpush1.bf16.msra.mxu0 0
      %2469 = vmatprep.subr.bf16.mxu0 0
      %2470 = vmatpush1.bf16.msra.mxu0 0
      %2471 = vmatprep.mubr.bf16.mxu0 0
      %2472 = vmatmul.mubr.bf16.gmra.mrb[0].mxu0 %v2434
      %v2473 = vpop.f32.mrb[0].mxu0
      %v2474 = vadd.f32 0.0, %v2473
      %v2475 = vpop.f32.mrb[0].mxu0
      %v2476 = vpop.f32.mrb[0].mxu0
      %v2477 = vpop.f32.mrb[0].mxu0
      %2478 = vdwg.mxu0
      %v2480 = vsel %vm845, %v2201, 0
      %v2483 = vsel %vm1171, %v457, 0
      %2485 = vmatprep.subr.bf16.mxu0 0
      %2486 = vmatpush1.bf16.msra.mxu0 %v2483
      %2487 = vmatprep.subr.bf16.mxu0 0
      %2488 = vmatpush1.bf16.msra.mxu0 0
      %2489 = vmatprep.subr.bf16.mxu0 0
      %2490 = vmatpush1.bf16.msra.mxu0 0
      %2491 = vmatprep.subr.bf16.mxu0 0
      %2492 = vmatpush1.bf16.msra.mxu0 0
      %2493 = vmatprep.subr.bf16.mxu0 0
      %2494 = vmatpush1.bf16.msra.mxu0 0
      %2495 = vmatprep.subr.bf16.mxu0 0
      %2496 = vmatpush1.bf16.msra.mxu0 0
      %2497 = vmatprep.subr.bf16.mxu0 0
      %2498 = vmatpush1.bf16.msra.mxu0 0
      %2499 = vmatprep.subr.bf16.mxu0 0
      %2500 = vmatpush1.bf16.msra.mxu0 0
      %2501 = vmatprep.subr.bf16.mxu0 0
      %2502 = vmatpush1.bf16.msra.mxu0 0
      %2503 = vmatprep.subr.bf16.mxu0 0
      %2504 = vmatpush1.bf16.msra.mxu0 0
      %2505 = vmatprep.subr.bf16.mxu0 0
      %2506 = vmatpush1.bf16.msra.mxu0 0
      %2507 = vmatprep.subr.bf16.mxu0 0
      %2508 = vmatpush1.bf16.msra.mxu0 0
      %2509 = vmatprep.subr.bf16.mxu0 0
      %2510 = vmatpush1.bf16.msra.mxu0 0
      %2511 = vmatprep.subr.bf16.mxu0 0
      %2512 = vmatpush1.bf16.msra.mxu0 0
      %2513 = vmatprep.subr.bf16.mxu0 0
      %2514 = vmatpush1.bf16.msra.mxu0 0
      %2515 = vmatprep.subr.bf16.mxu0 0
      %2516 = vmatpush1.bf16.msra.mxu0 0
      %2517 = vmatprep.mubr.bf16.mxu0 0
      %2518 = vmatmul.mubr.bf16.gmra.mrb[0].mxu0 %v2480
      %v2519 = vpop.f32.mrb[0].mxu0
      %v2520 = vadd.f32 0.0, %v2519
      %v2521 = vpop.f32.mrb[0].mxu0
      %v2522 = vpop.f32.mrb[0].mxu0
      %v2523 = vpop.f32.mrb[0].mxu0
      %2524 = vdwg.mxu0
      %v2526 = vsel %vm845, %v2202, 0
      %v2529 = vsel %vm1171, %v458, 0
      %2531 = vmatprep.subr.bf16.mxu0 0
      %2532 = vmatpush1.bf16.msra.mxu0 %v2529
      %2533 = vmatprep.subr.bf16.mxu0 0
      %2534 = vmatpush1.bf16.msra.mxu0 0
      %2535 = vmatprep.subr.bf16.mxu0 0
      %2536 = vmatpush1.bf16.msra.mxu0 0
      %2537 = vmatprep.subr.bf16.mxu0 0
      %2538 = vmatpush1.bf16.msra.mxu0 0
      %2539 = vmatprep.subr.bf16.mxu0 0
      %2540 = vmatpush1.bf16.msra.mxu0 0
      %2541 = vmatprep.subr.bf16.mxu0 0
      %2542 = vmatpush1.bf16.msra.mxu0 0
      %2543 = vmatprep.subr.bf16.mxu0 0
      %2544 = vmatpush1.bf16.msra.mxu0 0
      %2545 = vmatprep.subr.bf16.mxu0 0
      %2546 = vmatpush1.bf16.msra.mxu0 0
      %2547 = vmatprep.subr.bf16.mxu0 0
      %2548 = vmatpush1.bf16.msra.mxu0 0
      %2549 = vmatprep.subr.bf16.mxu0 0
      %2550 = vmatpush1.bf16.msra.mxu0 0
      %2551 = vmatprep.subr.bf16.mxu0 0
      %2552 = vmatpush1.bf16.msra.mxu0 0
      %2553 = vmatprep.subr.bf16.mxu0 0
      %2554 = vmatpush1.bf16.msra.mxu0 0
      %2555 = vmatprep.subr.bf16.mxu0 0
      %2556 = vmatpush1.bf16.msra.mxu0 0
      %2557 = vmatprep.subr.bf16.mxu0 0
      %2558 = vmatpush1.bf16.msra.mxu0 0
      %2559 = vmatprep.subr.bf16.mxu0 0
      %2560 = vmatpush1.bf16.msra.mxu0 0
      %2561 = vmatprep.subr.bf16.mxu0 0
      %2562 = vmatpush1.bf16.msra.mxu0 0
      %2563 = vmatprep.mubr.bf16.mxu0 0
      %2564 = vmatmul.mubr.bf16.gmra.mrb[0].mxu0 %v2526
      %v2565 = vpop.f32.mrb[0].mxu0
      %v2566 = vadd.f32 0.0, %v2565
      %v2567 = vpop.f32.mrb[0].mxu0
      %v2568 = vpop.f32.mrb[0].mxu0
      %v2569 = vpop.f32.mrb[0].mxu0
      %2570 = vdwg.mxu0
      %v2571 = vadd.f32 %v2179, %v2244
      %v2572 = vadd.f32 %v2180, %v2290
      %v2573 = vadd.f32 %v2181, %v2336
      %v2574 = vadd.f32 %v2182, %v2382
      %v2575 = vadd.f32 %v2183, %v2428
      %v2576 = vadd.f32 %v2184, %v2474
      %v2577 = vadd.f32 %v2185, %v2520
      %v2578 = vadd.f32 %v2186, %v2566
      %2579 = vst.msk [vmem:[#allocation5] sm:$0xff] %vm475, %v2571
      %2580 = vst.msk [vmem:[#allocation5 + $0x8] sm:$0xff] %vm475, %v2572
      %2581 = vst.msk [vmem:[#allocation5 + $0x10] sm:$0xff] %vm475, %v2573
      %2582 = vst.msk [vmem:[#allocation5 + $0x18] sm:$0xff] %vm475, %v2574
      %2583 = vst.msk [vmem:[#allocation5 + $0x20] sm:$0xff] %vm475, %v2575
      %2584 = vst.msk [vmem:[#allocation5 + $0x28] sm:$0xff] %vm475, %v2576
      %2585 = vst.msk [vmem:[#allocation5 + $0x30] sm:$0xff] %vm475, %v2577
      %2586 = vst.msk [vmem:[#allocation5 + $0x38] sm:$0xff] %vm475, %v2578
      // Predicated region
      $region45: #{ipa_block_forward.6} parent=39 // pred_check
        %p2587 = pneg %p402
      $region46: #{ipa_block_forward.6} parent=39 // pred_check_branch
        %2589 = sbr.rel (%p2587) target = $region48
      $region47: #{ipa_block_forward.6} parent=39 // pred_region
        %v2590 = vld [vmem:[#allocation3] sm:$0xff]
        %v2591 = vrcp.pop %v2590
        %v2592 = vld [vmem:[#allocation4] sm:$0xff]
        %v2593 = vld [vmem:[#allocation4 + $0x8] sm:$0xff]
        %v2594 = vld [vmem:[#allocation4 + $0x10] sm:$0xff]
        %v2595 = vld [vmem:[#allocation4 + $0x18] sm:$0xff]
        %v2596 = vld [vmem:[#allocation4 + $0x20] sm:$0xff]
        %v2597 = vld [vmem:[#allocation4 + $0x28] sm:$0xff]
        %v2598 = vld [vmem:[#allocation4 + $0x30] sm:$0xff]
        %v2599 = vld [vmem:[#allocation4 + $0x38] sm:$0xff]
        %v2600 = vlaneseq
        %v2601 = vshrl.u32 %v2600, 7
        %v2602 = vsub.s32 0, %v2601
        %v2603 = vrot.slane %v2591, %v2602
        %2605 = vbcast.lane.b32.xlu0 %v2603, 256
        %v2606 = vpop.permute.xlu0 %2605
        %v2607 = vlaneseq
        %v2608 = vshrl.u32 %v2607, 7
        %v2609 = vsub.s32 1, %v2608
        %v2610 = vrot.slane %v2591, %v2609
        %2612 = vbcast.lane.b32.xlu0 %v2610, 256
        %v2613 = vpop.permute.xlu0 %2612
        %v2614 = vlaneseq
        %v2615 = vshrl.u32 %v2614, 7
        %v2616 = vsub.s32 2, %v2615
        %v2617 = vrot.slane %v2591, %v2616
        %2619 = vbcast.lane.b32.xlu0 %v2617, 256
        %v2620 = vpop.permute.xlu0 %2619
        %v2621 = vlaneseq
        %v2622 = vshrl.u32 %v2621, 7
        %v2623 = vsub.s32 3, %v2622
        %v2624 = vrot.slane %v2591, %v2623
        %2626 = vbcast.lane.b32.xlu0 %v2624, 256
        %v2627 = vpop.permute.xlu0 %2626
        %v2628 = vlaneseq
        %v2629 = vshrl.u32 %v2628, 7
        %v2630 = vsub.s32 4, %v2629
        %v2631 = vrot.slane %v2591, %v2630
        %2633 = vbcast.lane.b32.xlu0 %v2631, 256
        %v2634 = vpop.permute.xlu0 %2633
        %v2635 = vlaneseq
        %v2636 = vshrl.u32 %v2635, 7
        %v2637 = vsub.s32 5, %v2636
        %v2638 = vrot.slane %v2591, %v2637
        %2640 = vbcast.lane.b32.xlu0 %v2638, 256
        %v2641 = vpop.permute.xlu0 %2640
        %v2642 = vlaneseq
        %v2643 = vshrl.u32 %v2642, 7
        %v2644 = vsub.s32 6, %v2643
        %v2645 = vrot.slane %v2591, %v2644
        %2647 = vbcast.lane.b32.xlu0 %v2645, 256
        %v2648 = vpop.permute.xlu0 %2647
        %v2649 = vlaneseq
        %v2650 = vshrl.u32 %v2649, 7
        %v2651 = vsub.s32 7, %v2650
        %v2652 = vrot.slane %v2591, %v2651
        %2654 = vbcast.lane.b32.xlu0 %v2652, 256
        %v2655 = vpop.permute.xlu0 %2654
        %v2656 = vmul.f32 %v2592, %v2606
        %v2657 = vmul.f32 %v2593, %v2613
        %v2658 = vmul.f32 %v2594, %v2620
        %v2659 = vmul.f32 %v2595, %v2627
        %v2660 = vmul.f32 %v2596, %v2634
        %v2661 = vmul.f32 %v2597, %v2641
        %v2662 = vmul.f32 %v2598, %v2648
        %v2663 = vmul.f32 %v2599, %v2655
        %2664 = vst.msk [vmem:[%s395] sm:$0xff] %vm1545, %v2656
        %2665 = vst.msk [vmem:[%s395 + $0x8] sm:$0xff] %vm1545, %v2657
        %2666 = vst.msk [vmem:[%s395 + $0x10] sm:$0xff] %vm1545, %v2658
        %2667 = vst.msk [vmem:[%s395 + $0x18] sm:$0xff] %vm1545, %v2659
        %2668 = vst.msk [vmem:[%s395 + $0x20] sm:$0xff] %vm1545, %v2660
        %2669 = vst.msk [vmem:[%s395 + $0x28] sm:$0xff] %vm1545, %v2661
        %2670 = vst.msk [vmem:[%s395 + $0x30] sm:$0xff] %vm1545, %v2662
        %2671 = vst.msk [vmem:[%s395 + $0x38] sm:$0xff] %vm1545, %v2663
        %v2672 = vld [vmem:[#allocation5] sm:$0xff]
        %v2673 = vld [vmem:[#allocation5 + $0x8] sm:$0xff]
        %v2674 = vld [vmem:[#allocation5 + $0x10] sm:$0xff]
        %v2675 = vld [vmem:[#allocation5 + $0x18] sm:$0xff]
        %v2676 = vld [vmem:[#allocation5 + $0x20] sm:$0xff]
        %v2677 = vld [vmem:[#allocation5 + $0x28] sm:$0xff]
        %v2678 = vld [vmem:[#allocation5 + $0x30] sm:$0xff]
        %v2679 = vld [vmem:[#allocation5 + $0x38] sm:$0xff]
        %2680 = vxpose.xlu0.b32.start [1/16] %v2591, 128
        %2681 = vxpose.xlu0.b32.cont [2/16] 0.0, 128
        %2682 = vxpose.xlu0.b32.cont [3/16] 0.0, 128
        %2683 = vxpose.xlu0.b32.cont [4/16] 0.0, 128
        %2684 = vxpose.xlu0.b32.cont [5/16] 0.0, 128
        %2685 = vxpose.xlu0.b32.cont [6/16] 0.0, 128
        %2686 = vxpose.xlu0.b32.cont [7/16] 0.0, 128
        %2687 = vxpose.xlu0.b32.cont [8/16] 0.0, 128
        %2688 = vxpose.xlu0.b32.cont [9/16] 0.0, 128
        %2689 = vxpose.xlu0.b32.cont [10/16] 0.0, 128
        %2690 = vxpose.xlu0.b32.cont [11/16] 0.0, 128
        %2691 = vxpose.xlu0.b32.cont [12/16] 0.0, 128
        %2692 = vxpose.xlu0.b32.cont [13/16] 0.0, 128
        %2693 = vxpose.xlu0.b32.cont [14/16] 0.0, 128
        %2694 = vxpose.xlu0.b32.cont [15/16] 0.0, 128
        %2695 = vxpose.xlu0.b32.end [16/16] 0.0, 128
        %v2696 = vpop.trf.xlu0
        %v2697 = vpop.trf.xlu0
        %v2698 = vpop.trf.xlu0
        %v2699 = vpop.trf.xlu0
        %v2700 = vpop.trf.xlu0
        %v2701 = vpop.trf.xlu0
        %v2702 = vpop.trf.xlu0
        %v2703 = vpop.trf.xlu0
        %v2704 = vpop.trf.xlu0
        %v2705 = vpop.trf.xlu0
        %v2706 = vpop.trf.xlu0
        %v2707 = vpop.trf.xlu0
        %v2708 = vpop.trf.xlu0
        %v2709 = vpop.trf.xlu0
        %v2710 = vpop.trf.xlu0
        %v2711 = vpop.trf.xlu0
        %v2712 = vlaneseq
        %v2713 = vshrl.u32 %v2712, 7
        %v2714 = vsub.s32 0, %v2713
        %v2715 = vrot.slane %v2696, %v2714
        %2717 = vbcast.lane.b32.xlu0 %v2715, 256
        %v2718 = vpop.permute.xlu0 %2717
        %v2719 = vlaneseq
        %v2720 = vshrl.u32 %v2719, 7
        %v2721 = vsub.s32 1, %v2720
        %v2722 = vrot.slane %v2696, %v2721
        %2724 = vbcast.lane.b32.xlu0 %v2722, 256
        %v2725 = vpop.permute.xlu0 %2724
        %v2726 = vlaneseq
        %v2727 = vshrl.u32 %v2726, 7
        %v2728 = vsub.s32 2, %v2727
        %v2729 = vrot.slane %v2696, %v2728
        %2731 = vbcast.lane.b32.xlu0 %v2729, 256
        %v2732 = vpop.permute.xlu0 %2731
        %v2733 = vlaneseq
        %v2734 = vshrl.u32 %v2733, 7
        %v2735 = vsub.s32 3, %v2734
        %v2736 = vrot.slane %v2696, %v2735
        %2738 = vbcast.lane.b32.xlu0 %v2736, 256
        %v2739 = vpop.permute.xlu0 %2738
        %v2740 = vlaneseq
        %v2741 = vshrl.u32 %v2740, 7
        %v2742 = vsub.s32 4, %v2741
        %v2743 = vrot.slane %v2696, %v2742
        %2745 = vbcast.lane.b32.xlu0 %v2743, 256
        %v2746 = vpop.permute.xlu0 %2745
        %v2747 = vlaneseq
        %v2748 = vshrl.u32 %v2747, 7
        %v2749 = vsub.s32 5, %v2748
        %v2750 = vrot.slane %v2696, %v2749
        %2752 = vbcast.lane.b32.xlu0 %v2750, 256
        %v2753 = vpop.permute.xlu0 %2752
        %v2754 = vlaneseq
        %v2755 = vshrl.u32 %v2754, 7
        %v2756 = vsub.s32 6, %v2755
        %v2757 = vrot.slane %v2696, %v2756
        %2759 = vbcast.lane.b32.xlu0 %v2757, 256
        %v2760 = vpop.permute.xlu0 %2759
        %v2761 = vlaneseq
        %v2762 = vshrl.u32 %v2761, 7
        %v2763 = vsub.s32 7, %v2762
        %v2764 = vrot.slane %v2696, %v2763
        %2766 = vbcast.lane.b32.xlu0 %v2764, 256
        %v2767 = vpop.permute.xlu0 %2766
        %v2768 = vmul.f32 %v2672, %v2718
        %v2769 = vmul.f32 %v2673, %v2725
        %v2770 = vmul.f32 %v2674, %v2732
        %v2771 = vmul.f32 %v2675, %v2739
        %v2772 = vmul.f32 %v2676, %v2746
        %v2773 = vmul.f32 %v2677, %v2753
        %v2774 = vmul.f32 %v2678, %v2760
        %v2775 = vmul.f32 %v2679, %v2767
        %2776 = vst.msk [vmem:[%s400] sm:$0xff] %vm475, %v2768
        %2777 = vst.msk [vmem:[%s400 + $0x8] sm:$0xff] %vm475, %v2769
        %2778 = vst.msk [vmem:[%s400 + $0x10] sm:$0xff] %vm475, %v2770
        %2779 = vst.msk [vmem:[%s400 + $0x18] sm:$0xff] %vm475, %v2771
        %2780 = vst.msk [vmem:[%s400 + $0x20] sm:$0xff] %vm475, %v2772
        %2781 = vst.msk [vmem:[%s400 + $0x28] sm:$0xff] %vm475, %v2773
        %2782 = vst.msk [vmem:[%s400 + $0x30] sm:$0xff] %vm475, %v2774
        %2783 = vst.msk [vmem:[%s400 + $0x38] sm:$0xff] %vm475, %v2775
      $region48: #{ipa_block_forward.6} parent=39 // pred_fallthru
        _
      %p2784 = scmp.lt.s32.totalorder %s22, 1
      %s2785 = scalar_select %p2784, %s22, 1
      %s2786 = smul.addr %s2785, 8
      %s2787 = smul.addr %s2786, 8
      %s2788 = scalar_lea.vmem %s5, %s2787
      %p2789 = scmp.lt.s32.totalorder %s22, 1
      %s2790 = scalar_select %p2789, %s22, 1
      %s2791 = smul.addr %s2790, 8
      %s2792 = smul.addr %s2791, 8
      %s2793 = scalar_lea.vmem %s6, %s2792
      // Predicated region
      $region49: #{ipa_block_forward.6} parent=39 // pred_check
        %p2794 = pneg %p186
      $region50: #{ipa_block_forward.6} parent=39 // pred_check_branch
        %2796 = sbr.rel (%p2794) target = $region52
      $region51: #{ipa_block_forward.6} parent=39 // pred_region
        _
      $region52: #{ipa_block_forward.6} parent=39 // pred_fallthru
        _
      // Predicated region
      $region53: #{ipa_block_forward.6} parent=39 // pred_check
        %p2797 = pneg %p212
      $region54: #{ipa_block_forward.6} parent=39 // pred_check_branch
        %2799 = sbr.rel (%p2797) target = $region56
      $region55: #{ipa_block_forward.6} parent=39 // pred_region
        _
      $region56: #{ipa_block_forward.6} parent=39 // pred_fallthru
        _
    $region40: #{ipa_block_forward.6} parent=5 // pred_fallthru
      _
    %p2800 = scmp.le.s32.totalorder 2, %s13
    // Predicated region
    $region57: #{ipa_block_forward.6} parent=5 // pred_check
      %p2801 = pneg %p2800
    $region58: #{ipa_block_forward.6} parent=5 // pred_check_branch
      %2803 = sbr.rel (%p2801) target = $region60
    $region59: #{ipa_block_forward.6} parent=5 // pred_region
      %s2804 = ssub.s32 %s13, 2
      // Predicated region
      $region61: #{ipa_block_forward.6} parent=59 // pred_check
        %p2805 = pneg %p192
      $region62: #{ipa_block_forward.6} parent=59 // pred_check_branch
        %2807 = sbr.rel (%p2805) target = $region64
      $region63: #{ipa_block_forward.6} parent=59 // pred_region
        %p2808 = scmp.lt.s32.totalorder %s24, 1
        %s2809 = scalar_select %p2808, %s24, 1
        %s2810 = smul.addr %s2809, 8
        %s2811 = smul.addr %s2810, 8
        %s2812 = scalar_lea.vmem %s5, %s2811
      $region64: #{ipa_block_forward.6} parent=59 // pred_fallthru
        _
      // Predicated region
      $region65: #{ipa_block_forward.6} parent=59 // pred_check
        %p2813 = pneg %p218
      $region66: #{ipa_block_forward.6} parent=59 // pred_check_branch
        %2815 = sbr.rel (%p2813) target = $region68
      $region67: #{ipa_block_forward.6} parent=59 // pred_region
        %p2816 = scmp.lt.s32.totalorder %s24, 1
        %s2817 = scalar_select %p2816, %s24, 1
        %s2818 = smul.addr %s2817, 8
        %s2819 = smul.addr %s2818, 8
        %s2820 = scalar_lea.vmem %s6, %s2819
      $region68: #{ipa_block_forward.6} parent=59 // pred_fallthru
        _
    $region60: #{ipa_block_forward.6} parent=5 // pred_fallthru
      _
  $region6: #{ipa_block_forward.6} parent=0 // loop_footer
    %s17 = sadd.s32 1, %s13
  $region7: #{ipa_block_forward.6} parent=0 // loop_footer_branch
    %12 = sbr.rel target = $region3
  $region8: #{ipa_block_forward.6} parent=0 // loop_exit
    _

// kernel: ipa_block_forward.7
$region0: #{ipa_block_forward.7}
  #allocation0 [shape = 'u32[]', space=smem, size = 0x4, offset = 0x4, fixed_abs, tag = 'smem constant byte address 0x4 - core index']
  #allocation1 [shape = 'u32[144,128]{1,0:T(1,128)}', space=vmem, size = 0x12000, scoped, tag = 'internal scratch']
  %s0 = inlined_call_operand.vmem [shape: bf16[16,512], index: 0, kind: input, shape index: {}]
  %s1 = inlined_call_operand.vmem [shape: f32[16,32], index: 1, kind: input, shape index: {}]
  %s2 = inlined_call_operand.vmem [shape: bf16[512,32], index: 2, kind: input, shape index: {}]
  %s3 = inlined_call_operand.vmem [shape: f32[1,32], index: 3, kind: input, shape index: {}]
  %s4 = inlined_call_operand.vmem [shape: f32[1,32], index: 4, kind: input, shape index: {}]
  %s5 = inlined_call_operand.vmem [shape: f32[1,32], index: 5, kind: input, shape index: {}]
  %s6 = inlined_call_operand.vmem [shape: bf16[32,32], index: 6, kind: input, shape index: {}]
  %s7 = inlined_call_operand.vmem [shape: f32[1,32], index: 7, kind: input, shape index: {}]
  %s8 = inlined_call_operand.vmem [shape: bf16[32,32], index: 8, kind: input, shape index: {}]
  %s9 = inlined_call_operand.vmem [shape: f32[1,32], index: 9, kind: input, shape index: {}]
  %s10 = inlined_call_operand.vmem [shape: bf16[32,32], index: 10, kind: input, shape index: {}]
  %s11 = inlined_call_operand.vmem [shape: f32[1,32], index: 11, kind: input, shape index: {}]
  %s12 = inlined_call_operand.vmem [shape: f32[1,32], index: 12, kind: input, shape index: {}]
  %s13 = inlined_call_operand.vmem [shape: f32[1,32], index: 13, kind: input, shape index: {}]
  %s14 = inlined_call_operand.hbm [shape: f32[16,32], index: 14, kind: output, shape index: {}]
  %s15 = sld [smem:[#allocation0]]
  $region66: #{ipa_block_forward.7} parent=0
    _
  %s17 = ssub.s32 1, %s15
  %s18 = scalar_select 0, %s17, %s15
  $region1: #{ipa_block_forward.7} parent=0
    #allocation2 [shape = 'u8[8192]{0}', space=vmem, size = 0x2000, scoped, tag = 'output window, operand 0, single buffered']
    #allocation3 [shape = 's32[1]{0}', space=sflag, size = 0x4, scoped, tag = 'scoped memory for ipa_block_forward.7']
    %19 = vsyncpa [#allocation3], 0
    // Predicated region
    $region2: #{ipa_block_forward.7} parent=1 // pred_check
      _
    $region3: #{ipa_block_forward.7} parent=1 // pred_check_branch
      %21 = sbr.rel (0) target = $region5
    $region4: #{ipa_block_forward.7} parent=1 // pred_region
      _
    $region5: #{ipa_block_forward.7} parent=1 // pred_fallthru
      _
    // Predicated region
    $region6: #{ipa_block_forward.7} parent=1 // pred_check
      _
    $region7: #{ipa_block_forward.7} parent=1 // pred_check_branch
      %23 = sbr.rel (0) target = $region9
    $region8: #{ipa_block_forward.7} parent=1 // pred_region
      _
    $region9: #{ipa_block_forward.7} parent=1 // pred_fallthru
      _
    // Predicated region
    $region10: #{ipa_block_forward.7} parent=1 // pred_check
      _
    $region11: #{ipa_block_forward.7} parent=1 // pred_check_branch
      %25 = sbr.rel (0) target = $region13
    $region12: #{ipa_block_forward.7} parent=1 // pred_region
      _
    $region13: #{ipa_block_forward.7} parent=1 // pred_fallthru
      _
    // Predicated region
    $region14: #{ipa_block_forward.7} parent=1 // pred_check
      _
    $region15: #{ipa_block_forward.7} parent=1 // pred_check_branch
      %27 = sbr.rel (0) target = $region17
    $region16: #{ipa_block_forward.7} parent=1 // pred_region
      _
    $region17: #{ipa_block_forward.7} parent=1 // pred_fallthru
      _
    // Predicated region
    $region18: #{ipa_block_forward.7} parent=1 // pred_check
      _
    $region19: #{ipa_block_forward.7} parent=1 // pred_check_branch
      %29 = sbr.rel (0) target = $region21
    $region20: #{ipa_block_forward.7} parent=1 // pred_region
      _
    $region21: #{ipa_block_forward.7} parent=1 // pred_fallthru
      _
    // Predicated region
    $region22: #{ipa_block_forward.7} parent=1 // pred_check
      _
    $region23: #{ipa_block_forward.7} parent=1 // pred_check_branch
      %31 = sbr.rel (0) target = $region25
    $region24: #{ipa_block_forward.7} parent=1 // pred_region
      _
    $region25: #{ipa_block_forward.7} parent=1 // pred_fallthru
      _
    // Predicated region
    $region26: #{ipa_block_forward.7} parent=1 // pred_check
      _
    $region27: #{ipa_block_forward.7} parent=1 // pred_check_branch
      %33 = sbr.rel (0) target = $region29
    $region28: #{ipa_block_forward.7} parent=1 // pred_region
      _
    $region29: #{ipa_block_forward.7} parent=1 // pred_fallthru
      _
    // Predicated region
    $region30: #{ipa_block_forward.7} parent=1 // pred_check
      _
    $region31: #{ipa_block_forward.7} parent=1 // pred_check_branch
      %35 = sbr.rel (0) target = $region33
    $region32: #{ipa_block_forward.7} parent=1 // pred_region
      _
    $region33: #{ipa_block_forward.7} parent=1 // pred_fallthru
      _
    // Predicated region
    $region34: #{ipa_block_forward.7} parent=1 // pred_check
      _
    $region35: #{ipa_block_forward.7} parent=1 // pred_check_branch
      %37 = sbr.rel (0) target = $region37
    $region36: #{ipa_block_forward.7} parent=1 // pred_region
      _
    $region37: #{ipa_block_forward.7} parent=1 // pred_fallthru
      _
    // Predicated region
    $region38: #{ipa_block_forward.7} parent=1 // pred_check
      _
    $region39: #{ipa_block_forward.7} parent=1 // pred_check_branch
      %39 = sbr.rel (0) target = $region41
    $region40: #{ipa_block_forward.7} parent=1 // pred_region
      _
    $region41: #{ipa_block_forward.7} parent=1 // pred_fallthru
      _
    // Predicated region
    $region42: #{ipa_block_forward.7} parent=1 // pred_check
      _
    $region43: #{ipa_block_forward.7} parent=1 // pred_check_branch
      %41 = sbr.rel (0) target = $region45
    $region44: #{ipa_block_forward.7} parent=1 // pred_region
      _
    $region45: #{ipa_block_forward.7} parent=1 // pred_fallthru
      _
    // Predicated region
    $region46: #{ipa_block_forward.7} parent=1 // pred_check
      _
    $region47: #{ipa_block_forward.7} parent=1 // pred_check_branch
      %43 = sbr.rel (0) target = $region49
    $region48: #{ipa_block_forward.7} parent=1 // pred_region
      _
    $region49: #{ipa_block_forward.7} parent=1 // pred_fallthru
      _
    // Predicated region
    $region50: #{ipa_block_forward.7} parent=1 // pred_check
      _
    $region51: #{ipa_block_forward.7} parent=1 // pred_check_branch
      %45 = sbr.rel (0) target = $region53
    $region52: #{ipa_block_forward.7} parent=1 // pred_region
      _
    $region53: #{ipa_block_forward.7} parent=1 // pred_fallthru
      _
    // Predicated region
    $region54: #{ipa_block_forward.7} parent=1 // pred_check
      _
    $region55: #{ipa_block_forward.7} parent=1 // pred_check_branch
      %47 = sbr.rel (0) target = $region57
    $region56: #{ipa_block_forward.7} parent=1 // pred_region
      _
    $region57: #{ipa_block_forward.7} parent=1 // pred_fallthru
      _
    %v49 = vld [vmem:[%s0] sm:$0xff]
    %v50 = vld [vmem:[%s0 + $0x8] sm:$0xff]
    %v51 = vld [vmem:[%s0 + $0x10] sm:$0xff]
    %v52 = vld [vmem:[%s0 + $0x18] sm:$0xff]
    %v53 = vld [vmem:[%s2] sm:$0xf]
    %v54 = vld [vmem:[%s2 + $0x4] sm:$0xf]
    %v55 = vld [vmem:[%s2 + $0x8] sm:$0xf]
    %v56 = vld [vmem:[%s2 + $0xc] sm:$0xf]
    %v57 = vld [vmem:[%s2 + $0x10] sm:$0xf]
    %v58 = vld [vmem:[%s2 + $0x14] sm:$0xf]
    %v59 = vld [vmem:[%s2 + $0x18] sm:$0xf]
    %v60 = vld [vmem:[%s2 + $0x1c] sm:$0xf]
    %v61 = vld [vmem:[%s2 + $0x20] sm:$0xf]
    %v62 = vld [vmem:[%s2 + $0x24] sm:$0xf]
    %v63 = vld [vmem:[%s2 + $0x28] sm:$0xf]
    %v64 = vld [vmem:[%s2 + $0x2c] sm:$0xf]
    %v65 = vld [vmem:[%s2 + $0x30] sm:$0xf]
    %v66 = vld [vmem:[%s2 + $0x34] sm:$0xf]
    %v67 = vld [vmem:[%s2 + $0x38] sm:$0xf]
    %v68 = vld [vmem:[%s2 + $0x3c] sm:$0xf]
    %v69 = vld [vmem:[%s2 + $0x40] sm:$0xf]
    %v70 = vld [vmem:[%s2 + $0x44] sm:$0xf]
    %v71 = vld [vmem:[%s2 + $0x48] sm:$0xf]
    %v72 = vld [vmem:[%s2 + $0x4c] sm:$0xf]
    %v73 = vld [vmem:[%s2 + $0x50] sm:$0xf]
    %v74 = vld [vmem:[%s2 + $0x54] sm:$0xf]
    %v75 = vld [vmem:[%s2 + $0x58] sm:$0xf]
    %v76 = vld [vmem:[%s2 + $0x5c] sm:$0xf]
    %v77 = vld [vmem:[%s2 + $0x60] sm:$0xf]
    %v78 = vld [vmem:[%s2 + $0x64] sm:$0xf]
    %v79 = vld [vmem:[%s2 + $0x68] sm:$0xf]
    %v80 = vld [vmem:[%s2 + $0x6c] sm:$0xf]
    %v81 = vld [vmem:[%s2 + $0x70] sm:$0xf]
    %v82 = vld [vmem:[%s2 + $0x74] sm:$0xf]
    %v83 = vld [vmem:[%s2 + $0x78] sm:$0xf]
    %v84 = vld [vmem:[%s2 + $0x7c] sm:$0xf]
    %v85 = vld [vmem:[%s2 + $0x80] sm:$0xf]
    %v86 = vld [vmem:[%s2 + $0x84] sm:$0xf]
    %v87 = vld [vmem:[%s2 + $0x88] sm:$0xf]
    %v88 = vld [vmem:[%s2 + $0x8c] sm:$0xf]
    %v89 = vld [vmem:[%s2 + $0x90] sm:$0xf]
    %v90 = vld [vmem:[%s2 + $0x94] sm:$0xf]
    %v91 = vld [vmem:[%s2 + $0x98] sm:$0xf]
    %v92 = vld [vmem:[%s2 + $0x9c] sm:$0xf]
    %v93 = vld [vmem:[%s2 + $0xa0] sm:$0xf]
    %v94 = vld [vmem:[%s2 + $0xa4] sm:$0xf]
    %v95 = vld [vmem:[%s2 + $0xa8] sm:$0xf]
    %v96 = vld [vmem:[%s2 + $0xac] sm:$0xf]
    %v97 = vld [vmem:[%s2 + $0xb0] sm:$0xf]
    %v98 = vld [vmem:[%s2 + $0xb4] sm:$0xf]
    %v99 = vld [vmem:[%s2 + $0xb8] sm:$0xf]
    %v100 = vld [vmem:[%s2 + $0xbc] sm:$0xf]
    %v101 = vld [vmem:[%s2 + $0xc0] sm:$0xf]
    %v102 = vld [vmem:[%s2 + $0xc4] sm:$0xf]
    %v103 = vld [vmem:[%s2 + $0xc8] sm:$0xf]
    %v104 = vld [vmem:[%s2 + $0xcc] sm:$0xf]
    %v105 = vld [vmem:[%s2 + $0xd0] sm:$0xf]
    %v106 = vld [vmem:[%s2 + $0xd4] sm:$0xf]
    %v107 = vld [vmem:[%s2 + $0xd8] sm:$0xf]
    %v108 = vld [vmem:[%s2 + $0xdc] sm:$0xf]
    %v109 = vld [vmem:[%s2 + $0xe0] sm:$0xf]
    %v110 = vld [vmem:[%s2 + $0xe4] sm:$0xf]
    %v111 = vld [vmem:[%s2 + $0xe8] sm:$0xf]
    %v112 = vld [vmem:[%s2 + $0xec] sm:$0xf]
    %v113 = vld [vmem:[%s2 + $0xf0] sm:$0xf]
    %v114 = vld [vmem:[%s2 + $0xf4] sm:$0xf]
    %v115 = vld [vmem:[%s2 + $0xf8] sm:$0xf]
    %v116 = vld [vmem:[%s2 + $0xfc] sm:$0xf]
    %v117 = vld [vmem:[%s3] sm:$0x1]
    %v119 = vlaneseq
    %v120 = vshrl.u32 %v119, 7
    %v121 = vsub.s32 0, %v120
    %v122 = vrot.slane %v117, %v121
    %v128 = vunpack.c.l.b16 %v49
    %v129 = vunpack.c.h.b16 %v49
    %v130 = vunpack.c.l.b16 %v50
    %v131 = vunpack.c.h.b16 %v50
    %v132 = vunpack.c.l.b16 %v51
    %v133 = vunpack.c.h.b16 %v51
    %v134 = vunpack.c.l.b16 %v52
    %v135 = vunpack.c.h.b16 %v52
    %v136 = vpack.c.b16 %v132, %v128
    %v137 = vpack.c.b16 %v133, %v129
    %v138 = vpack.c.b16 %v134, %v130
    %v139 = vpack.c.b16 %v135, %v131
    %v208 = vunpack.c.l.b16 %v53
    %v209 = vunpack.c.l.b16 %v54
    %v210 = vunpack.c.l.b16 %v55
    %v211 = vunpack.c.l.b16 %v56
    %v212 = vunpack.c.l.b16 %v57
    %v213 = vunpack.c.l.b16 %v58
    %v214 = vunpack.c.l.b16 %v59
    %v215 = vunpack.c.l.b16 %v60
    %v216 = vunpack.c.l.b16 %v61
    %v217 = vunpack.c.l.b16 %v62
    %v218 = vunpack.c.l.b16 %v63
    %v219 = vunpack.c.l.b16 %v64
    %v220 = vunpack.c.l.b16 %v65
    %v221 = vunpack.c.l.b16 %v66
    %v222 = vunpack.c.l.b16 %v67
    %v223 = vunpack.c.l.b16 %v68
    %v224 = vunpack.c.l.b16 %v69
    %v225 = vunpack.c.l.b16 %v70
    %v226 = vunpack.c.l.b16 %v71
    %v227 = vunpack.c.l.b16 %v72
    %v228 = vunpack.c.l.b16 %v73
    %v229 = vunpack.c.l.b16 %v74
    %v230 = vunpack.c.l.b16 %v75
    %v231 = vunpack.c.l.b16 %v76
    %v232 = vunpack.c.l.b16 %v77
    %v233 = vunpack.c.l.b16 %v78
    %v234 = vunpack.c.l.b16 %v79
    %v235 = vunpack.c.l.b16 %v80
    %v236 = vunpack.c.l.b16 %v81
    %v237 = vunpack.c.l.b16 %v82
    %v238 = vunpack.c.l.b16 %v83
    %v239 = vunpack.c.l.b16 %v84
    %v240 = vunpack.c.l.b16 %v85
    %v241 = vunpack.c.l.b16 %v86
    %v242 = vunpack.c.l.b16 %v87
    %v243 = vunpack.c.l.b16 %v88
    %v244 = vunpack.c.l.b16 %v89
    %v245 = vunpack.c.l.b16 %v90
    %v246 = vunpack.c.l.b16 %v91
    %v247 = vunpack.c.l.b16 %v92
    %v248 = vunpack.c.l.b16 %v93
    %v249 = vunpack.c.l.b16 %v94
    %v250 = vunpack.c.l.b16 %v95
    %v251 = vunpack.c.l.b16 %v96
    %v252 = vunpack.c.l.b16 %v97
    %v253 = vunpack.c.l.b16 %v98
    %v254 = vunpack.c.l.b16 %v99
    %v255 = vunpack.c.l.b16 %v100
    %v256 = vunpack.c.l.b16 %v101
    %v257 = vunpack.c.l.b16 %v102
    %v258 = vunpack.c.l.b16 %v103
    %v259 = vunpack.c.l.b16 %v104
    %v260 = vunpack.c.l.b16 %v105
    %v261 = vunpack.c.l.b16 %v106
    %v262 = vunpack.c.l.b16 %v107
    %v263 = vunpack.c.l.b16 %v108
    %v264 = vunpack.c.l.b16 %v109
    %v265 = vunpack.c.l.b16 %v110
    %v266 = vunpack.c.l.b16 %v111
    %v267 = vunpack.c.l.b16 %v112
    %v268 = vunpack.c.l.b16 %v113
    %v269 = vunpack.c.l.b16 %v114
    %v270 = vunpack.c.l.b16 %v115
    %v271 = vunpack.c.l.b16 %v116
    %v272 = vpack.c.b16 %v209, %v208
    %v273 = vpack.c.b16 %v211, %v210
    %v274 = vpack.c.b16 %v213, %v212
    %v275 = vpack.c.b16 %v215, %v214
    %v276 = vpack.c.b16 %v217, %v216
    %v277 = vpack.c.b16 %v219, %v218
    %v278 = vpack.c.b16 %v221, %v220
    %v279 = vpack.c.b16 %v223, %v222
    %v280 = vpack.c.b16 %v225, %v224
    %v281 = vpack.c.b16 %v227, %v226
    %v282 = vpack.c.b16 %v229, %v228
    %v283 = vpack.c.b16 %v231, %v230
    %v284 = vpack.c.b16 %v233, %v232
    %v285 = vpack.c.b16 %v235, %v234
    %v286 = vpack.c.b16 %v237, %v236
    %v287 = vpack.c.b16 %v239, %v238
    %v288 = vpack.c.b16 %v241, %v240
    %v289 = vpack.c.b16 %v243, %v242
    %v290 = vpack.c.b16 %v245, %v244
    %v291 = vpack.c.b16 %v247, %v246
    %v292 = vpack.c.b16 %v249, %v248
    %v293 = vpack.c.b16 %v251, %v250
    %v294 = vpack.c.b16 %v253, %v252
    %v295 = vpack.c.b16 %v255, %v254
    %v296 = vpack.c.b16 %v257, %v256
    %v297 = vpack.c.b16 %v259, %v258
    %v298 = vpack.c.b16 %v261, %v260
    %v299 = vpack.c.b16 %v263, %v262
    %v300 = vpack.c.b16 %v265, %v264
    %v301 = vpack.c.b16 %v267, %v266
    %v302 = vpack.c.b16 %v269, %v268
    %v303 = vpack.c.b16 %v271, %v270
    %336 = vmatprep.subr.bf16.mxu0 0
    %337 = vmatpush1.bf16.msra.mxu0 %v272
    %338 = vmatprep.subr.bf16.mxu0 0
    %339 = vmatpush1.bf16.msra.mxu0 %v273
    %340 = vmatprep.subr.bf16.mxu0 0
    %341 = vmatpush1.bf16.msra.mxu0 %v274
    %342 = vmatprep.subr.bf16.mxu0 0
    %343 = vmatpush1.bf16.msra.mxu0 %v275
    %344 = vmatprep.subr.bf16.mxu0 0
    %345 = vmatpush1.bf16.msra.mxu0 %v276
    %346 = vmatprep.subr.bf16.mxu0 0
    %347 = vmatpush1.bf16.msra.mxu0 %v277
    %348 = vmatprep.subr.bf16.mxu0 0
    %349 = vmatpush1.bf16.msra.mxu0 %v278
    %350 = vmatprep.subr.bf16.mxu0 0
    %351 = vmatpush1.bf16.msra.mxu0 %v279
    %352 = vmatprep.subr.bf16.mxu0 0
    %353 = vmatpush1.bf16.msra.mxu0 %v280
    %354 = vmatprep.subr.bf16.mxu0 0
    %355 = vmatpush1.bf16.msra.mxu0 %v281
    %356 = vmatprep.subr.bf16.mxu0 0
    %357 = vmatpush1.bf16.msra.mxu0 %v282
    %358 = vmatprep.subr.bf16.mxu0 0
    %359 = vmatpush1.bf16.msra.mxu0 %v283
    %360 = vmatprep.subr.bf16.mxu0 0
    %361 = vmatpush1.bf16.msra.mxu0 %v284
    %362 = vmatprep.subr.bf16.mxu0 0
    %363 = vmatpush1.bf16.msra.mxu0 %v285
    %364 = vmatprep.subr.bf16.mxu0 0
    %365 = vmatpush1.bf16.msra.mxu0 %v286
    %366 = vmatprep.subr.bf16.mxu0 0
    %367 = vmatpush1.bf16.msra.mxu0 %v287
    %368 = vmatprep.mubr.bf16.mxu0 %v137
    %369 = vmatmul.mubr.bf16.gmra.mrb[0].mxu0 %v136
    %v370 = vpop.f32.mrb[0].mxu0
    %v371 = vadd.f32 %v122, %v370
    %v372 = vpop.f32.mrb[0].mxu0
    %v373 = vpop.f32.mrb[0].mxu0
    %v374 = vadd.f32 %v122, %v373
    %v375 = vpop.f32.mrb[0].mxu0
    %376 = vdwg.mxu0
    %377 = vmatprep.subr.bf16.mxu0 0
    %378 = vmatpush1.bf16.msra.mxu0 %v288
    %379 = vmatprep.subr.bf16.mxu0 0
    %380 = vmatpush1.bf16.msra.mxu0 %v289
    %381 = vmatprep.subr.bf16.mxu0 0
    %382 = vmatpush1.bf16.msra.mxu0 %v290
    %383 = vmatprep.subr.bf16.mxu0 0
    %384 = vmatpush1.bf16.msra.mxu0 %v291
    %385 = vmatprep.subr.bf16.mxu0 0
    %386 = vmatpush1.bf16.msra.mxu0 %v292
    %387 = vmatprep.subr.bf16.mxu0 0
    %388 = vmatpush1.bf16.msra.mxu0 %v293
    %389 = vmatprep.subr.bf16.mxu0 0
    %390 = vmatpush1.bf16.msra.mxu0 %v294
    %391 = vmatprep.subr.bf16.mxu0 0
    %392 = vmatpush1.bf16.msra.mxu0 %v295
    %393 = vmatprep.subr.bf16.mxu0 0
    %394 = vmatpush1.bf16.msra.mxu0 %v296
    %395 = vmatprep.subr.bf16.mxu0 0
    %396 = vmatpush1.bf16.msra.mxu0 %v297
    %397 = vmatprep.subr.bf16.mxu0 0
    %398 = vmatpush1.bf16.msra.mxu0 %v298
    %399 = vmatprep.subr.bf16.mxu0 0
    %400 = vmatpush1.bf16.msra.mxu0 %v299
    %401 = vmatprep.subr.bf16.mxu0 0
    %402 = vmatpush1.bf16.msra.mxu0 %v300
    %403 = vmatprep.subr.bf16.mxu0 0
    %404 = vmatpush1.bf16.msra.mxu0 %v301
    %405 = vmatprep.subr.bf16.mxu0 0
    %406 = vmatpush1.bf16.msra.mxu0 %v302
    %407 = vmatprep.subr.bf16.mxu0 0
    %408 = vmatpush1.bf16.msra.mxu0 %v303
    %409 = vmatprep.mubr.bf16.mxu0 %v139
    %410 = vmatmul.mubr.bf16.gmra.mrb[0].mxu0 %v138
    %v411 = vpop.f32.mrb[0].mxu0
    %v412 = vadd.f32 %v371, %v411
    %v413 = vpop.f32.mrb[0].mxu0
    %v414 = vpop.f32.mrb[0].mxu0
    %v415 = vadd.f32 %v374, %v414
    %v416 = vpop.f32.mrb[0].mxu0
    %417 = vdwg.mxu0
    %v418 = vld [vmem:[%s1] sm:$0xff]
    %v419 = vld [vmem:[%s1 + $0x8] sm:$0xff]
    %v420 = vadd.f32 %v412, %v418
    %v421 = vadd.f32 %v415, %v419
    %v422 = vld [vmem:[%s4] sm:$0x1]
    %v423 = vld [vmem:[%s5] sm:$0x1]
    %vm424 = vcmask 261120
    %v425 = vsel %vm424, %v420, 0.0
    %426 = vadd.xlane.f32.xlu0 %v425
    %v427 = vpop.xlane.xlu0 %426
    %v428 = vsel %vm424, %v421, 0.0
    %429 = vadd.xlane.f32.xlu0 %v428
    %v430 = vpop.xlane.xlu0 %429
    %v431 = vrcp.pop 32.0
    %v432 = vmul.f32 %v427, %v431
    %v433 = vmul.f32 %v430, %v431
    %v434 = vsub.f32 %v420, %v432
    %v435 = vsub.f32 %v421, %v433
    %v436 = vmul.f32 %v434, %v434
    %v437 = vmul.f32 %v435, %v435
    %v438 = vsel %vm424, %v436, 0.0
    %439 = vadd.xlane.f32.xlu0 %v438
    %v440 = vpop.xlane.xlu0 %439
    %v441 = vsel %vm424, %v437, 0.0
    %442 = vadd.xlane.f32.xlu0 %v441
    %v443 = vpop.xlane.xlu0 %442
    %v444 = vmul.f32 %v440, %v431
    %v445 = vmul.f32 %v443, %v431
    %v446 = vadd.f32 %v444, 1e-05
    %v447 = vadd.f32 %v445, 1e-05
    %v448 = vrsqrt.pop %v446
    %v449 = vrsqrt.pop %v447
    %v450 = vmul.f32 %v434, %v448
    %v451 = vmul.f32 %v435, %v449
    %v453 = vlaneseq
    %v454 = vshrl.u32 %v453, 7
    %v455 = vsub.s32 0, %v454
    %v456 = vrot.slane %v422, %v455
    %v458 = vmul.f32 %v450, %v456
    %v459 = vmul.f32 %v451, %v456
    %v461 = vlaneseq
    %v462 = vshrl.u32 %v461, 7
    %v463 = vsub.s32 0, %v462
    %v464 = vrot.slane %v423, %v463
    %v466 = vadd.f32 %v458, %v464
    %v467 = vadd.f32 %v459, %v464
    %v468 = vpack.c.bf16 %v467, %v466
    %v469 = vld [vmem:[%s6] sm:$0xf]
    %v470 = vld [vmem:[%s6 + $0x4] sm:$0xf]
    %v471 = vld [vmem:[%s6 + $0x8] sm:$0xf]
    %v472 = vld [vmem:[%s6 + $0xc] sm:$0xf]
    %v473 = vld [vmem:[%s7] sm:$0x1]
    %v475 = vlaneseq
    %v476 = vshrl.u32 %v475, 7
    %v477 = vsub.s32 0, %v476
    %v478 = vrot.slane %v473, %v477
    %v484 = vunpack.c.l.b16 %v469
    %v485 = vunpack.c.l.b16 %v470
    %v486 = vunpack.c.l.b16 %v471
    %v487 = vunpack.c.l.b16 %v472
    %v488 = vpack.c.b16 %v485, %v484
    %v489 = vpack.c.b16 %v487, %v486
    %v493 = vsel %vm424, %v468, 0
    %495 = vmatprep.subr.bf16.mxu0 0
    %496 = vmatpush1.bf16.msra.mxu0 %v488
    %497 = vmatprep.subr.bf16.mxu0 0
    %498 = vmatpush1.bf16.msra.mxu0 %v489
    %499 = vmatprep.subr.bf16.mxu0 0
    %500 = vmatpush1.bf16.msra.mxu0 0
    %501 = vmatprep.subr.bf16.mxu0 0
    %502 = vmatpush1.bf16.msra.mxu0 0
    %503 = vmatprep.subr.bf16.mxu0 0
    %504 = vmatpush1.bf16.msra.mxu0 0
    %505 = vmatprep.subr.bf16.mxu0 0
    %506 = vmatpush1.bf16.msra.mxu0 0
    %507 = vmatprep.subr.bf16.mxu0 0
    %508 = vmatpush1.bf16.msra.mxu0 0
    %509 = vmatprep.subr.bf16.mxu0 0
    %510 = vmatpush1.bf16.msra.mxu0 0
    %511 = vmatprep.subr.bf16.mxu0 0
    %512 = vmatpush1.bf16.msra.mxu0 0
    %513 = vmatprep.subr.bf16.mxu0 0
    %514 = vmatpush1.bf16.msra.mxu0 0
    %515 = vmatprep.subr.bf16.mxu0 0
    %516 = vmatpush1.bf16.msra.mxu0 0
    %517 = vmatprep.subr.bf16.mxu0 0
    %518 = vmatpush1.bf16.msra.mxu0 0
    %519 = vmatprep.subr.bf16.mxu0 0
    %520 = vmatpush1.bf16.msra.mxu0 0
    %521 = vmatprep.subr.bf16.mxu0 0
    %522 = vmatpush1.bf16.msra.mxu0 0
    %523 = vmatprep.subr.bf16.mxu0 0
    %524 = vmatpush1.bf16.msra.mxu0 0
    %525 = vmatprep.subr.bf16.mxu0 0
    %526 = vmatpush1.bf16.msra.mxu0 0
    %527 = vmatprep.mubr.bf16.mxu0 0
    %528 = vmatmul.mubr.bf16.gmra.mrb[0].mxu0 %v493
    %v529 = vpop.f32.mrb[0].mxu0
    %v530 = vadd.f32 %v478, %v529
    %v531 = vpop.f32.mrb[0].mxu0
    %v532 = vpop.f32.mrb[0].mxu0
    %v533 = vadd.f32 %v478, %v532
    %v534 = vpop.f32.mrb[0].mxu0
    %535 = vdwg.mxu0
    %v536 = vmax.f32 %v530, 0.0
    %v537 = vmax.f32 %v533, 0.0
    %v538 = vpack.c.bf16 %v537, %v536
    %v539 = vld [vmem:[%s8] sm:$0xf]
    %v540 = vld [vmem:[%s8 + $0x4] sm:$0xf]
    %v541 = vld [vmem:[%s8 + $0x8] sm:$0xf]
    %v542 = vld [vmem:[%s8 + $0xc] sm:$0xf]
    %v543 = vld [vmem:[%s9] sm:$0x1]
    %v545 = vlaneseq
    %v546 = vshrl.u32 %v545, 7
    %v547 = vsub.s32 0, %v546
    %v548 = vrot.slane %v543, %v547
    %v554 = vunpack.c.l.b16 %v539
    %v555 = vunpack.c.l.b16 %v540
    %v556 = vunpack.c.l.b16 %v541
    %v557 = vunpack.c.l.b16 %v542
    %v558 = vpack.c.b16 %v555, %v554
    %v559 = vpack.c.b16 %v557, %v556
    %v563 = vsel %vm424, %v538, 0
    %565 = vmatprep.subr.bf16.mxu0 0
    %566 = vmatpush1.bf16.msra.mxu0 %v558
    %567 = vmatprep.subr.bf16.mxu0 0
    %568 = vmatpush1.bf16.msra.mxu0 %v559
    %569 = vmatprep.subr.bf16.mxu0 0
    %570 = vmatpush1.bf16.msra.mxu0 0
    %571 = vmatprep.subr.bf16.mxu0 0
    %572 = vmatpush1.bf16.msra.mxu0 0
    %573 = vmatprep.subr.bf16.mxu0 0
    %574 = vmatpush1.bf16.msra.mxu0 0
    %575 = vmatprep.subr.bf16.mxu0 0
    %576 = vmatpush1.bf16.msra.mxu0 0
    %577 = vmatprep.subr.bf16.mxu0 0
    %578 = vmatpush1.bf16.msra.mxu0 0
    %579 = vmatprep.subr.bf16.mxu0 0
    %580 = vmatpush1.bf16.msra.mxu0 0
    %581 = vmatprep.subr.bf16.mxu0 0
    %582 = vmatpush1.bf16.msra.mxu0 0
    %583 = vmatprep.subr.bf16.mxu0 0
    %584 = vmatpush1.bf16.msra.mxu0 0
    %585 = vmatprep.subr.bf16.mxu0 0
    %586 = vmatpush1.bf16.msra.mxu0 0
    %587 = vmatprep.subr.bf16.mxu0 0
    %588 = vmatpush1.bf16.msra.mxu0 0
    %589 = vmatprep.subr.bf16.mxu0 0
    %590 = vmatpush1.bf16.msra.mxu0 0
    %591 = vmatprep.subr.bf16.mxu0 0
    %592 = vmatpush1.bf16.msra.mxu0 0
    %593 = vmatprep.subr.bf16.mxu0 0
    %594 = vmatpush1.bf16.msra.mxu0 0
    %595 = vmatprep.subr.bf16.mxu0 0
    %596 = vmatpush1.bf16.msra.mxu0 0
    %597 = vmatprep.mubr.bf16.mxu0 0
    %598 = vmatmul.mubr.bf16.gmra.mrb[0].mxu0 %v563
    %v599 = vpop.f32.mrb[0].mxu0
    %v600 = vadd.f32 %v548, %v599
    %v601 = vpop.f32.mrb[0].mxu0
    %v602 = vpop.f32.mrb[0].mxu0
    %v603 = vadd.f32 %v548, %v602
    %v604 = vpop.f32.mrb[0].mxu0
    %605 = vdwg.mxu0
    %v606 = vmax.f32 %v600, 0.0
    %v607 = vmax.f32 %v603, 0.0
    %v608 = vpack.c.bf16 %v607, %v606
    %v609 = vld [vmem:[%s10] sm:$0xf]
    %v610 = vld [vmem:[%s10 + $0x4] sm:$0xf]
    %v611 = vld [vmem:[%s10 + $0x8] sm:$0xf]
    %v612 = vld [vmem:[%s10 + $0xc] sm:$0xf]
    %v613 = vld [vmem:[%s11] sm:$0x1]
    %v615 = vlaneseq
    %v616 = vshrl.u32 %v615, 7
    %v617 = vsub.s32 0, %v616
    %v618 = vrot.slane %v613, %v617
    %v624 = vunpack.c.l.b16 %v609
    %v625 = vunpack.c.l.b16 %v610
    %v626 = vunpack.c.l.b16 %v611
    %v627 = vunpack.c.l.b16 %v612
    %v628 = vpack.c.b16 %v625, %v624
    %v629 = vpack.c.b16 %v627, %v626
    %v633 = vsel %vm424, %v608, 0
    %635 = vmatprep.subr.bf16.mxu0 0
    %636 = vmatpush1.bf16.msra.mxu0 %v628
    %637 = vmatprep.subr.bf16.mxu0 0
    %638 = vmatpush1.bf16.msra.mxu0 %v629
    %639 = vmatprep.subr.bf16.mxu0 0
    %640 = vmatpush1.bf16.msra.mxu0 0
    %641 = vmatprep.subr.bf16.mxu0 0
    %642 = vmatpush1.bf16.msra.mxu0 0
    %643 = vmatprep.subr.bf16.mxu0 0
    %644 = vmatpush1.bf16.msra.mxu0 0
    %645 = vmatprep.subr.bf16.mxu0 0
    %646 = vmatpush1.bf16.msra.mxu0 0
    %647 = vmatprep.subr.bf16.mxu0 0
    %648 = vmatpush1.bf16.msra.mxu0 0
    %649 = vmatprep.subr.bf16.mxu0 0
    %650 = vmatpush1.bf16.msra.mxu0 0
    %651 = vmatprep.subr.bf16.mxu0 0
    %652 = vmatpush1.bf16.msra.mxu0 0
    %653 = vmatprep.subr.bf16.mxu0 0
    %654 = vmatpush1.bf16.msra.mxu0 0
    %655 = vmatprep.subr.bf16.mxu0 0
    %656 = vmatpush1.bf16.msra.mxu0 0
    %657 = vmatprep.subr.bf16.mxu0 0
    %658 = vmatpush1.bf16.msra.mxu0 0
    %659 = vmatprep.subr.bf16.mxu0 0
    %660 = vmatpush1.bf16.msra.mxu0 0
    %661 = vmatprep.subr.bf16.mxu0 0
    %662 = vmatpush1.bf16.msra.mxu0 0
    %663 = vmatprep.subr.bf16.mxu0 0
    %664 = vmatpush1.bf16.msra.mxu0 0
    %665 = vmatprep.subr.bf16.mxu0 0
    %666 = vmatpush1.bf16.msra.mxu0 0
    %667 = vmatprep.mubr.bf16.mxu0 0
    %668 = vmatmul.mubr.bf16.gmra.mrb[0].mxu0 %v633
    %v669 = vpop.f32.mrb[0].mxu0
    %v670 = vadd.f32 %v618, %v669
    %v671 = vpop.f32.mrb[0].mxu0
    %v672 = vpop.f32.mrb[0].mxu0
    %v673 = vadd.f32 %v618, %v672
    %v674 = vpop.f32.mrb[0].mxu0
    %675 = vdwg.mxu0
    %v676 = vadd.f32 %v670, %v466
    %v677 = vadd.f32 %v673, %v467
    %v678 = vld [vmem:[%s12] sm:$0x1]
    %v679 = vld [vmem:[%s13] sm:$0x1]
    %v680 = vsel %vm424, %v676, 0.0
    %681 = vadd.xlane.f32.xlu0 %v680
    %v682 = vpop.xlane.xlu0 %681
    %v683 = vsel %vm424, %v677, 0.0
    %684 = vadd.xlane.f32.xlu0 %v683
    %v685 = vpop.xlane.xlu0 %684
    %v686 = vmul.f32 %v682, %v431
    %v687 = vmul.f32 %v685, %v431
    %v688 = vsub.f32 %v676, %v686
    %v689 = vsub.f32 %v677, %v687
    %v690 = vmul.f32 %v688, %v688
    %v691 = vmul.f32 %v689, %v689
    %v692 = vsel %vm424, %v690, 0.0
    %693 = vadd.xlane.f32.xlu0 %v692
    %v694 = vpop.xlane.xlu0 %693
    %v695 = vsel %vm424, %v691, 0.0
    %696 = vadd.xlane.f32.xlu0 %v695
    %v697 = vpop.xlane.xlu0 %696
    %v698 = vmul.f32 %v694, %v431
    %v699 = vmul.f32 %v697, %v431
    %v700 = vadd.f32 %v698, 1e-05
    %v701 = vadd.f32 %v699, 1e-05
    %v702 = vrsqrt.pop %v700
    %v703 = vrsqrt.pop %v701
    %v704 = vmul.f32 %v688, %v702
    %v705 = vmul.f32 %v689, %v703
    %v707 = vlaneseq
    %v708 = vshrl.u32 %v707, 7
    %v709 = vsub.s32 0, %v708
    %v710 = vrot.slane %v678, %v709
    %v712 = vmul.f32 %v704, %v710
    %v713 = vmul.f32 %v705, %v710
    %v715 = vlaneseq
    %v716 = vshrl.u32 %v715, 7
    %v717 = vsub.s32 0, %v716
    %v718 = vrot.slane %v679, %v717
    %v720 = vadd.f32 %v712, %v718
    %v721 = vadd.f32 %v713, %v718
    %722 = vst.msk [vmem:[#allocation2] sm:$0xff] %vm424, %v720
    %723 = vst.msk [vmem:[#allocation2 + $0x8] sm:$0xff] %vm424, %v721
    // Predicated region
    $region58: #{ipa_block_forward.7} parent=1 // pred_check
      _
    $region59: #{ipa_block_forward.7} parent=1 // pred_check_branch
      %725 = sbr.rel (0) target = $region61
    $region60: #{ipa_block_forward.7} parent=1 // pred_region
      %s727 = ssub.s32 256, 256
      %728 = vsyncadd [#allocation3], %s727
      %s729 = sshll.u32 [#allocation2], 4
      %s730 = int_to_ptr.vmem [resolvable:$true] %s729
      %735 = dma.vmem_to_hbm [thread:$0]  %s730, 256, %s14, [#allocation3], 128, 128, 8
    $region61: #{ipa_block_forward.7} parent=1 // pred_fallthru
      _
    // Predicated region
    $region62: #{ipa_block_forward.7} parent=1 // pred_check
      _
    $region63: #{ipa_block_forward.7} parent=1 // pred_check_branch
      %737 = sbr.rel (0) target = $region65
    $region64: #{ipa_block_forward.7} parent=1 // pred_region
      %738 = dma.done [#allocation3], 256
    $region65: #{ipa_block_forward.7} parent=1 // pred_fallthru
      _
    %739 = vsyncpa [#allocation3], 1

</llo_original>
